<compile_context>
chip_gen: v7x
topology: tpu7x:2x2x1
jax: 0.10.0
libtpu: 0.0.40
codegen_flags: <defaults>
</compile_context>

<pallas_src>
import functools
import math

import jax
import jax.numpy as jnp
import numpy as np
from jax.experimental import pallas as pl
from jax.experimental.pallas import tpu as pltpu


def _grid_attention_kernel(x_ref, wqkv_ref, wp_ref, bp_ref, o_ref, acc_ref, *,
                           num_windows, win_h, win_w, num_heads, head_dim,
                           compute_dtype, approx_softmax):
    # x_ref:    (1, wb*hh, ww, C)  wb row-consecutive windows of one column band
    # wqkv_ref: (C, 3C)            fused qkv weight; q columns pre-scaled by head_dim**-0.5
    # wp_ref:   (C, C)             output projection weight (transposed for x @ W)
    # bp_ref:   (1, C)             output projection bias (f32)
    # acc_ref:  (wb*S, C) f32      staging buffer for the assembled per-head outputs
    wb = num_windows
    S = win_h * win_w
    C = num_heads * head_dim
    cd = compute_dtype
    M = wb * S

    # (wb*hh, ww, C) -> (M, C): pure leading-dim merge (lane dim C untouched).
    xw = x_ref[0].reshape(M, C).astype(cd)

    # QKV projection split into three (M, C) @ (C, C) matmuls with f32 accumulation;
    # each result is cast to the compute dtype immediately so the peak live f32
    # activation is (M, C), not (M, 3C).  `scale` is already folded into wqkv[:, :C].
    q = jnp.dot(xw, wqkv_ref[:, 0:C],
                preferred_element_type=jnp.float32).astype(cd).reshape(wb, S, C)
    k = jnp.dot(xw, wqkv_ref[:, C:2 * C],
                preferred_element_type=jnp.float32).astype(cd).reshape(wb, S, C)
    v = jnp.dot(xw, wqkv_ref[:, 2 * C:3 * C],
                preferred_element_type=jnp.float32).astype(cd).reshape(wb, S, C)

    # Process heads in 128-lane slabs so the acc stores are full-lane-width and
    # 128-aligned (head_dim < 128 would otherwise mean a masked vst per head).
    if head_dim < 128 and 128 % head_dim == 0 and C % 128 == 0:
        heads_per_slab = 128 // head_dim
    else:
        heads_per_slab = 1

    # Static loop: num_heads is small here.  For num_heads >= ~16 this should
    # become a lax.fori_loop over slabs to bound live ranges / code size.
    for h0 in range(0, num_heads, heads_per_slab):
        slab_outs = []
        for h in range(h0, h0 + heads_per_slab):
            lo = h * head_dim
            hi = lo + head_dim
            s = jnp.einsum('gqd,gkd->gqk', q[:, :, lo:hi], k[:, :, lo:hi],
                           preferred_element_type=jnp.float32)      # (wb, S, S)
            s = s - jnp.max(s, axis=-1, keepdims=True)
            p = jnp.exp(s)                                          # unnormalized
            r = pl.reciprocal(jnp.sum(p, axis=-1, keepdims=True),
                              approx=approx_softmax)                # (wb, S, 1)
            oh = jnp.einsum('gqk,gkd->gqd', p.astype(cd), v[:, :, lo:hi],
                            preferred_element_type=jnp.float32)     # (wb, S, hd)
            # Deferred softmax normalization: scale the (S, hd) output instead of
            # the (S, S) probabilities.
            slab_outs.append(oh * r)
        slab = slab_outs[0] if len(slab_outs) == 1 else jnp.concatenate(
            slab_outs, axis=-1)
        lo = h0 * head_dim
        hi = (h0 + heads_per_slab) * head_dim
        acc_ref[:, lo:hi] = slab.reshape(M, hi - lo)

    # Output projection + bias (f32 accumulation), stored back in (H, W, C) layout.
    out = jnp.dot(acc_ref[...].astype(cd), wp_ref[...],
                  preferred_element_type=jnp.float32)
    out = out + bp_ref[...]                                         # (1, C) broadcast
    o_ref[0] = out.reshape(wb * win_h, win_w, C).astype(o_ref.dtype)


def grid_attention(x, wqkv, wp, bp, *, grid_size, num_heads,
                   compute_dtype=jnp.bfloat16, windows_per_step=None,
                   vmem_step_budget_bytes=24 * 1024 * 1024):
    """Pallas implementation of GridAttention.forward.

    x:    (B, H, W, C)
    wqkv: (C, 3C)  == torch qkv.weight.T
    wp:   (C, C)   == torch proj.weight.T
    bp:   (C,)     == torch proj.bias
    compute_dtype: dtype fed to the MXU (default bf16); accumulation and softmax
                   are always f32, output keeps x.dtype.  Pass jnp.float32 (or
                   None) for a full-precision path.
    windows_per_step: windows processed per grid step (must divide grid_size);
                   auto-chosen from a VMEM footprint estimate when None.
    """
    B, H, W, C = x.shape
    g = grid_size
    if H % g or W % g:
        raise ValueError("H and W must be divisible by grid_size")
    if C % num_heads:
        raise ValueError("dim must be divisible by num_heads")
    hh, ww = H // g, W // g
    S = hh * ww
    head_dim = C // num_heads
    scale = head_dim ** (-0.5)

    cd = x.dtype if compute_dtype is None else np.dtype(compute_dtype)
    use_approx = (cd != np.dtype(np.float32))

    # The in-kernel (wb*hh, ww, C) -> (wb*S, C) merge is only a free layout change
    # when ww is a multiple of the packed sublane count for the I/O dtype.
    io_itemsize = np.dtype(x.dtype).itemsize
    sublane_pack = {4: 8, 2: 16, 1: 32}.get(io_itemsize, 8)
    if ww % sublane_pack != 0 and ww != W:
        raise ValueError(
            f"W // grid_size (= {ww}) must be a multiple of {sublane_pack} for "
            f"{np.dtype(x.dtype).name} inputs (sublane packing)")

    # Fold the attention scale into the q columns of the fused qkv weight, then
    # cast weights once to the compute dtype (they are grid-resident).
    wqkv_scaled = jnp.concatenate([wqkv[:, :C] * scale, wqkv[:, C:]], axis=1)
    wqkv_k = wqkv_scaled.astype(cd)
    wp_k = wp.astype(cd)
    bp_k = bp.reshape(1, C).astype(jnp.float32)

    cd_sz = np.dtype(cd).itemsize

    def step_bytes(wb):
        band = wb * S * C
        weights = 2 * (4 * C * C) * cd_sz + 2 * C * 4        # dbl-buffered wqkv + wp, f32 bias
        io = 2 * 2 * band * io_itemsize                      # x band + out band, dbl-buffered
        acts = band * (4 * cd_sz + 3 * 4)                     # xw,q,k,v (cd); acc, out + slack (f32)
        attn = 2 * wb * S * S * 4                             # scores + probs (f32)
        return weights + io + acts + attn

    if windows_per_step is None:
        wb = 1
        for cand in range(g, 0, -1):
            if g % cand == 0 and step_bytes(cand) <= vmem_step_budget_bytes:
                wb = cand
                break
    else:
        wb = int(windows_per_step)
        if wb < 1 or g % wb:
            raise ValueError("windows_per_step must divide grid_size")
    n_chunks = g // wb

    # Explicit scoped-VMEM limit from the per-step footprint (+ headroom), clamped
    # to stay within the smallest physical VMEM (v7x: 64 MiB).
    vmem_limit = int(min(max(2 * step_bytes(wb), 32 * 1024 * 1024),
                         64 * 1024 * 1024))

    kernel = functools.partial(
        _grid_attention_kernel,
        num_windows=wb, win_h=hh, win_w=ww, num_heads=num_heads,
        head_dim=head_dim, compute_dtype=cd, approx_softmax=use_approx)

    nw_total = B * g * g
    flops = (2 * nw_total * S * C * (3 * C)                    # qkv projection
             + 4 * nw_total * num_heads * S * S * head_dim     # q@k^T and p@v
             + 2 * nw_total * S * C * C)                       # output projection
    transcendentals = nw_total * num_heads * S * S             # exp
    bytes_accessed = (x.size * io_itemsize * 2
                      + wqkv_k.size * cd_sz + wp_k.size * cd_sz + bp_k.size * 4)
    cost = pl.CostEstimate(flops=int(flops),
                           transcendentals=int(transcendentals),
                           bytes_accessed=int(bytes_accessed))

    return pl.pallas_call(
        kernel,
        out_shape=jax.ShapeDtypeStruct((B, H, W, C), x.dtype),
        grid_spec=pltpu.PrefetchScalarGridSpec(
            num_scalar_prefetch=0,
            grid=(B, g, n_chunks),      # (batch, column band, window chunk in band)
            in_specs=[
                pl.BlockSpec((1, wb * hh, ww, C), lambda b, j, i: (b, i, j, 0)),
                # Weight / bias blocks are grid-invariant (constant index maps).
                pl.BlockSpec((C, 3 * C), lambda b, j, i: (0, 0)),
                pl.BlockSpec((C, C), lambda b, j, i: (0, 0)),
                pl.BlockSpec((1, C), lambda b, j, i: (0, 0)),
            ],
            out_specs=pl.BlockSpec((1, wb * hh, ww, C), lambda b, j, i: (b, i, j, 0)),
            scratch_shapes=[pltpu.VMEM((wb * S, C), jnp.float32)],
        ),
        compiler_params=pltpu.CompilerParams(
            dimension_semantics=("parallel", "parallel", "parallel"),
            vmem_limit_bytes=vmem_limit),
        cost_estimate=cost,
    )(x, wqkv_k, wp_k, bp_k)


def grid_attention_reference(x, wqkv, wp, bp, *, grid_size, num_heads,
                             compute_dtype=None):
    """Pure-JAX mirror of the PyTorch forward (optionally emulating low-precision casts)."""
    B, H, W, C = x.shape
    g = grid_size
    hh, ww = H // g, W // g
    hd = C // num_heads
    scale = hd ** (-0.5)
    cd = x.dtype if compute_dtype is None else np.dtype(compute_dtype)
    f32 = jnp.float32
    prec = jax.lax.Precision.HIGHEST

    xw = x.reshape(B, g, hh, g, ww, C).transpose(0, 1, 3, 2, 4, 5)
    xw = xw.reshape(B * g * g, hh * ww, C)

    qkv = jnp.einsum('nsc,cd->nsd', xw.astype(cd), wqkv.astype(cd),
                     preferred_element_type=f32, precision=prec)
    qkv = qkv.reshape(xw.shape[0], xw.shape[1], 3, num_heads, hd)
    qkv = qkv.transpose(2, 0, 3, 1, 4)                 # (3, N, nh, S, hd)
    q, k, v = qkv[0] * scale, qkv[1], qkv[2]           # f32
    attn = jnp.einsum('nhqd,nhkd->nhqk', q.astype(cd), k.astype(cd),
                      preferred_element_type=f32, precision=prec)
    attn = jax.nn.softmax(attn, axis=-1)               # f32 softmax
    o = jnp.einsum('nhqk,nhkd->nhqd', attn.astype(cd), v.astype(cd),
                   preferred_element_type=f32, precision=prec)
    o = o.transpose(0, 2, 1, 3).reshape(xw.shape[0], xw.shape[1], C)
    o = jnp.einsum('nsc,cd->nsd', o.astype(cd), wp.astype(cd),
                   preferred_element_type=f32, precision=prec)
    o = o + bp.astype(f32)
    o = o.reshape(B, g, g, hh, ww, C).transpose(0, 1, 3, 2, 4, 5)
    return o.reshape(B, H, W, C).astype(x.dtype)


if __name__ == "__main__":
    # Small shapes consistent with the module: dim divisible by num_heads,
    # H and W divisible by grid_size, window width a multiple of 8 (f32 packing).
    B, H, W, C = 2, 16, 16, 128
    GRID_SIZE = 2
    NUM_HEADS = 4        # head_dim = 32

    key = jax.random.PRNGKey(0)
    kx, kqkv, kwp, kbp = jax.random.split(key, 4)

    x = jax.random.normal(kx, (B, H, W, C), dtype=jnp.float32)
    # torch Linear computes y = x @ W.T + b; we store pre-transposed weights.
    wqkv = jax.random.normal(kqkv, (C, 3 * C), dtype=jnp.float32) * (1.0 / math.sqrt(C))
    wp = jax.random.normal(kwp, (C, C), dtype=jnp.float32) * (1.0 / math.sqrt(C))
    bp = jax.random.normal(kbp, (C,), dtype=jnp.float32) * 0.02

    # 1) float32 compute path: strict check against the spec reference.
    out_f32 = jax.block_until_ready(
        grid_attention(x, wqkv, wp, bp, grid_size=GRID_SIZE, num_heads=NUM_HEADS,
                       compute_dtype=jnp.float32))
    ref_f32 = jax.block_until_ready(
        grid_attention_reference(x, wqkv, wp, bp, grid_size=GRID_SIZE,
                                 num_heads=NUM_HEADS, compute_dtype=jnp.float32))
    np.testing.assert_allclose(np.asarray(out_f32), np.asarray(ref_f32),
                               rtol=1e-3, atol=1e-3)

    # 2) Production default (bf16 MXU, f32 accumulation) against a reference that
    #    emulates bf16 matmul inputs.  Looser tolerance: the kernel folds `scale`
    #    into the weights before the bf16 cast and defers softmax normalization.
    out_bf16 = jax.block_until_ready(
        grid_attention(x, wqkv, wp, bp, grid_size=GRID_SIZE, num_heads=NUM_HEADS))
    ref_bf16 = jax.block_until_ready(
        grid_attention_reference(x, wqkv, wp, bp, grid_size=GRID_SIZE,
                                 num_heads=NUM_HEADS, compute_dtype=jnp.bfloat16))
    np.testing.assert_allclose(np.asarray(out_bf16), np.asarray(ref_bf16),
                               rtol=5e-2, atol=5e-2)

    # 3) Chunked-band path (third grid axis with windows_per_step=1), as used at
    #    production shapes where a whole band would not fit v7x / v5e VMEM.
    out_chunk = jax.block_until_ready(
        grid_attention(x, wqkv, wp, bp, grid_size=GRID_SIZE, num_heads=NUM_HEADS,
                       compute_dtype=jnp.float32, windows_per_step=1))
    np.testing.assert_allclose(np.asarray(out_chunk), np.asarray(ref_f32),
                               rtol=1e-3, atol=1e-3)

    print("KERNEL_OK")
</pallas_src>

<mosaic_0001>
module attributes {stable_mosaic.version = 11 : i64} {
  func.func @_grid_attention_kernel(%arg0: i32, %arg1: i32, %arg2: i32, %arg3: memref<1x16x8x128xf32, #tpu.memory_space<vmem>>, %arg4: memref<128x384xf32, #tpu.memory_space<vmem>>, %arg5: memref<128x128xf32, #tpu.memory_space<vmem>>, %arg6: memref<1x128xf32, #tpu.memory_space<vmem>>, %arg7: memref<1x16x8x128xf32, #tpu.memory_space<vmem>>, %arg8: memref<128x128xf32, #tpu.memory_space<vmem>>) attributes {dimension_semantics = [#tpu.dimension_semantics<parallel>, #tpu.dimension_semantics<parallel>, #tpu.dimension_semantics<parallel>], iteration_bounds = array<i64: 2, 2, 1>, scalar_prefetch = 0 : i64, scratch_operands = 1 : i64, tpu.core_type = #tpu.core_type<tc>, window_params = [{transform_indices = @transform_0, window_bounds = array<i64: 1, 16, 8, 128>}, {pipeline_mode = #tpu.pipeline_mode<synchronous>, transform_indices = @transform_1, window_bounds = array<i64: 128, 384>}, {pipeline_mode = #tpu.pipeline_mode<synchronous>, transform_indices = @transform_2, window_bounds = array<i64: 128, 128>}, {pipeline_mode = #tpu.pipeline_mode<synchronous>, transform_indices = @transform_3, window_bounds = array<i64: 1, 128>}, {transform_indices = @transform_4, window_bounds = array<i64: 1, 16, 8, 128>}]} {
    %c0 = arith.constant 0 : index
    %c0_0 = arith.constant 0 : index
    %c0_1 = arith.constant 0 : index
    %c0_2 = arith.constant 0 : index
    %0 = vector.load %arg3[%c0, %c0_0, %c0_1, %c0_2] : memref<1x16x8x128xf32, #tpu.memory_space<vmem>>, vector<1x16x8x128xf32>
    %1 = vector.shape_cast %0 : vector<1x16x8x128xf32> to vector<16x8x128xf32>
    %2 = vector.shape_cast %1 : vector<16x8x128xf32> to vector<128x128xf32>
    %c0_3 = arith.constant 0 : index
    %c0_4 = arith.constant 0 : index
    %3 = vector.load %arg4[%c0_3, %c0_4] : memref<128x384xf32, #tpu.memory_space<vmem>>, vector<128x128xf32>
    %cst = arith.constant dense<0.000000e+00> : vector<128x128xf32>
    %4 = tpu.matmul %2, %3, %cst {dimension_numbers = #tpu.dot_dimension_numbers<[1], [0], [0], [1], [0, 0, 1, 1], [], []>} : vector<128x128xf32>, vector<128x128xf32>, vector<128x128xf32> -> vector<128x128xf32>
    %5 = vector.shape_cast %4 : vector<128x128xf32> to vector<2x64x128xf32>
    %c0_5 = arith.constant 0 : index
    %c128 = arith.constant 128 : index
    %6 = vector.load %arg4[%c0_5, %c128] : memref<128x384xf32, #tpu.memory_space<vmem>>, vector<128x128xf32>
    %cst_6 = arith.constant dense<0.000000e+00> : vector<128x128xf32>
    %7 = tpu.matmul %2, %6, %cst_6 {dimension_numbers = #tpu.dot_dimension_numbers<[1], [0], [0], [1], [0, 0, 1, 1], [], []>} : vector<128x128xf32>, vector<128x128xf32>, vector<128x128xf32> -> vector<128x128xf32>
    %8 = vector.shape_cast %7 : vector<128x128xf32> to vector<2x64x128xf32>
    %c0_7 = arith.constant 0 : index
    %c256 = arith.constant 256 : index
    %9 = vector.load %arg4[%c0_7, %c256] : memref<128x384xf32, #tpu.memory_space<vmem>>, vector<128x128xf32>
    %cst_8 = arith.constant dense<0.000000e+00> : vector<128x128xf32>
    %10 = tpu.matmul %2, %9, %cst_8 {dimension_numbers = #tpu.dot_dimension_numbers<[1], [0], [0], [1], [0, 0, 1, 1], [], []>} : vector<128x128xf32>, vector<128x128xf32>, vector<128x128xf32> -> vector<128x128xf32>
    %11 = vector.shape_cast %10 : vector<128x128xf32> to vector<2x64x128xf32>
    %12 = vector.extract_strided_slice %5 {offsets = [0, 0, 0], sizes = [2, 64, 32], strides = [1, 1, 1]} : vector<2x64x128xf32> to vector<2x64x32xf32>
    %13 = vector.extract_strided_slice %8 {offsets = [0, 0, 0], sizes = [2, 64, 32], strides = [1, 1, 1]} : vector<2x64x128xf32> to vector<2x64x32xf32>
    "tpu.trace_start"() <{level = 10 : i32, message = "gqd,gkd->gqk"}> : () -> ()
    %cst_9 = arith.constant dense<0.000000e+00> : vector<2x64x64xf32>
    %14 = tpu.matmul %12, %13, %cst_9 {dimension_numbers = #tpu.dot_dimension_numbers<[2], [2], [1], [1], [0, 0, 0, 1, 1, 1], [0], [0]>} : vector<2x64x32xf32>, vector<2x64x32xf32>, vector<2x64x64xf32> -> vector<2x64x64xf32>
    "tpu.trace_stop"() : () -> ()
    %cst_10 = arith.constant dense<0xFF800000> : vector<2x64xf32>
    %15 = vector.multi_reduction <maximumf>, %14, %cst_10 [2] : vector<2x64x64xf32> to vector<2x64xf32>
    %16 = vector.shape_cast %15 : vector<2x64xf32> to vector<2x64x1xf32>
    %17 = vector.broadcast %16 : vector<2x64x1xf32> to vector<2x64x64xf32>
    %18 = arith.subf %14, %17 : vector<2x64x64xf32>
    %19 = math.exp %18 : vector<2x64x64xf32>
    %cst_11 = arith.constant dense<0.000000e+00> : vector<2x64xf32>
    %20 = vector.multi_reduction <add>, %19, %cst_11 [2] : vector<2x64x64xf32> to vector<2x64xf32>
    %21 = vector.shape_cast %20 : vector<2x64xf32> to vector<2x64x1xf32>
    %22 = tpu.reciprocal %21 : vector<2x64x1xf32> -> vector<2x64x1xf32>
    %23 = vector.extract_strided_slice %11 {offsets = [0, 0, 0], sizes = [2, 64, 32], strides = [1, 1, 1]} : vector<2x64x128xf32> to vector<2x64x32xf32>
    "tpu.trace_start"() <{level = 10 : i32, message = "gqk,gkd->gqd"}> : () -> ()
    %cst_12 = arith.constant dense<0.000000e+00> : vector<2x64x32xf32>
    %24 = tpu.matmul %19, %23, %cst_12 {dimension_numbers = #tpu.dot_dimension_numbers<[2], [1], [1], [2], [0, 0, 0, 1, 1, 2], [0], [0]>} : vector<2x64x64xf32>, vector<2x64x32xf32>, vector<2x64x32xf32> -> vector<2x64x32xf32>
    "tpu.trace_stop"() : () -> ()
    %25 = vector.broadcast %22 : vector<2x64x1xf32> to vector<2x64x32xf32>
    %26 = arith.mulf %24, %25 : vector<2x64x32xf32>
    %27 = vector.extract_strided_slice %5 {offsets = [0, 0, 32], sizes = [2, 64, 32], strides = [1, 1, 1]} : vector<2x64x128xf32> to vector<2x64x32xf32>
    %28 = vector.extract_strided_slice %8 {offsets = [0, 0, 32], sizes = [2, 64, 32], strides = [1, 1, 1]} : vector<2x64x128xf32> to vector<2x64x32xf32>
    "tpu.trace_start"() <{level = 10 : i32, message = "gqd,gkd->gqk"}> : () -> ()
    %cst_13 = arith.constant dense<0.000000e+00> : vector<2x64x64xf32>
    %29 = tpu.matmul %27, %28, %cst_13 {dimension_numbers = #tpu.dot_dimension_numbers<[2], [2], [1], [1], [0, 0, 0, 1, 1, 1], [0], [0]>} : vector<2x64x32xf32>, vector<2x64x32xf32>, vector<2x64x64xf32> -> vector<2x64x64xf32>
    "tpu.trace_stop"() : () -> ()
    %cst_14 = arith.constant dense<0xFF800000> : vector<2x64xf32>
    %30 = vector.multi_reduction <maximumf>, %29, %cst_14 [2] : vector<2x64x64xf32> to vector<2x64xf32>
    %31 = vector.shape_cast %30 : vector<2x64xf32> to vector<2x64x1xf32>
    %32 = vector.broadcast %31 : vector<2x64x1xf32> to vector<2x64x64xf32>
    %33 = arith.subf %29, %32 : vector<2x64x64xf32>
    %34 = math.exp %33 : vector<2x64x64xf32>
    %cst_15 = arith.constant dense<0.000000e+00> : vector<2x64xf32>
    %35 = vector.multi_reduction <add>, %34, %cst_15 [2] : vector<2x64x64xf32> to vector<2x64xf32>
    %36 = vector.shape_cast %35 : vector<2x64xf32> to vector<2x64x1xf32>
    %37 = tpu.reciprocal %36 : vector<2x64x1xf32> -> vector<2x64x1xf32>
    %38 = vector.extract_strided_slice %11 {offsets = [0, 0, 32], sizes = [2, 64, 32], strides = [1, 1, 1]} : vector<2x64x128xf32> to vector<2x64x32xf32>
    "tpu.trace_start"() <{level = 10 : i32, message = "gqk,gkd->gqd"}> : () -> ()
    %cst_16 = arith.constant dense<0.000000e+00> : vector<2x64x32xf32>
    %39 = tpu.matmul %34, %38, %cst_16 {dimension_numbers = #tpu.dot_dimension_numbers<[2], [1], [1], [2], [0, 0, 0, 1, 1, 2], [0], [0]>} : vector<2x64x64xf32>, vector<2x64x32xf32>, vector<2x64x32xf32> -> vector<2x64x32xf32>
    "tpu.trace_stop"() : () -> ()
    %40 = vector.broadcast %37 : vector<2x64x1xf32> to vector<2x64x32xf32>
    %41 = arith.mulf %39, %40 : vector<2x64x32xf32>
    %42 = vector.extract_strided_slice %5 {offsets = [0, 0, 64], sizes = [2, 64, 32], strides = [1, 1, 1]} : vector<2x64x128xf32> to vector<2x64x32xf32>
    %43 = vector.extract_strided_slice %8 {offsets = [0, 0, 64], sizes = [2, 64, 32], strides = [1, 1, 1]} : vector<2x64x128xf32> to vector<2x64x32xf32>
    "tpu.trace_start"() <{level = 10 : i32, message = "gqd,gkd->gqk"}> : () -> ()
    %cst_17 = arith.constant dense<0.000000e+00> : vector<2x64x64xf32>
    %44 = tpu.matmul %42, %43, %cst_17 {dimension_numbers = #tpu.dot_dimension_numbers<[2], [2], [1], [1], [0, 0, 0, 1, 1, 1], [0], [0]>} : vector<2x64x32xf32>, vector<2x64x32xf32>, vector<2x64x64xf32> -> vector<2x64x64xf32>
    "tpu.trace_stop"() : () -> ()
    %cst_18 = arith.constant dense<0xFF800000> : vector<2x64xf32>
    %45 = vector.multi_reduction <maximumf>, %44, %cst_18 [2] : vector<2x64x64xf32> to vector<2x64xf32>
    %46 = vector.shape_cast %45 : vector<2x64xf32> to vector<2x64x1xf32>
    %47 = vector.broadcast %46 : vector<2x64x1xf32> to vector<2x64x64xf32>
    %48 = arith.subf %44, %47 : vector<2x64x64xf32>
    %49 = math.exp %48 : vector<2x64x64xf32>
    %cst_19 = arith.constant dense<0.000000e+00> : vector<2x64xf32>
    %50 = vector.multi_reduction <add>, %49, %cst_19 [2] : vector<2x64x64xf32> to vector<2x64xf32>
    %51 = vector.shape_cast %50 : vector<2x64xf32> to vector<2x64x1xf32>
    %52 = tpu.reciprocal %51 : vector<2x64x1xf32> -> vector<2x64x1xf32>
    %53 = vector.extract_strided_slice %11 {offsets = [0, 0, 64], sizes = [2, 64, 32], strides = [1, 1, 1]} : vector<2x64x128xf32> to vector<2x64x32xf32>
    "tpu.trace_start"() <{level = 10 : i32, message = "gqk,gkd->gqd"}> : () -> ()
    %cst_20 = arith.constant dense<0.000000e+00> : vector<2x64x32xf32>
    %54 = tpu.matmul %49, %53, %cst_20 {dimension_numbers = #tpu.dot_dimension_numbers<[2], [1], [1], [2], [0, 0, 0, 1, 1, 2], [0], [0]>} : vector<2x64x64xf32>, vector<2x64x32xf32>, vector<2x64x32xf32> -> vector<2x64x32xf32>
    "tpu.trace_stop"() : () -> ()
    %55 = vector.broadcast %52 : vector<2x64x1xf32> to vector<2x64x32xf32>
    %56 = arith.mulf %54, %55 : vector<2x64x32xf32>
    %57 = vector.extract_strided_slice %5 {offsets = [0, 0, 96], sizes = [2, 64, 32], strides = [1, 1, 1]} : vector<2x64x128xf32> to vector<2x64x32xf32>
    %58 = vector.extract_strided_slice %8 {offsets = [0, 0, 96], sizes = [2, 64, 32], strides = [1, 1, 1]} : vector<2x64x128xf32> to vector<2x64x32xf32>
    "tpu.trace_start"() <{level = 10 : i32, message = "gqd,gkd->gqk"}> : () -> ()
    %cst_21 = arith.constant dense<0.000000e+00> : vector<2x64x64xf32>
    %59 = tpu.matmul %57, %58, %cst_21 {dimension_numbers = #tpu.dot_dimension_numbers<[2], [2], [1], [1], [0, 0, 0, 1, 1, 1], [0], [0]>} : vector<2x64x32xf32>, vector<2x64x32xf32>, vector<2x64x64xf32> -> vector<2x64x64xf32>
    "tpu.trace_stop"() : () -> ()
    %cst_22 = arith.constant dense<0xFF800000> : vector<2x64xf32>
    %60 = vector.multi_reduction <maximumf>, %59, %cst_22 [2] : vector<2x64x64xf32> to vector<2x64xf32>
    %61 = vector.shape_cast %60 : vector<2x64xf32> to vector<2x64x1xf32>
    %62 = vector.broadcast %61 : vector<2x64x1xf32> to vector<2x64x64xf32>
    %63 = arith.subf %59, %62 : vector<2x64x64xf32>
    %64 = math.exp %63 : vector<2x64x64xf32>
    %cst_23 = arith.constant dense<0.000000e+00> : vector<2x64xf32>
    %65 = vector.multi_reduction <add>, %64, %cst_23 [2] : vector<2x64x64xf32> to vector<2x64xf32>
    %66 = vector.shape_cast %65 : vector<2x64xf32> to vector<2x64x1xf32>
    %67 = tpu.reciprocal %66 : vector<2x64x1xf32> -> vector<2x64x1xf32>
    %68 = vector.extract_strided_slice %11 {offsets = [0, 0, 96], sizes = [2, 64, 32], strides = [1, 1, 1]} : vector<2x64x128xf32> to vector<2x64x32xf32>
    "tpu.trace_start"() <{level = 10 : i32, message = "gqk,gkd->gqd"}> : () -> ()
    %cst_24 = arith.constant dense<0.000000e+00> : vector<2x64x32xf32>
    %69 = tpu.matmul %64, %68, %cst_24 {dimension_numbers = #tpu.dot_dimension_numbers<[2], [1], [1], [2], [0, 0, 0, 1, 1, 2], [0], [0]>} : vector<2x64x64xf32>, vector<2x64x32xf32>, vector<2x64x32xf32> -> vector<2x64x32xf32>
    "tpu.trace_stop"() : () -> ()
    %70 = vector.broadcast %67 : vector<2x64x1xf32> to vector<2x64x32xf32>
    %71 = arith.mulf %69, %70 : vector<2x64x32xf32>
    %72 = tpu.concatenate %26, %41, %56, %71 in 2 : vector<2x64x32xf32>, vector<2x64x32xf32>, vector<2x64x32xf32>, vector<2x64x32xf32> -> vector<2x64x128xf32>
    %73 = vector.shape_cast %72 : vector<2x64x128xf32> to vector<128x128xf32>
    %c0_25 = arith.constant 0 : index
    %c0_26 = arith.constant 0 : index
    %74 = vector.load %arg8[%c0_25, %c0_26] : memref<128x128xf32, #tpu.memory_space<vmem>>, vector<128x128xf32>
    tpu.vector_store %arg8[%c0_25, %c0_26], %73 {strides = array<i32>} : memref<128x128xf32, #tpu.memory_space<vmem>>, vector<128x128xf32>,
    %c0_27 = arith.constant 0 : index
    %c0_28 = arith.constant 0 : index
    %75 = vector.load %arg8[%c0_27, %c0_28] : memref<128x128xf32, #tpu.memory_space<vmem>>, vector<128x128xf32>
    %c0_29 = arith.constant 0 : index
    %c0_30 = arith.constant 0 : index
    %76 = vector.load %arg5[%c0_29, %c0_30] : memref<128x128xf32, #tpu.memory_space<vmem>>, vector<128x128xf32>
    %cst_31 = arith.constant dense<0.000000e+00> : vector<128x128xf32>
    %77 = tpu.matmul %75, %76, %cst_31 {dimension_numbers = #tpu.dot_dimension_numbers<[1], [0], [0], [1], [0, 0, 1, 1], [], []>} : vector<128x128xf32>, vector<128x128xf32>, vector<128x128xf32> -> vector<128x128xf32>
    %c0_32 = arith.constant 0 : index
    %c0_33 = arith.constant 0 : index
    %78 = vector.load %arg6[%c0_32, %c0_33] : memref<1x128xf32, #tpu.memory_space<vmem>>, vector<1x128xf32>
    %79 = vector.broadcast %78 : vector<1x128xf32> to vector<128x128xf32>
    %80 = arith.addf %77, %79 : vector<128x128xf32>
    %81 = vector.shape_cast %80 : vector<128x128xf32> to vector<16x8x128xf32>
    %c0_34 = arith.constant 0 : index
    %c0_35 = arith.constant 0 : index
    %c0_36 = arith.constant 0 : index
    %c0_37 = arith.constant 0 : index
    %82 = vector.load %arg7[%c0_34, %c0_35, %c0_36, %c0_37] : memref<1x16x8x128xf32, #tpu.memory_space<vmem>>, vector<1x16x8x128xf32>
    %83 = vector.shape_cast %82 : vector<1x16x8x128xf32> to vector<16x8x128xf32>
    %84 = vector.shape_cast %81 : vector<16x8x128xf32> to vector<1x16x8x128xf32>
    tpu.vector_store %arg7[%c0_34, %c0_35, %c0_36, %c0_37], %84 {strides = array<i32>} : memref<1x16x8x128xf32, #tpu.memory_space<vmem>>, vector<1x16x8x128xf32>,
    return
  }
  func.func @transform_0(%arg0: i32, %arg1: i32, %arg2: i32) -> (i32, i32, i32, i32) {
    %c0_i32 = arith.constant 0 : i32
    %c0_i32_0 = arith.constant 0 : i32
    return %arg0, %arg2, %arg1, %c0_i32 : i32, i32, i32, i32
  }
  func.func @transform_1(%arg0: i32, %arg1: i32, %arg2: i32) -> (i32, i32) {
    %c0_i32 = arith.constant 0 : i32
    %c0_i32_0 = arith.constant 0 : i32
    %c0_i32_1 = arith.constant 0 : i32
    return %c0_i32, %c0_i32_0 : i32, i32
  }
  func.func @transform_2(%arg0: i32, %arg1: i32, %arg2: i32) -> (i32, i32) {
    %c0_i32 = arith.constant 0 : i32
    %c0_i32_0 = arith.constant 0 : i32
    %c0_i32_1 = arith.constant 0 : i32
    return %c0_i32, %c0_i32_0 : i32, i32
  }
  func.func @transform_3(%arg0: i32, %arg1: i32, %arg2: i32) -> (i32, i32) {
    %c0_i32 = arith.constant 0 : i32
    %c0_i32_0 = arith.constant 0 : i32
    %c0_i32_1 = arith.constant 0 : i32
    return %c0_i32, %c0_i32_0 : i32, i32
  }
  func.func @transform_4(%arg0: i32, %arg1: i32, %arg2: i32) -> (i32, i32, i32, i32) {
    %c0_i32 = arith.constant 0 : i32
    %c0_i32_0 = arith.constant 0 : i32
    return %arg0, %arg2, %arg1, %c0_i32 : i32, i32, i32, i32
  }
}

</mosaic_0001>

<llo_original>
// kernel: tpu_custom_call.1
$region0: #{tpu_custom_call.1}
  #allocation0 [shape = 'u32[]', space=smem, size = 0x4, offset = 0x4, fixed_abs, tag = 'smem constant byte address 0x4 - core index']
  #allocation1 [shape = 'u32[144,128]{1,0:T(1,128)}', space=vmem, size = 0x12000, scoped, tag = 'internal scratch']
  #allocation2 [shape = 'f32[128,128]{1,0:T(8,128)}', space=vmem, size = 0x10000, scoped, tag = 'scratch operand']
  %s0 = inlined_call_operand.hbm [shape: f32[2,16,16,128], index: 0, kind: input, shape index: {}]
  %s1 = inlined_call_operand.hbm [shape: f32[128,384], index: 1, kind: input, shape index: {}]
  %s2 = inlined_call_operand.hbm [shape: f32[128,128], index: 2, kind: input, shape index: {}]
  %s3 = inlined_call_operand.vmem [shape: f32[1,128], index: 3, kind: input, shape index: {}]
  %s4 = inlined_call_operand.hbm [shape: f32[2,16,16,128], index: 4, kind: output, shape index: {}]
  %s5 = sld [smem:[#allocation0]]
  $region61: #{tpu_custom_call.1} parent=0
    _
  %s7 = ssub.s32 1, %s5
  %s8 = scalar_select 0, %s7, %s5
  $region1: #{tpu_custom_call.1} parent=0
    #allocation3 [shape = 'u8[131072]{0}', space=vmem, size = 0x20000, scoped, tag = 'input window, operand 0']
    #allocation4 [shape = 's32[2]{0}', space=sflag, size = 0x8, scoped, tag = 'scoped memory for tpu_custom_call.1']
    #allocation5 [shape = 's32[2]{0}', space=sflag, size = 0x8, scoped, tag = 'scoped memory for tpu_custom_call.1']
    #allocation6 [shape = 'u8[196608]{0}', space=vmem, size = 0x30000, scoped, tag = 'input window, operand 1, single buffered']
    #allocation7 [shape = 's32[1]{0}', space=sflag, size = 0x4, scoped, tag = 'scoped memory for tpu_custom_call.1']
    #allocation8 [shape = 'u8[65536]{0}', space=vmem, size = 0x10000, scoped, tag = 'input window, operand 2, single buffered']
    #allocation9 [shape = 'u8[131072]{0}', space=vmem, size = 0x20000, scoped, tag = 'output window, operand 0']
    %9 = vsyncpa [#allocation4], 0
    %s10 = scalar_lea.sflag [#allocation4], 1
    %11 = vsyncpa %s10, 0
    %12 = vsyncpa [#allocation7], 0
    %13 = vsyncpa [#allocation5], 0
    %s14 = scalar_lea.sflag [#allocation5], 1
    %15 = vsyncpa %s14, 0
    loop: start=0, step=1, limit=6
    $region2: #{tpu_custom_call.1} parent=1 // loop_pre_header
      _
    $region3: #{tpu_custom_call.1} parent=1 // loop_header
      %s17 = sphi 0, %s21
      %p18 = scmp.ge.s32.totalorder %s17, 6
      %s24 = sphi 0, %s43
      %s25 = sphi 0, %s39
      %s26 = sphi 0, %s35
      %s27 = sphi 0, %s24
      %s28 = sphi 0, %s25
      %s29 = sphi 0, %s26
      %s30 = sphi 0, %s27
      %s31 = sphi 0, %s28
      %s32 = sphi 0, %s29
      %s50 = sphi 0, %s52
      %s53 = sphi 0, %s50
      %s54 = sphi 0, %s53
      %s70 = sphi 0, %s54
      %s74 = sphi 0, %s74
      %s76 = sphi 0, %s74
      %s77 = sphi 0, %s76
      %s91 = sphi 0, %s77
      %s95 = sphi 0, %s95
      %s97 = sphi 0, %s95
      %s98 = sphi 0, %s97
      %s112 = sphi 0, %s98
      %s116 = sphi 0, %s116
      %s118 = sphi 0, %s116
      %s119 = sphi 0, %s118
      %s133 = sphi 0, %s119
      %s143 = sphi 0, %s145
      %s146 = sphi 0, %s143
      %s147 = sphi 0, %s146
      %s163 = sphi 0, %s147
    $region4: #{tpu_custom_call.1} parent=1 // loop_header_branch
      %20 = sbr.rel (%p18) target = $region8
    $region5: #{tpu_custom_call.1} parent=1 // loop_body
      %s22 = ssub.s32 %s17, 1
      %s23 = ssub.s32 %s17, 2
      %s33 = sadd.s32 1, %s26
      %p34 = scmp.ge.s32.totalorder %s33, 1
      %s35 = scalar_select %p34, 0, %s33
      %s36 = sadd.s32 1, %s25
      %s37 = scalar_select %p34, %s36, %s25
      %p38 = scmp.ge.s32.totalorder %s37, 2
      %s39 = scalar_select %p38, 0, %s37
      %s40 = sadd.s32 1, %s24
      %s41 = scalar_select %p38, %s40, %s24
      %p42 = scmp.ge.s32.totalorder %s41, 2
      %s43 = scalar_select %p42, 0, %s41
      %s44 = ssub.s32 %s24, %s43
      %s45 = ssub.s32 %s26, %s35
      %s46 = sor.u32 %s44, %s45
      %s47 = ssub.s32 %s25, %s39
      %s48 = sor.u32 %s46, %s47
      %p49 = scmp.eq.s32.totalorder %s48, 0
      %s51 = sadd.s32 %s50, 1
      %s52 = scalar_select %p49, %s50, %s51
      %p55 = pneg %p49
      %p56 = scmp.eq.s32.totalorder %s17, 3
      %p57 = por %p55, %p56
      %p58 = scmp.ne.s32.totalorder %s50, %s53
      %p59 = scmp.eq.s32.totalorder %s17, 0
      %p60 = por %p58, %p59
      %p61 = scmp.ne.s32.totalorder %s50, %s53
      %p62 = scmp.eq.s32.totalorder %s22, 3
      %p63 = por %p61, %p62
      %p64 = scmp.ne.s32.totalorder %s53, %s54
      %p65 = scmp.eq.s32.totalorder %s22, 0
      %p66 = por %p64, %p65
      %p67 = scmp.ne.s32.totalorder %s53, %s54
      %p68 = scmp.eq.s32.totalorder %s23, 3
      %p69 = por %p67, %p68
      %p71 = scmp.ne.s32.totalorder %s54, %s70
      %p72 = scmp.eq.s32.totalorder %s23, 0
      %p73 = por %p71, %p72
      %s75 = sadd.s32 %s74, 1
      %p78 = scmp.eq.s32.totalorder %s17, 3
      %p79 = scmp.ne.s32.totalorder %s74, %s76
      %p80 = scmp.eq.s32.totalorder %s17, 0
      %p81 = por %p79, %p80
      %p82 = scmp.ne.s32.totalorder %s74, %s76
      %p83 = scmp.eq.s32.totalorder %s22, 3
      %p84 = por %p82, %p83
      %p85 = scmp.ne.s32.totalorder %s76, %s77
      %p86 = scmp.eq.s32.totalorder %s22, 0
      %p87 = por %p85, %p86
      %p88 = scmp.ne.s32.totalorder %s76, %s77
      %p89 = scmp.eq.s32.totalorder %s23, 3
      %p90 = por %p88, %p89
      %p92 = scmp.ne.s32.totalorder %s77, %s91
      %p93 = scmp.eq.s32.totalorder %s23, 0
      %p94 = por %p92, %p93
      %s96 = sadd.s32 %s95, 1
      %p99 = scmp.eq.s32.totalorder %s17, 3
      %p100 = scmp.ne.s32.totalorder %s95, %s97
      %p101 = scmp.eq.s32.totalorder %s17, 0
      %p102 = por %p100, %p101
      %p103 = scmp.ne.s32.totalorder %s95, %s97
      %p104 = scmp.eq.s32.totalorder %s22, 3
      %p105 = por %p103, %p104
      %p106 = scmp.ne.s32.totalorder %s97, %s98
      %p107 = scmp.eq.s32.totalorder %s22, 0
      %p108 = por %p106, %p107
      %p109 = scmp.ne.s32.totalorder %s97, %s98
      %p110 = scmp.eq.s32.totalorder %s23, 3
      %p111 = por %p109, %p110
      %p113 = scmp.ne.s32.totalorder %s98, %s112
      %p114 = scmp.eq.s32.totalorder %s23, 0
      %p115 = por %p113, %p114
      %s117 = sadd.s32 %s116, 1
      %p120 = scmp.eq.s32.totalorder %s17, 3
      %p121 = scmp.ne.s32.totalorder %s116, %s118
      %p122 = scmp.eq.s32.totalorder %s17, 0
      %p123 = por %p121, %p122
      %p124 = scmp.ne.s32.totalorder %s116, %s118
      %p125 = scmp.eq.s32.totalorder %s22, 3
      %p126 = por %p124, %p125
      %p127 = scmp.ne.s32.totalorder %s118, %s119
      %p128 = scmp.eq.s32.totalorder %s22, 0
      %p129 = por %p127, %p128
      %p130 = scmp.ne.s32.totalorder %s118, %s119
      %p131 = scmp.eq.s32.totalorder %s23, 3
      %p132 = por %p130, %p131
      %p134 = scmp.ne.s32.totalorder %s119, %s133
      %p135 = scmp.eq.s32.totalorder %s23, 0
      %p136 = por %p134, %p135
      %s137 = ssub.s32 %s24, %s43
      %s138 = ssub.s32 %s26, %s35
      %s139 = sor.u32 %s137, %s138
      %s140 = ssub.s32 %s25, %s39
      %s141 = sor.u32 %s139, %s140
      %p142 = scmp.eq.s32.totalorder %s141, 0
      %s144 = sadd.s32 %s143, 1
      %s145 = scalar_select %p142, %s143, %s144
      %p148 = pneg %p142
      %p149 = scmp.eq.s32.totalorder %s17, 3
      %p150 = por %p148, %p149
      %p151 = scmp.ne.s32.totalorder %s143, %s146
      %p152 = scmp.eq.s32.totalorder %s17, 0
      %p153 = por %p151, %p152
      %p154 = scmp.ne.s32.totalorder %s143, %s146
      %p155 = scmp.eq.s32.totalorder %s22, 3
      %p156 = por %p154, %p155
      %p157 = scmp.ne.s32.totalorder %s146, %s147
      %p158 = scmp.eq.s32.totalorder %s22, 0
      %p159 = por %p157, %p158
      %p160 = scmp.ne.s32.totalorder %s146, %s147
      %p161 = scmp.eq.s32.totalorder %s23, 3
      %p162 = por %p160, %p161
      %p164 = scmp.ne.s32.totalorder %s147, %s163
      %p165 = scmp.eq.s32.totalorder %s23, 0
      %p166 = por %p164, %p165
      %p167 = scmp.le.s32.totalorder 1, %s17
      %p168 = scmp.lt.s32.totalorder %s17, 5
      %p169 = pnand %p167, %p168
      %p170 = pneg %p169
      // Predicated region
      $region9: #{tpu_custom_call.1} parent=5 // pred_check
        _
      $region10: #{tpu_custom_call.1} parent=5 // pred_check_branch
        %172 = sbr.rel (%p169) target = $region12
      $region11: #{tpu_custom_call.1} parent=5 // pred_region
        %s173 = ssub.s32 %s17, 1
        // Predicated region
        $region13: #{tpu_custom_call.1} parent=11 // pred_check
          %p174 = pneg %p87
        $region14: #{tpu_custom_call.1} parent=11 // pred_check_branch
          %176 = sbr.rel (%p174) target = $region16
        $region15: #{tpu_custom_call.1} parent=11 // pred_region
          %s178 = ssub.s32 6144, 6144
          %179 = vsyncadd [#allocation7], %s178
          %s180 = sshll.u32 [#allocation6], 4
          %s181 = int_to_ptr.vmem [resolvable:$true] %s180
          %186 = dma.hbm_to_vmem [thread:$0]  %s1, 6144, %s181, [#allocation7], 384, 384, 24
        $region16: #{tpu_custom_call.1} parent=11 // pred_fallthru
          _
        // Predicated region
        $region17: #{tpu_custom_call.1} parent=11 // pred_check
          %p187 = pneg %p108
        $region18: #{tpu_custom_call.1} parent=11 // pred_check_branch
          %189 = sbr.rel (%p187) target = $region20
        $region19: #{tpu_custom_call.1} parent=11 // pred_region
          %s191 = ssub.s32 2048, 2048
          %192 = vsyncadd [#allocation7], %s191
          %s193 = sshll.u32 [#allocation8], 4
          %s194 = int_to_ptr.vmem [resolvable:$true] %s193
          %199 = dma.hbm_to_vmem [thread:$0]  %s2, 2048, %s194, [#allocation7], 128, 128, 8
        $region20: #{tpu_custom_call.1} parent=11 // pred_fallthru
          _
        // Predicated region
        $region21: #{tpu_custom_call.1} parent=11 // pred_check
          %p200 = pneg %p129
        $region22: #{tpu_custom_call.1} parent=11 // pred_check_branch
          %202 = sbr.rel (%p200) target = $region24
        $region23: #{tpu_custom_call.1} parent=11 // pred_region
          _
        $region24: #{tpu_custom_call.1} parent=11 // pred_fallthru
          _
      $region12: #{tpu_custom_call.1} parent=5 // pred_fallthru
        _
      %p203 = scmp.lt.s32.totalorder %s17, 4
      // Predicated region
      $region25: #{tpu_custom_call.1} parent=5 // pred_check
        %p204 = pneg %p203
      $region26: #{tpu_custom_call.1} parent=5 // pred_check_branch
        %206 = sbr.rel (%p204) target = $region28
      $region27: #{tpu_custom_call.1} parent=5 // pred_region
        // Predicated region
        $region29: #{tpu_custom_call.1} parent=27 // pred_check
          %p207 = pneg %p60
        $region30: #{tpu_custom_call.1} parent=27 // pred_check_branch
          %209 = sbr.rel (%p207) target = $region32
        $region31: #{tpu_custom_call.1} parent=27 // pred_region
          %s210 = sand.u32 %s50, 1
          %s211 = scalar_lea.sflag [#allocation4], %s210
          %s212 = sand.u32 %s50, 1
          %s213 = smul.addr %s212, 128
          %s214 = scalar_lea.vmem [#allocation3], %s213
          %s215 = smul.u32 16, %s26
          %s217 = ssub.s32 2048, 2048
          %218 = vsyncadd %s211, %s217
          %s219 = smul.addr %s215, 2
          %s220 = sadd.s32 %s25, %s219
          %s221 = smul.addr %s24, 32
          %s222 = sadd.s32 %s220, %s221
          %s223 = smul.addr %s222, 128
          %s224 = scalar_lea.hbm %s0, %s223
          %s225 = sshll.u32 %s214, 4
          %s226 = int_to_ptr.vmem [resolvable:$true] %s225
          %231 = dma.hbm_to_vmem [thread:$0]  %s224, 2048, %s226, %s211, 256, 128, 8
        $region32: #{tpu_custom_call.1} parent=27 // pred_fallthru
          _
      $region28: #{tpu_custom_call.1} parent=5 // pred_fallthru
        _
      %p232 = scmp.le.s32.totalorder 1, %s17
      %p233 = scmp.lt.s32.totalorder %s17, 5
      %p234 = pnand %p232, %p233
      %p235 = pneg %p234
      // Predicated region
      $region33: #{tpu_custom_call.1} parent=5 // pred_check
        _
      $region34: #{tpu_custom_call.1} parent=5 // pred_check_branch
        %237 = sbr.rel (%p234) target = $region36
      $region35: #{tpu_custom_call.1} parent=5 // pred_region
        %s238 = ssub.s32 %s17, 1
        %s239 = sand.u32 %s53, 1
        %s240 = scalar_lea.sflag [#allocation4], %s239
        %s241 = sand.u32 %s53, 1
        %s242 = smul.addr %s241, 128
        %s243 = scalar_lea.vmem [#allocation3], %s242
        // Predicated region
        $region37: #{tpu_custom_call.1} parent=35 // pred_check
          %p244 = pneg %p66
        $region38: #{tpu_custom_call.1} parent=35 // pred_check_branch
          %246 = sbr.rel (%p244) target = $region40
        $region39: #{tpu_custom_call.1} parent=35 // pred_region
          %247 = dma.done %s240, 2048
        $region40: #{tpu_custom_call.1} parent=35 // pred_fallthru
          _
        // Predicated region
        $region41: #{tpu_custom_call.1} parent=35 // pred_check
          %p248 = pneg %p87
        $region42: #{tpu_custom_call.1} parent=35 // pred_check_branch
          %250 = sbr.rel (%p248) target = $region44
        $region43: #{tpu_custom_call.1} parent=35 // pred_region
          %251 = dma.done [#allocation7], 6144
        $region44: #{tpu_custom_call.1} parent=35 // pred_fallthru
          _
        // Predicated region
        $region45: #{tpu_custom_call.1} parent=35 // pred_check
          %p252 = pneg %p108
        $region46: #{tpu_custom_call.1} parent=35 // pred_check_branch
          %254 = sbr.rel (%p252) target = $region48
        $region47: #{tpu_custom_call.1} parent=35 // pred_region
          %255 = dma.done [#allocation7], 2048
        $region48: #{tpu_custom_call.1} parent=35 // pred_fallthru
          _
        %s256 = sand.u32 %s53, 1
        %s257 = scalar_lea.sflag [#allocation4], %s256
        %s258 = sand.u32 %s53, 1
        %s259 = smul.addr %s258, 128
        %s260 = scalar_lea.vmem [#allocation3], %s259
        %p261 = pneg %p66
        %p262 = pneg %p63
        %p263 = pneg %p87
        %p264 = pneg %p84
        %p265 = pneg %p108
        %p266 = pneg %p105
        %p267 = pneg %p129
        %p268 = pneg %p126
        %p269 = pneg %p159
        %p270 = pneg %p156
        %s271 = sand.u32 %s146, 1
        %s272 = scalar_lea.sflag [#allocation5], %s271
        %s273 = sand.u32 %s146, 1
        %s274 = smul.addr %s273, 128
        %s275 = scalar_lea.vmem [#allocation9], %s274
        %s276 = smul.u32 16, %s29
        %s277 = smul.u32 16, %s29
        %v278 = vld [vmem:[%s243] sm:$0xff]
        %v279 = vld [vmem:[%s243 + $0x8] sm:$0xff]
        %v280 = vld [vmem:[%s243 + $0x10] sm:$0xff]
        %v281 = vld [vmem:[%s243 + $0x18] sm:$0xff]
        %v282 = vld [vmem:[%s243 + $0x20] sm:$0xff]
        %v283 = vld [vmem:[%s243 + $0x28] sm:$0xff]
        %v284 = vld [vmem:[%s243 + $0x30] sm:$0xff]
        %v285 = vld [vmem:[%s243 + $0x38] sm:$0xff]
        %v286 = vld [vmem:[%s243 + $0x40] sm:$0xff]
        %v287 = vld [vmem:[%s243 + $0x48] sm:$0xff]
        %v288 = vld [vmem:[%s243 + $0x50] sm:$0xff]
        %v289 = vld [vmem:[%s243 + $0x58] sm:$0xff]
        %v290 = vld [vmem:[%s243 + $0x60] sm:$0xff]
        %v291 = vld [vmem:[%s243 + $0x68] sm:$0xff]
        %v292 = vld [vmem:[%s243 + $0x70] sm:$0xff]
        %v293 = vld [vmem:[%s243 + $0x78] sm:$0xff]
        %v294 = vld [vmem:[#allocation6] sm:$0xff]
        %v295 = vld [vmem:[#allocation6 + $0x18] sm:$0xff]
        %v296 = vld [vmem:[#allocation6 + $0x30] sm:$0xff]
        %v297 = vld [vmem:[#allocation6 + $0x48] sm:$0xff]
        %v298 = vld [vmem:[#allocation6 + $0x60] sm:$0xff]
        %v299 = vld [vmem:[#allocation6 + $0x78] sm:$0xff]
        %v300 = vld [vmem:[#allocation6 + $0x90] sm:$0xff]
        %v301 = vld [vmem:[#allocation6 + $0xa8] sm:$0xff]
        %v302 = vld [vmem:[#allocation6 + $0xc0] sm:$0xff]
        %v303 = vld [vmem:[#allocation6 + $0xd8] sm:$0xff]
        %v304 = vld [vmem:[#allocation6 + $0xf0] sm:$0xff]
        %v305 = vld [vmem:[#allocation6 + $0x108] sm:$0xff]
        %v306 = vld [vmem:[#allocation6 + $0x120] sm:$0xff]
        %v307 = vld [vmem:[#allocation6 + $0x138] sm:$0xff]
        %v308 = vld [vmem:[#allocation6 + $0x150] sm:$0xff]
        %v309 = vld [vmem:[#allocation6 + $0x168] sm:$0xff]
        %310 = vmatprep.subr.mxu0 0.0
        %311 = vmatpush1.msra.mxu0 %v294
        %312 = vmatprep.subr.mxu0 0.0
        %313 = vmatpush1.msra.mxu0 %v295
        %314 = vmatprep.subr.mxu0 0.0
        %315 = vmatpush1.msra.mxu0 %v296
        %316 = vmatprep.subr.mxu0 0.0
        %317 = vmatpush1.msra.mxu0 %v297
        %318 = vmatprep.subr.mxu0 0.0
        %319 = vmatpush1.msra.mxu0 %v298
        %320 = vmatprep.subr.mxu0 0.0
        %321 = vmatpush1.msra.mxu0 %v299
        %322 = vmatprep.subr.mxu0 0.0
        %323 = vmatpush1.msra.mxu0 %v300
        %324 = vmatprep.subr.mxu0 0.0
        %325 = vmatpush1.msra.mxu0 %v301
        %326 = vmatprep.subr.mxu0 0.0
        %327 = vmatpush1.msra.mxu0 %v302
        %328 = vmatprep.subr.mxu0 0.0
        %329 = vmatpush1.msra.mxu0 %v303
        %330 = vmatprep.subr.mxu0 0.0
        %331 = vmatpush1.msra.mxu0 %v304
        %332 = vmatprep.subr.mxu0 0.0
        %333 = vmatpush1.msra.mxu0 %v305
        %334 = vmatprep.subr.mxu0 0.0
        %335 = vmatpush1.msra.mxu0 %v306
        %336 = vmatprep.subr.mxu0 0.0
        %337 = vmatpush1.msra.mxu0 %v307
        %338 = vmatprep.subr.mxu0 0.0
        %339 = vmatpush1.msra.mxu0 %v308
        %340 = vmatprep.subr.mxu0 0.0
        %341 = vmatpush1.msra.mxu0 %v309
        %342 = vmatprep.subr.mxu0 0.0
        %343 = vmatpush1.msra.mxu0 0.0
        %344 = vmatprep.subr.mxu0 0.0
        %345 = vmatpush1.msra.mxu0 0.0
        %346 = vmatprep.subr.mxu0 0.0
        %347 = vmatpush1.msra.mxu0 0.0
        %348 = vmatprep.subr.mxu0 0.0
        %349 = vmatpush1.msra.mxu0 0.0
        %350 = vmatprep.subr.mxu0 0.0
        %351 = vmatpush1.msra.mxu0 0.0
        %352 = vmatprep.subr.mxu0 0.0
        %353 = vmatpush1.msra.mxu0 0.0
        %354 = vmatprep.subr.mxu0 0.0
        %355 = vmatpush1.msra.mxu0 0.0
        %356 = vmatprep.subr.mxu0 0.0
        %357 = vmatpush1.msra.mxu0 0.0
        %358 = vmatprep.subr.mxu0 0.0
        %359 = vmatpush1.msra.mxu0 0.0
        %360 = vmatprep.subr.mxu0 0.0
        %361 = vmatpush1.msra.mxu0 0.0
        %362 = vmatprep.subr.mxu0 0.0
        %363 = vmatpush1.msra.mxu0 0.0
        %364 = vmatprep.subr.mxu0 0.0
        %365 = vmatpush1.msra.mxu0 0.0
        %366 = vmatprep.subr.mxu0 0.0
        %367 = vmatpush1.msra.mxu0 0.0
        %368 = vmatprep.subr.mxu0 0.0
        %369 = vmatpush1.msra.mxu0 0.0
        %370 = vmatprep.subr.mxu0 0.0
        %371 = vmatpush1.msra.mxu0 0.0
        %372 = vmatprep.subr.mxu0 0.0
        %373 = vmatpush1.msra.mxu0 0.0
        %374 = vmatprep.mubr.f32.mxu0 0.0
        %375 = vmatmul.mubr.f32.gmra.mrb[0].mxu0 %v278
        %v376 = vpop.f32.mrb[0].mxu0
        %v377 = vadd.f32 0.0, %v376
        %v378 = vpop.f32.mrb[0].mxu0
        %379 = vmatprep.mubr.f32.mxu0 0.0
        %380 = vmatmul.mubr.f32.gmra.mrb[0].mxu0 %v279
        %v381 = vpop.f32.mrb[0].mxu0
        %v382 = vadd.f32 0.0, %v381
        %v383 = vpop.f32.mrb[0].mxu0
        %384 = vmatprep.mubr.f32.mxu0 0.0
        %385 = vmatmul.mubr.f32.gmra.mrb[0].mxu0 %v280
        %v386 = vpop.f32.mrb[0].mxu0
        %v387 = vadd.f32 0.0, %v386
        %v388 = vpop.f32.mrb[0].mxu0
        %389 = vmatprep.mubr.f32.mxu0 0.0
        %390 = vmatmul.mubr.f32.gmra.mrb[0].mxu0 %v281
        %v391 = vpop.f32.mrb[0].mxu0
        %v392 = vadd.f32 0.0, %v391
        %v393 = vpop.f32.mrb[0].mxu0
        %394 = vmatprep.mubr.f32.mxu0 0.0
        %395 = vmatmul.mubr.f32.gmra.mrb[0].mxu0 %v282
        %v396 = vpop.f32.mrb[0].mxu0
        %v397 = vadd.f32 0.0, %v396
        %v398 = vpop.f32.mrb[0].mxu0
        %399 = vmatprep.mubr.f32.mxu0 0.0
        %400 = vmatmul.mubr.f32.gmra.mrb[0].mxu0 %v283
        %v401 = vpop.f32.mrb[0].mxu0
        %v402 = vadd.f32 0.0, %v401
        %v403 = vpop.f32.mrb[0].mxu0
        %404 = vmatprep.mubr.f32.mxu0 0.0
        %405 = vmatmul.mubr.f32.gmra.mrb[0].mxu0 %v284
        %v406 = vpop.f32.mrb[0].mxu0
        %v407 = vadd.f32 0.0, %v406
        %v408 = vpop.f32.mrb[0].mxu0
        %409 = vmatprep.mubr.f32.mxu0 0.0
        %410 = vmatmul.mubr.f32.gmra.mrb[0].mxu0 %v285
        %v411 = vpop.f32.mrb[0].mxu0
        %v412 = vadd.f32 0.0, %v411
        %v413 = vpop.f32.mrb[0].mxu0
        %414 = vmatprep.mubr.f32.mxu0 0.0
        %415 = vmatmul.mubr.f32.gmra.mrb[0].mxu0 %v286
        %v416 = vpop.f32.mrb[0].mxu0
        %v417 = vadd.f32 0.0, %v416
        %v418 = vpop.f32.mrb[0].mxu0
        %419 = vmatprep.mubr.f32.mxu0 0.0
        %420 = vmatmul.mubr.f32.gmra.mrb[0].mxu0 %v287
        %v421 = vpop.f32.mrb[0].mxu0
        %v422 = vadd.f32 0.0, %v421
        %v423 = vpop.f32.mrb[0].mxu0
        %424 = vmatprep.mubr.f32.mxu0 0.0
        %425 = vmatmul.mubr.f32.gmra.mrb[0].mxu0 %v288
        %v426 = vpop.f32.mrb[0].mxu0
        %v427 = vadd.f32 0.0, %v426
        %v428 = vpop.f32.mrb[0].mxu0
        %429 = vmatprep.mubr.f32.mxu0 0.0
        %430 = vmatmul.mubr.f32.gmra.mrb[0].mxu0 %v289
        %v431 = vpop.f32.mrb[0].mxu0
        %v432 = vadd.f32 0.0, %v431
        %v433 = vpop.f32.mrb[0].mxu0
        %434 = vmatprep.mubr.f32.mxu0 0.0
        %435 = vmatmul.mubr.f32.gmra.mrb[0].mxu0 %v290
        %v436 = vpop.f32.mrb[0].mxu0
        %v437 = vadd.f32 0.0, %v436
        %v438 = vpop.f32.mrb[0].mxu0
        %439 = vmatprep.mubr.f32.mxu0 0.0
        %440 = vmatmul.mubr.f32.gmra.mrb[0].mxu0 %v291
        %v441 = vpop.f32.mrb[0].mxu0
        %v442 = vadd.f32 0.0, %v441
        %v443 = vpop.f32.mrb[0].mxu0
        %444 = vmatprep.mubr.f32.mxu0 0.0
        %445 = vmatmul.mubr.f32.gmra.mrb[0].mxu0 %v292
        %v446 = vpop.f32.mrb[0].mxu0
        %v447 = vadd.f32 0.0, %v446
        %v448 = vpop.f32.mrb[0].mxu0
        %449 = vmatprep.mubr.f32.mxu0 0.0
        %450 = vmatmul.mubr.f32.gmra.mrb[0].mxu0 %v293
        %v451 = vpop.f32.mrb[0].mxu0
        %v452 = vadd.f32 0.0, %v451
        %v453 = vpop.f32.mrb[0].mxu0
        %454 = vdwg.mxu0
        %v455 = vld [vmem:[#allocation6 + $0x8] sm:$0xff]
        %v456 = vld [vmem:[#allocation6 + $0x20] sm:$0xff]
        %v457 = vld [vmem:[#allocation6 + $0x38] sm:$0xff]
        %v458 = vld [vmem:[#allocation6 + $0x50] sm:$0xff]
        %v459 = vld [vmem:[#allocation6 + $0x68] sm:$0xff]
        %v460 = vld [vmem:[#allocation6 + $0x80] sm:$0xff]
        %v461 = vld [vmem:[#allocation6 + $0x98] sm:$0xff]
        %v462 = vld [vmem:[#allocation6 + $0xb0] sm:$0xff]
        %v463 = vld [vmem:[#allocation6 + $0xc8] sm:$0xff]
        %v464 = vld [vmem:[#allocation6 + $0xe0] sm:$0xff]
        %v465 = vld [vmem:[#allocation6 + $0xf8] sm:$0xff]
        %v466 = vld [vmem:[#allocation6 + $0x110] sm:$0xff]
        %v467 = vld [vmem:[#allocation6 + $0x128] sm:$0xff]
        %v468 = vld [vmem:[#allocation6 + $0x140] sm:$0xff]
        %v469 = vld [vmem:[#allocation6 + $0x158] sm:$0xff]
        %v470 = vld [vmem:[#allocation6 + $0x170] sm:$0xff]
        %471 = vmatprep.subr.mxu0 0.0
        %472 = vmatpush1.msra.mxu0 %v455
        %473 = vmatprep.subr.mxu0 0.0
        %474 = vmatpush1.msra.mxu0 %v456
        %475 = vmatprep.subr.mxu0 0.0
        %476 = vmatpush1.msra.mxu0 %v457
        %477 = vmatprep.subr.mxu0 0.0
        %478 = vmatpush1.msra.mxu0 %v458
        %479 = vmatprep.subr.mxu0 0.0
        %480 = vmatpush1.msra.mxu0 %v459
        %481 = vmatprep.subr.mxu0 0.0
        %482 = vmatpush1.msra.mxu0 %v460
        %483 = vmatprep.subr.mxu0 0.0
        %484 = vmatpush1.msra.mxu0 %v461
        %485 = vmatprep.subr.mxu0 0.0
        %486 = vmatpush1.msra.mxu0 %v462
        %487 = vmatprep.subr.mxu0 0.0
        %488 = vmatpush1.msra.mxu0 %v463
        %489 = vmatprep.subr.mxu0 0.0
        %490 = vmatpush1.msra.mxu0 %v464
        %491 = vmatprep.subr.mxu0 0.0
        %492 = vmatpush1.msra.mxu0 %v465
        %493 = vmatprep.subr.mxu0 0.0
        %494 = vmatpush1.msra.mxu0 %v466
        %495 = vmatprep.subr.mxu0 0.0
        %496 = vmatpush1.msra.mxu0 %v467
        %497 = vmatprep.subr.mxu0 0.0
        %498 = vmatpush1.msra.mxu0 %v468
        %499 = vmatprep.subr.mxu0 0.0
        %500 = vmatpush1.msra.mxu0 %v469
        %501 = vmatprep.subr.mxu0 0.0
        %502 = vmatpush1.msra.mxu0 %v470
        %503 = vmatprep.subr.mxu0 0.0
        %504 = vmatpush1.msra.mxu0 0.0
        %505 = vmatprep.subr.mxu0 0.0
        %506 = vmatpush1.msra.mxu0 0.0
        %507 = vmatprep.subr.mxu0 0.0
        %508 = vmatpush1.msra.mxu0 0.0
        %509 = vmatprep.subr.mxu0 0.0
        %510 = vmatpush1.msra.mxu0 0.0
        %511 = vmatprep.subr.mxu0 0.0
        %512 = vmatpush1.msra.mxu0 0.0
        %513 = vmatprep.subr.mxu0 0.0
        %514 = vmatpush1.msra.mxu0 0.0
        %515 = vmatprep.subr.mxu0 0.0
        %516 = vmatpush1.msra.mxu0 0.0
        %517 = vmatprep.subr.mxu0 0.0
        %518 = vmatpush1.msra.mxu0 0.0
        %519 = vmatprep.subr.mxu0 0.0
        %520 = vmatpush1.msra.mxu0 0.0
        %521 = vmatprep.subr.mxu0 0.0
        %522 = vmatpush1.msra.mxu0 0.0
        %523 = vmatprep.subr.mxu0 0.0
        %524 = vmatpush1.msra.mxu0 0.0
        %525 = vmatprep.subr.mxu0 0.0
        %526 = vmatpush1.msra.mxu0 0.0
        %527 = vmatprep.subr.mxu0 0.0
        %528 = vmatpush1.msra.mxu0 0.0
        %529 = vmatprep.subr.mxu0 0.0
        %530 = vmatpush1.msra.mxu0 0.0
        %531 = vmatprep.subr.mxu0 0.0
        %532 = vmatpush1.msra.mxu0 0.0
        %533 = vmatprep.subr.mxu0 0.0
        %534 = vmatpush1.msra.mxu0 0.0
        %535 = vmatprep.mubr.f32.mxu0 0.0
        %536 = vmatmul.mubr.f32.gmra.mrb[0].mxu0 %v278
        %v537 = vpop.f32.mrb[0].mxu0
        %v538 = vadd.f32 0.0, %v537
        %v539 = vpop.f32.mrb[0].mxu0
        %540 = vmatprep.mubr.f32.mxu0 0.0
        %541 = vmatmul.mubr.f32.gmra.mrb[0].mxu0 %v279
        %v542 = vpop.f32.mrb[0].mxu0
        %v543 = vadd.f32 0.0, %v542
        %v544 = vpop.f32.mrb[0].mxu0
        %545 = vmatprep.mubr.f32.mxu0 0.0
        %546 = vmatmul.mubr.f32.gmra.mrb[0].mxu0 %v280
        %v547 = vpop.f32.mrb[0].mxu0
        %v548 = vadd.f32 0.0, %v547
        %v549 = vpop.f32.mrb[0].mxu0
        %550 = vmatprep.mubr.f32.mxu0 0.0
        %551 = vmatmul.mubr.f32.gmra.mrb[0].mxu0 %v281
        %v552 = vpop.f32.mrb[0].mxu0
        %v553 = vadd.f32 0.0, %v552
        %v554 = vpop.f32.mrb[0].mxu0
        %555 = vmatprep.mubr.f32.mxu0 0.0
        %556 = vmatmul.mubr.f32.gmra.mrb[0].mxu0 %v282
        %v557 = vpop.f32.mrb[0].mxu0
        %v558 = vadd.f32 0.0, %v557
        %v559 = vpop.f32.mrb[0].mxu0
        %560 = vmatprep.mubr.f32.mxu0 0.0
        %561 = vmatmul.mubr.f32.gmra.mrb[0].mxu0 %v283
        %v562 = vpop.f32.mrb[0].mxu0
        %v563 = vadd.f32 0.0, %v562
        %v564 = vpop.f32.mrb[0].mxu0
        %565 = vmatprep.mubr.f32.mxu0 0.0
        %566 = vmatmul.mubr.f32.gmra.mrb[0].mxu0 %v284
        %v567 = vpop.f32.mrb[0].mxu0
        %v568 = vadd.f32 0.0, %v567
        %v569 = vpop.f32.mrb[0].mxu0
        %570 = vmatprep.mubr.f32.mxu0 0.0
        %571 = vmatmul.mubr.f32.gmra.mrb[0].mxu0 %v285
        %v572 = vpop.f32.mrb[0].mxu0
        %v573 = vadd.f32 0.0, %v572
        %v574 = vpop.f32.mrb[0].mxu0
        %575 = vmatprep.mubr.f32.mxu0 0.0
        %576 = vmatmul.mubr.f32.gmra.mrb[0].mxu0 %v286
        %v577 = vpop.f32.mrb[0].mxu0
        %v578 = vadd.f32 0.0, %v577
        %v579 = vpop.f32.mrb[0].mxu0
        %580 = vmatprep.mubr.f32.mxu0 0.0
        %581 = vmatmul.mubr.f32.gmra.mrb[0].mxu0 %v287
        %v582 = vpop.f32.mrb[0].mxu0
        %v583 = vadd.f32 0.0, %v582
        %v584 = vpop.f32.mrb[0].mxu0
        %585 = vmatprep.mubr.f32.mxu0 0.0
        %586 = vmatmul.mubr.f32.gmra.mrb[0].mxu0 %v288
        %v587 = vpop.f32.mrb[0].mxu0
        %v588 = vadd.f32 0.0, %v587
        %v589 = vpop.f32.mrb[0].mxu0
        %590 = vmatprep.mubr.f32.mxu0 0.0
        %591 = vmatmul.mubr.f32.gmra.mrb[0].mxu0 %v289
        %v592 = vpop.f32.mrb[0].mxu0
        %v593 = vadd.f32 0.0, %v592
        %v594 = vpop.f32.mrb[0].mxu0
        %595 = vmatprep.mubr.f32.mxu0 0.0
        %596 = vmatmul.mubr.f32.gmra.mrb[0].mxu0 %v290
        %v597 = vpop.f32.mrb[0].mxu0
        %v598 = vadd.f32 0.0, %v597
        %v599 = vpop.f32.mrb[0].mxu0
        %600 = vmatprep.mubr.f32.mxu0 0.0
        %601 = vmatmul.mubr.f32.gmra.mrb[0].mxu0 %v291
        %v602 = vpop.f32.mrb[0].mxu0
        %v603 = vadd.f32 0.0, %v602
        %v604 = vpop.f32.mrb[0].mxu0
        %605 = vmatprep.mubr.f32.mxu0 0.0
        %606 = vmatmul.mubr.f32.gmra.mrb[0].mxu0 %v292
        %v607 = vpop.f32.mrb[0].mxu0
        %v608 = vadd.f32 0.0, %v607
        %v609 = vpop.f32.mrb[0].mxu0
        %610 = vmatprep.mubr.f32.mxu0 0.0
        %611 = vmatmul.mubr.f32.gmra.mrb[0].mxu0 %v293
        %v612 = vpop.f32.mrb[0].mxu0
        %v613 = vadd.f32 0.0, %v612
        %v614 = vpop.f32.mrb[0].mxu0
        %615 = vdwg.mxu0
        %v616 = vld [vmem:[#allocation6 + $0x10] sm:$0xff]
        %v617 = vld [vmem:[#allocation6 + $0x28] sm:$0xff]
        %v618 = vld [vmem:[#allocation6 + $0x40] sm:$0xff]
        %v619 = vld [vmem:[#allocation6 + $0x58] sm:$0xff]
        %v620 = vld [vmem:[#allocation6 + $0x70] sm:$0xff]
        %v621 = vld [vmem:[#allocation6 + $0x88] sm:$0xff]
        %v622 = vld [vmem:[#allocation6 + $0xa0] sm:$0xff]
        %v623 = vld [vmem:[#allocation6 + $0xb8] sm:$0xff]
        %v624 = vld [vmem:[#allocation6 + $0xd0] sm:$0xff]
        %v625 = vld [vmem:[#allocation6 + $0xe8] sm:$0xff]
        %v626 = vld [vmem:[#allocation6 + $0x100] sm:$0xff]
        %v627 = vld [vmem:[#allocation6 + $0x118] sm:$0xff]
        %v628 = vld [vmem:[#allocation6 + $0x130] sm:$0xff]
        %v629 = vld [vmem:[#allocation6 + $0x148] sm:$0xff]
        %v630 = vld [vmem:[#allocation6 + $0x160] sm:$0xff]
        %v631 = vld [vmem:[#allocation6 + $0x178] sm:$0xff]
        %632 = vmatprep.subr.mxu0 0.0
        %633 = vmatpush1.msra.mxu0 %v616
        %634 = vmatprep.subr.mxu0 0.0
        %635 = vmatpush1.msra.mxu0 %v617
        %636 = vmatprep.subr.mxu0 0.0
        %637 = vmatpush1.msra.mxu0 %v618
        %638 = vmatprep.subr.mxu0 0.0
        %639 = vmatpush1.msra.mxu0 %v619
        %640 = vmatprep.subr.mxu0 0.0
        %641 = vmatpush1.msra.mxu0 %v620
        %642 = vmatprep.subr.mxu0 0.0
        %643 = vmatpush1.msra.mxu0 %v621
        %644 = vmatprep.subr.mxu0 0.0
        %645 = vmatpush1.msra.mxu0 %v622
        %646 = vmatprep.subr.mxu0 0.0
        %647 = vmatpush1.msra.mxu0 %v623
        %648 = vmatprep.subr.mxu0 0.0
        %649 = vmatpush1.msra.mxu0 %v624
        %650 = vmatprep.subr.mxu0 0.0
        %651 = vmatpush1.msra.mxu0 %v625
        %652 = vmatprep.subr.mxu0 0.0
        %653 = vmatpush1.msra.mxu0 %v626
        %654 = vmatprep.subr.mxu0 0.0
        %655 = vmatpush1.msra.mxu0 %v627
        %656 = vmatprep.subr.mxu0 0.0
        %657 = vmatpush1.msra.mxu0 %v628
        %658 = vmatprep.subr.mxu0 0.0
        %659 = vmatpush1.msra.mxu0 %v629
        %660 = vmatprep.subr.mxu0 0.0
        %661 = vmatpush1.msra.mxu0 %v630
        %662 = vmatprep.subr.mxu0 0.0
        %663 = vmatpush1.msra.mxu0 %v631
        %664 = vmatprep.subr.mxu0 0.0
        %665 = vmatpush1.msra.mxu0 0.0
        %666 = vmatprep.subr.mxu0 0.0
        %667 = vmatpush1.msra.mxu0 0.0
        %668 = vmatprep.subr.mxu0 0.0
        %669 = vmatpush1.msra.mxu0 0.0
        %670 = vmatprep.subr.mxu0 0.0
        %671 = vmatpush1.msra.mxu0 0.0
        %672 = vmatprep.subr.mxu0 0.0
        %673 = vmatpush1.msra.mxu0 0.0
        %674 = vmatprep.subr.mxu0 0.0
        %675 = vmatpush1.msra.mxu0 0.0
        %676 = vmatprep.subr.mxu0 0.0
        %677 = vmatpush1.msra.mxu0 0.0
        %678 = vmatprep.subr.mxu0 0.0
        %679 = vmatpush1.msra.mxu0 0.0
        %680 = vmatprep.subr.mxu0 0.0
        %681 = vmatpush1.msra.mxu0 0.0
        %682 = vmatprep.subr.mxu0 0.0
        %683 = vmatpush1.msra.mxu0 0.0
        %684 = vmatprep.subr.mxu0 0.0
        %685 = vmatpush1.msra.mxu0 0.0
        %686 = vmatprep.subr.mxu0 0.0
        %687 = vmatpush1.msra.mxu0 0.0
        %688 = vmatprep.subr.mxu0 0.0
        %689 = vmatpush1.msra.mxu0 0.0
        %690 = vmatprep.subr.mxu0 0.0
        %691 = vmatpush1.msra.mxu0 0.0
        %692 = vmatprep.subr.mxu0 0.0
        %693 = vmatpush1.msra.mxu0 0.0
        %694 = vmatprep.subr.mxu0 0.0
        %695 = vmatpush1.msra.mxu0 0.0
        %696 = vmatprep.mubr.f32.mxu0 0.0
        %697 = vmatmul.mubr.f32.gmra.mrb[0].mxu0 %v278
        %v698 = vpop.f32.mrb[0].mxu0
        %v699 = vadd.f32 0.0, %v698
        %v700 = vpop.f32.mrb[0].mxu0
        %701 = vmatprep.mubr.f32.mxu0 0.0
        %702 = vmatmul.mubr.f32.gmra.mrb[0].mxu0 %v279
        %v703 = vpop.f32.mrb[0].mxu0
        %v704 = vadd.f32 0.0, %v703
        %v705 = vpop.f32.mrb[0].mxu0
        %706 = vmatprep.mubr.f32.mxu0 0.0
        %707 = vmatmul.mubr.f32.gmra.mrb[0].mxu0 %v280
        %v708 = vpop.f32.mrb[0].mxu0
        %v709 = vadd.f32 0.0, %v708
        %v710 = vpop.f32.mrb[0].mxu0
        %711 = vmatprep.mubr.f32.mxu0 0.0
        %712 = vmatmul.mubr.f32.gmra.mrb[0].mxu0 %v281
        %v713 = vpop.f32.mrb[0].mxu0
        %v714 = vadd.f32 0.0, %v713
        %v715 = vpop.f32.mrb[0].mxu0
        %716 = vmatprep.mubr.f32.mxu0 0.0
        %717 = vmatmul.mubr.f32.gmra.mrb[0].mxu0 %v282
        %v718 = vpop.f32.mrb[0].mxu0
        %v719 = vadd.f32 0.0, %v718
        %v720 = vpop.f32.mrb[0].mxu0
        %721 = vmatprep.mubr.f32.mxu0 0.0
        %722 = vmatmul.mubr.f32.gmra.mrb[0].mxu0 %v283
        %v723 = vpop.f32.mrb[0].mxu0
        %v724 = vadd.f32 0.0, %v723
        %v725 = vpop.f32.mrb[0].mxu0
        %726 = vmatprep.mubr.f32.mxu0 0.0
        %727 = vmatmul.mubr.f32.gmra.mrb[0].mxu0 %v284
        %v728 = vpop.f32.mrb[0].mxu0
        %v729 = vadd.f32 0.0, %v728
        %v730 = vpop.f32.mrb[0].mxu0
        %731 = vmatprep.mubr.f32.mxu0 0.0
        %732 = vmatmul.mubr.f32.gmra.mrb[0].mxu0 %v285
        %v733 = vpop.f32.mrb[0].mxu0
        %v734 = vadd.f32 0.0, %v733
        %v735 = vpop.f32.mrb[0].mxu0
        %736 = vmatprep.mubr.f32.mxu0 0.0
        %737 = vmatmul.mubr.f32.gmra.mrb[0].mxu0 %v286
        %v738 = vpop.f32.mrb[0].mxu0
        %v739 = vadd.f32 0.0, %v738
        %v740 = vpop.f32.mrb[0].mxu0
        %741 = vmatprep.mubr.f32.mxu0 0.0
        %742 = vmatmul.mubr.f32.gmra.mrb[0].mxu0 %v287
        %v743 = vpop.f32.mrb[0].mxu0
        %v744 = vadd.f32 0.0, %v743
        %v745 = vpop.f32.mrb[0].mxu0
        %746 = vmatprep.mubr.f32.mxu0 0.0
        %747 = vmatmul.mubr.f32.gmra.mrb[0].mxu0 %v288
        %v748 = vpop.f32.mrb[0].mxu0
        %v749 = vadd.f32 0.0, %v748
        %v750 = vpop.f32.mrb[0].mxu0
        %751 = vmatprep.mubr.f32.mxu0 0.0
        %752 = vmatmul.mubr.f32.gmra.mrb[0].mxu0 %v289
        %v753 = vpop.f32.mrb[0].mxu0
        %v754 = vadd.f32 0.0, %v753
        %v755 = vpop.f32.mrb[0].mxu0
        %756 = vmatprep.mubr.f32.mxu0 0.0
        %757 = vmatmul.mubr.f32.gmra.mrb[0].mxu0 %v290
        %v758 = vpop.f32.mrb[0].mxu0
        %v759 = vadd.f32 0.0, %v758
        %v760 = vpop.f32.mrb[0].mxu0
        %761 = vmatprep.mubr.f32.mxu0 0.0
        %762 = vmatmul.mubr.f32.gmra.mrb[0].mxu0 %v291
        %v763 = vpop.f32.mrb[0].mxu0
        %v764 = vadd.f32 0.0, %v763
        %v765 = vpop.f32.mrb[0].mxu0
        %766 = vmatprep.mubr.f32.mxu0 0.0
        %767 = vmatmul.mubr.f32.gmra.mrb[0].mxu0 %v292
        %v768 = vpop.f32.mrb[0].mxu0
        %v769 = vadd.f32 0.0, %v768
        %v770 = vpop.f32.mrb[0].mxu0
        %771 = vmatprep.mubr.f32.mxu0 0.0
        %772 = vmatmul.mubr.f32.gmra.mrb[0].mxu0 %v293
        %v773 = vpop.f32.mrb[0].mxu0
        %v774 = vadd.f32 0.0, %v773
        %v775 = vpop.f32.mrb[0].mxu0
        %776 = vdwg.mxu0
        %vm777 = vcmask 261120
        %v779 = vsel %vm777, %v377, 0
        %v782 = vsel %vm777, %v382, 0
        %v785 = vsel %vm777, %v387, 0
        %v788 = vsel %vm777, %v392, 0
        %v791 = vsel %vm777, %v397, 0
        %v794 = vsel %vm777, %v402, 0
        %v797 = vsel %vm777, %v407, 0
        %v800 = vsel %vm777, %v412, 0
        %v803 = vsel %vm777, %v538, 0
        %v806 = vsel %vm777, %v543, 0
        %v809 = vsel %vm777, %v548, 0
        %v812 = vsel %vm777, %v553, 0
        %v815 = vsel %vm777, %v558, 0
        %v818 = vsel %vm777, %v563, 0
        %v821 = vsel %vm777, %v568, 0
        %v824 = vsel %vm777, %v573, 0
        %826 = vmatprep.subr.mxu0 0.0
        %827 = vmatpush1.xpose.msra.mxu0 %v803
        %828 = vmatprep.subr.mxu0 0.0
        %829 = vmatpush1.xpose.msra.mxu0 %v806
        %830 = vmatprep.subr.mxu0 0.0
        %831 = vmatpush1.xpose.msra.mxu0 %v809
        %832 = vmatprep.subr.mxu0 0.0
        %833 = vmatpush1.xpose.msra.mxu0 %v812
        %834 = vmatprep.subr.mxu0 0.0
        %835 = vmatpush1.xpose.msra.mxu0 %v815
        %836 = vmatprep.subr.mxu0 0.0
        %837 = vmatpush1.xpose.msra.mxu0 %v818
        %838 = vmatprep.subr.mxu0 0.0
        %839 = vmatpush1.xpose.msra.mxu0 %v821
        %840 = vmatprep.subr.mxu0 0.0
        %841 = vmatpush1.xpose.msra.mxu0 %v824
        %842 = vmatprep.subr.mxu0 0.0
        %843 = vmatpush1.xpose.msra.mxu0 0.0
        %844 = vmatprep.subr.mxu0 0.0
        %845 = vmatpush1.xpose.msra.mxu0 0.0
        %846 = vmatprep.subr.mxu0 0.0
        %847 = vmatpush1.xpose.msra.mxu0 0.0
        %848 = vmatprep.subr.mxu0 0.0
        %849 = vmatpush1.xpose.msra.mxu0 0.0
        %850 = vmatprep.subr.mxu0 0.0
        %851 = vmatpush1.xpose.msra.mxu0 0.0
        %852 = vmatprep.subr.mxu0 0.0
        %853 = vmatpush1.xpose.msra.mxu0 0.0
        %854 = vmatprep.subr.mxu0 0.0
        %855 = vmatpush1.xpose.msra.mxu0 0.0
        %856 = vmatprep.subr.mxu0 0.0
        %857 = vmatpush1.xpose.msra.mxu0 0.0
        %858 = vmatprep.subr.mxu0 0.0
        %859 = vmatpush1.xpose.msra.mxu0 0.0
        %860 = vmatprep.subr.mxu0 0.0
        %861 = vmatpush1.xpose.msra.mxu0 0.0
        %862 = vmatprep.subr.mxu0 0.0
        %863 = vmatpush1.xpose.msra.mxu0 0.0
        %864 = vmatprep.subr.mxu0 0.0
        %865 = vmatpush1.xpose.msra.mxu0 0.0
        %866 = vmatprep.subr.mxu0 0.0
        %867 = vmatpush1.xpose.msra.mxu0 0.0
        %868 = vmatprep.subr.mxu0 0.0
        %869 = vmatpush1.xpose.msra.mxu0 0.0
        %870 = vmatprep.subr.mxu0 0.0
        %871 = vmatpush1.xpose.msra.mxu0 0.0
        %872 = vmatprep.subr.mxu0 0.0
        %873 = vmatpush1.xpose.msra.mxu0 0.0
        %874 = vmatprep.subr.mxu0 0.0
        %875 = vmatpush1.xpose.msra.mxu0 0.0
        %876 = vmatprep.subr.mxu0 0.0
        %877 = vmatpush1.xpose.msra.mxu0 0.0
        %878 = vmatprep.subr.mxu0 0.0
        %879 = vmatpush1.xpose.msra.mxu0 0.0
        %880 = vmatprep.subr.mxu0 0.0
        %881 = vmatpush1.xpose.msra.mxu0 0.0
        %882 = vmatprep.subr.mxu0 0.0
        %883 = vmatpush1.xpose.msra.mxu0 0.0
        %884 = vmatprep.subr.mxu0 0.0
        %885 = vmatpush1.xpose.msra.mxu0 0.0
        %886 = vmatprep.subr.mxu0 0.0
        %887 = vmatpush1.xpose.msra.mxu0 0.0
        %888 = vmatprep.subr.mxu0 0.0
        %889 = vmatpush1.xpose.msra.mxu0 0.0
        %890 = vmatprep.mubr.f32.mxu0 0.0
        %891 = vmatmul.mubr.f32.gmra.mrb[0].mxu0 %v779
        %v892 = vpop.f32.mrb[0].mxu0
        %v893 = vadd.f32 0.0, %v892
        %v894 = vpop.f32.mrb[0].mxu0
        %895 = vmatprep.mubr.f32.mxu0 0.0
        %896 = vmatmul.mubr.f32.gmra.mrb[0].mxu0 %v782
        %v897 = vpop.f32.mrb[0].mxu0
        %v898 = vadd.f32 0.0, %v897
        %v899 = vpop.f32.mrb[0].mxu0
        %900 = vmatprep.mubr.f32.mxu0 0.0
        %901 = vmatmul.mubr.f32.gmra.mrb[0].mxu0 %v785
        %v902 = vpop.f32.mrb[0].mxu0
        %v903 = vadd.f32 0.0, %v902
        %v904 = vpop.f32.mrb[0].mxu0
        %905 = vmatprep.mubr.f32.mxu0 0.0
        %906 = vmatmul.mubr.f32.gmra.mrb[0].mxu0 %v788
        %v907 = vpop.f32.mrb[0].mxu0
        %v908 = vadd.f32 0.0, %v907
        %v909 = vpop.f32.mrb[0].mxu0
        %910 = vmatprep.mubr.f32.mxu0 0.0
        %911 = vmatmul.mubr.f32.gmra.mrb[0].mxu0 %v791
        %v912 = vpop.f32.mrb[0].mxu0
        %v913 = vadd.f32 0.0, %v912
        %v914 = vpop.f32.mrb[0].mxu0
        %915 = vmatprep.mubr.f32.mxu0 0.0
        %916 = vmatmul.mubr.f32.gmra.mrb[0].mxu0 %v794
        %v917 = vpop.f32.mrb[0].mxu0
        %v918 = vadd.f32 0.0, %v917
        %v919 = vpop.f32.mrb[0].mxu0
        %920 = vmatprep.mubr.f32.mxu0 0.0
        %921 = vmatmul.mubr.f32.gmra.mrb[0].mxu0 %v797
        %v922 = vpop.f32.mrb[0].mxu0
        %v923 = vadd.f32 0.0, %v922
        %v924 = vpop.f32.mrb[0].mxu0
        %925 = vmatprep.mubr.f32.mxu0 0.0
        %926 = vmatmul.mubr.f32.gmra.mrb[0].mxu0 %v800
        %v927 = vpop.f32.mrb[0].mxu0
        %v928 = vadd.f32 0.0, %v927
        %v929 = vpop.f32.mrb[0].mxu0
        %930 = vdwg.mxu0
        %v932 = vsel %vm777, %v417, 0
        %v935 = vsel %vm777, %v422, 0
        %v938 = vsel %vm777, %v427, 0
        %v941 = vsel %vm777, %v432, 0
        %v944 = vsel %vm777, %v437, 0
        %v947 = vsel %vm777, %v442, 0
        %v950 = vsel %vm777, %v447, 0
        %v953 = vsel %vm777, %v452, 0
        %v956 = vsel %vm777, %v578, 0
        %v959 = vsel %vm777, %v583, 0
        %v962 = vsel %vm777, %v588, 0
        %v965 = vsel %vm777, %v593, 0
        %v968 = vsel %vm777, %v598, 0
        %v971 = vsel %vm777, %v603, 0
        %v974 = vsel %vm777, %v608, 0
        %v977 = vsel %vm777, %v613, 0
        %979 = vmatprep.subr.mxu0 0.0
        %980 = vmatpush1.xpose.msra.mxu0 %v956
        %981 = vmatprep.subr.mxu0 0.0
        %982 = vmatpush1.xpose.msra.mxu0 %v959
        %983 = vmatprep.subr.mxu0 0.0
        %984 = vmatpush1.xpose.msra.mxu0 %v962
        %985 = vmatprep.subr.mxu0 0.0
        %986 = vmatpush1.xpose.msra.mxu0 %v965
        %987 = vmatprep.subr.mxu0 0.0
        %988 = vmatpush1.xpose.msra.mxu0 %v968
        %989 = vmatprep.subr.mxu0 0.0
        %990 = vmatpush1.xpose.msra.mxu0 %v971
        %991 = vmatprep.subr.mxu0 0.0
        %992 = vmatpush1.xpose.msra.mxu0 %v974
        %993 = vmatprep.subr.mxu0 0.0
        %994 = vmatpush1.xpose.msra.mxu0 %v977
        %995 = vmatprep.subr.mxu0 0.0
        %996 = vmatpush1.xpose.msra.mxu0 0.0
        %997 = vmatprep.subr.mxu0 0.0
        %998 = vmatpush1.xpose.msra.mxu0 0.0
        %999 = vmatprep.subr.mxu0 0.0
        %1000 = vmatpush1.xpose.msra.mxu0 0.0
        %1001 = vmatprep.subr.mxu0 0.0
        %1002 = vmatpush1.xpose.msra.mxu0 0.0
        %1003 = vmatprep.subr.mxu0 0.0
        %1004 = vmatpush1.xpose.msra.mxu0 0.0
        %1005 = vmatprep.subr.mxu0 0.0
        %1006 = vmatpush1.xpose.msra.mxu0 0.0
        %1007 = vmatprep.subr.mxu0 0.0
        %1008 = vmatpush1.xpose.msra.mxu0 0.0
        %1009 = vmatprep.subr.mxu0 0.0
        %1010 = vmatpush1.xpose.msra.mxu0 0.0
        %1011 = vmatprep.subr.mxu0 0.0
        %1012 = vmatpush1.xpose.msra.mxu0 0.0
        %1013 = vmatprep.subr.mxu0 0.0
        %1014 = vmatpush1.xpose.msra.mxu0 0.0
        %1015 = vmatprep.subr.mxu0 0.0
        %1016 = vmatpush1.xpose.msra.mxu0 0.0
        %1017 = vmatprep.subr.mxu0 0.0
        %1018 = vmatpush1.xpose.msra.mxu0 0.0
        %1019 = vmatprep.subr.mxu0 0.0
        %1020 = vmatpush1.xpose.msra.mxu0 0.0
        %1021 = vmatprep.subr.mxu0 0.0
        %1022 = vmatpush1.xpose.msra.mxu0 0.0
        %1023 = vmatprep.subr.mxu0 0.0
        %1024 = vmatpush1.xpose.msra.mxu0 0.0
        %1025 = vmatprep.subr.mxu0 0.0
        %1026 = vmatpush1.xpose.msra.mxu0 0.0
        %1027 = vmatprep.subr.mxu0 0.0
        %1028 = vmatpush1.xpose.msra.mxu0 0.0
        %1029 = vmatprep.subr.mxu0 0.0
        %1030 = vmatpush1.xpose.msra.mxu0 0.0
        %1031 = vmatprep.subr.mxu0 0.0
        %1032 = vmatpush1.xpose.msra.mxu0 0.0
        %1033 = vmatprep.subr.mxu0 0.0
        %1034 = vmatpush1.xpose.msra.mxu0 0.0
        %1035 = vmatprep.subr.mxu0 0.0
        %1036 = vmatpush1.xpose.msra.mxu0 0.0
        %1037 = vmatprep.subr.mxu0 0.0
        %1038 = vmatpush1.xpose.msra.mxu0 0.0
        %1039 = vmatprep.subr.mxu0 0.0
        %1040 = vmatpush1.xpose.msra.mxu0 0.0
        %1041 = vmatprep.subr.mxu0 0.0
        %1042 = vmatpush1.xpose.msra.mxu0 0.0
        %1043 = vmatprep.mubr.f32.mxu0 0.0
        %1044 = vmatmul.mubr.f32.gmra.mrb[0].mxu0 %v932
        %v1045 = vpop.f32.mrb[0].mxu0
        %v1046 = vadd.f32 0.0, %v1045
        %v1047 = vpop.f32.mrb[0].mxu0
        %1048 = vmatprep.mubr.f32.mxu0 0.0
        %1049 = vmatmul.mubr.f32.gmra.mrb[0].mxu0 %v935
        %v1050 = vpop.f32.mrb[0].mxu0
        %v1051 = vadd.f32 0.0, %v1050
        %v1052 = vpop.f32.mrb[0].mxu0
        %1053 = vmatprep.mubr.f32.mxu0 0.0
        %1054 = vmatmul.mubr.f32.gmra.mrb[0].mxu0 %v938
        %v1055 = vpop.f32.mrb[0].mxu0
        %v1056 = vadd.f32 0.0, %v1055
        %v1057 = vpop.f32.mrb[0].mxu0
        %1058 = vmatprep.mubr.f32.mxu0 0.0
        %1059 = vmatmul.mubr.f32.gmra.mrb[0].mxu0 %v941
        %v1060 = vpop.f32.mrb[0].mxu0
        %v1061 = vadd.f32 0.0, %v1060
        %v1062 = vpop.f32.mrb[0].mxu0
        %1063 = vmatprep.mubr.f32.mxu0 0.0
        %1064 = vmatmul.mubr.f32.gmra.mrb[0].mxu0 %v944
        %v1065 = vpop.f32.mrb[0].mxu0
        %v1066 = vadd.f32 0.0, %v1065
        %v1067 = vpop.f32.mrb[0].mxu0
        %1068 = vmatprep.mubr.f32.mxu0 0.0
        %1069 = vmatmul.mubr.f32.gmra.mrb[0].mxu0 %v947
        %v1070 = vpop.f32.mrb[0].mxu0
        %v1071 = vadd.f32 0.0, %v1070
        %v1072 = vpop.f32.mrb[0].mxu0
        %1073 = vmatprep.mubr.f32.mxu0 0.0
        %1074 = vmatmul.mubr.f32.gmra.mrb[0].mxu0 %v950
        %v1075 = vpop.f32.mrb[0].mxu0
        %v1076 = vadd.f32 0.0, %v1075
        %v1077 = vpop.f32.mrb[0].mxu0
        %1078 = vmatprep.mubr.f32.mxu0 0.0
        %1079 = vmatmul.mubr.f32.gmra.mrb[0].mxu0 %v953
        %v1080 = vpop.f32.mrb[0].mxu0
        %v1081 = vadd.f32 0.0, %v1080
        %v1082 = vpop.f32.mrb[0].mxu0
        %1083 = vdwg.mxu0
        %vm1084 = vcmask 523264
        %v1085 = vsel %vm1084, %v893, -inf
        %1086 = vmax.xlane.f32.xlu0 %v1085
        %v1087 = vpop.xlane.xlu0 %1086
        %v1088 = vsel %vm1084, %v898, -inf
        %1089 = vmax.xlane.f32.xlu0 %v1088
        %v1090 = vpop.xlane.xlu0 %1089
        %v1091 = vsel %vm1084, %v903, -inf
        %1092 = vmax.xlane.f32.xlu0 %v1091
        %v1093 = vpop.xlane.xlu0 %1092
        %v1094 = vsel %vm1084, %v908, -inf
        %1095 = vmax.xlane.f32.xlu0 %v1094
        %v1096 = vpop.xlane.xlu0 %1095
        %v1097 = vsel %vm1084, %v913, -inf
        %1098 = vmax.xlane.f32.xlu0 %v1097
        %v1099 = vpop.xlane.xlu0 %1098
        %v1100 = vsel %vm1084, %v918, -inf
        %1101 = vmax.xlane.f32.xlu0 %v1100
        %v1102 = vpop.xlane.xlu0 %1101
        %v1103 = vsel %vm1084, %v923, -inf
        %1104 = vmax.xlane.f32.xlu0 %v1103
        %v1105 = vpop.xlane.xlu0 %1104
        %v1106 = vsel %vm1084, %v928, -inf
        %1107 = vmax.xlane.f32.xlu0 %v1106
        %v1108 = vpop.xlane.xlu0 %1107
        %v1109 = vsel %vm1084, %v1046, -inf
        %1110 = vmax.xlane.f32.xlu0 %v1109
        %v1111 = vpop.xlane.xlu0 %1110
        %v1112 = vsel %vm1084, %v1051, -inf
        %1113 = vmax.xlane.f32.xlu0 %v1112
        %v1114 = vpop.xlane.xlu0 %1113
        %v1115 = vsel %vm1084, %v1056, -inf
        %1116 = vmax.xlane.f32.xlu0 %v1115
        %v1117 = vpop.xlane.xlu0 %1116
        %v1118 = vsel %vm1084, %v1061, -inf
        %1119 = vmax.xlane.f32.xlu0 %v1118
        %v1120 = vpop.xlane.xlu0 %1119
        %v1121 = vsel %vm1084, %v1066, -inf
        %1122 = vmax.xlane.f32.xlu0 %v1121
        %v1123 = vpop.xlane.xlu0 %1122
        %v1124 = vsel %vm1084, %v1071, -inf
        %1125 = vmax.xlane.f32.xlu0 %v1124
        %v1126 = vpop.xlane.xlu0 %1125
        %v1127 = vsel %vm1084, %v1076, -inf
        %1128 = vmax.xlane.f32.xlu0 %v1127
        %v1129 = vpop.xlane.xlu0 %1128
        %v1130 = vsel %vm1084, %v1081, -inf
        %1131 = vmax.xlane.f32.xlu0 %v1130
        %v1132 = vpop.xlane.xlu0 %1131
        %v1133 = vsub.f32 %v893, %v1087
        %v1134 = vsub.f32 %v898, %v1090
        %v1135 = vsub.f32 %v903, %v1093
        %v1136 = vsub.f32 %v908, %v1096
        %v1137 = vsub.f32 %v913, %v1099
        %v1138 = vsub.f32 %v918, %v1102
        %v1139 = vsub.f32 %v923, %v1105
        %v1140 = vsub.f32 %v928, %v1108
        %v1141 = vsub.f32 %v1046, %v1111
        %v1142 = vsub.f32 %v1051, %v1114
        %v1143 = vsub.f32 %v1056, %v1117
        %v1144 = vsub.f32 %v1061, %v1120
        %v1145 = vsub.f32 %v1066, %v1123
        %v1146 = vsub.f32 %v1071, %v1126
        %v1147 = vsub.f32 %v1076, %v1129
        %v1148 = vsub.f32 %v1081, %v1132
        %v1149 = vmul.f32 %v1133, 1.442695
        %v1150 = vpow.pop %v1149
        %v1151 = vmul.f32 %v1134, 1.442695
        %v1152 = vpow.pop %v1151
        %v1153 = vmul.f32 %v1135, 1.442695
        %v1154 = vpow.pop %v1153
        %v1155 = vmul.f32 %v1136, 1.442695
        %v1156 = vpow.pop %v1155
        %v1157 = vmul.f32 %v1137, 1.442695
        %v1158 = vpow.pop %v1157
        %v1159 = vmul.f32 %v1138, 1.442695
        %v1160 = vpow.pop %v1159
        %v1161 = vmul.f32 %v1139, 1.442695
        %v1162 = vpow.pop %v1161
        %v1163 = vmul.f32 %v1140, 1.442695
        %v1164 = vpow.pop %v1163
        %v1165 = vmul.f32 %v1141, 1.442695
        %v1166 = vpow.pop %v1165
        %v1167 = vmul.f32 %v1142, 1.442695
        %v1168 = vpow.pop %v1167
        %v1169 = vmul.f32 %v1143, 1.442695
        %v1170 = vpow.pop %v1169
        %v1171 = vmul.f32 %v1144, 1.442695
        %v1172 = vpow.pop %v1171
        %v1173 = vmul.f32 %v1145, 1.442695
        %v1174 = vpow.pop %v1173
        %v1175 = vmul.f32 %v1146, 1.442695
        %v1176 = vpow.pop %v1175
        %v1177 = vmul.f32 %v1147, 1.442695
        %v1178 = vpow.pop %v1177
        %v1179 = vmul.f32 %v1148, 1.442695
        %v1180 = vpow.pop %v1179
        %v1181 = vsel %vm1084, %v1150, 0.0
        %1182 = vadd.xlane.f32.xlu0 %v1181
        %v1183 = vpop.xlane.xlu0 %1182
        %v1184 = vsel %vm1084, %v1152, 0.0
        %1185 = vadd.xlane.f32.xlu0 %v1184
        %v1186 = vpop.xlane.xlu0 %1185
        %v1187 = vsel %vm1084, %v1154, 0.0
        %1188 = vadd.xlane.f32.xlu0 %v1187
        %v1189 = vpop.xlane.xlu0 %1188
        %v1190 = vsel %vm1084, %v1156, 0.0
        %1191 = vadd.xlane.f32.xlu0 %v1190
        %v1192 = vpop.xlane.xlu0 %1191
        %v1193 = vsel %vm1084, %v1158, 0.0
        %1194 = vadd.xlane.f32.xlu0 %v1193
        %v1195 = vpop.xlane.xlu0 %1194
        %v1196 = vsel %vm1084, %v1160, 0.0
        %1197 = vadd.xlane.f32.xlu0 %v1196
        %v1198 = vpop.xlane.xlu0 %1197
        %v1199 = vsel %vm1084, %v1162, 0.0
        %1200 = vadd.xlane.f32.xlu0 %v1199
        %v1201 = vpop.xlane.xlu0 %1200
        %v1202 = vsel %vm1084, %v1164, 0.0
        %1203 = vadd.xlane.f32.xlu0 %v1202
        %v1204 = vpop.xlane.xlu0 %1203
        %v1205 = vsel %vm1084, %v1166, 0.0
        %1206 = vadd.xlane.f32.xlu0 %v1205
        %v1207 = vpop.xlane.xlu0 %1206
        %v1208 = vsel %vm1084, %v1168, 0.0
        %1209 = vadd.xlane.f32.xlu0 %v1208
        %v1210 = vpop.xlane.xlu0 %1209
        %v1211 = vsel %vm1084, %v1170, 0.0
        %1212 = vadd.xlane.f32.xlu0 %v1211
        %v1213 = vpop.xlane.xlu0 %1212
        %v1214 = vsel %vm1084, %v1172, 0.0
        %1215 = vadd.xlane.f32.xlu0 %v1214
        %v1216 = vpop.xlane.xlu0 %1215
        %v1217 = vsel %vm1084, %v1174, 0.0
        %1218 = vadd.xlane.f32.xlu0 %v1217
        %v1219 = vpop.xlane.xlu0 %1218
        %v1220 = vsel %vm1084, %v1176, 0.0
        %1221 = vadd.xlane.f32.xlu0 %v1220
        %v1222 = vpop.xlane.xlu0 %1221
        %v1223 = vsel %vm1084, %v1178, 0.0
        %1224 = vadd.xlane.f32.xlu0 %v1223
        %v1225 = vpop.xlane.xlu0 %1224
        %v1226 = vsel %vm1084, %v1180, 0.0
        %1227 = vadd.xlane.f32.xlu0 %v1226
        %v1228 = vpop.xlane.xlu0 %1227
        %v1229 = vrcp.pop %v1183
        %v1230 = vrcp.pop %v1186
        %v1231 = vrcp.pop %v1189
        %v1232 = vrcp.pop %v1192
        %v1233 = vrcp.pop %v1195
        %v1234 = vrcp.pop %v1198
        %v1235 = vrcp.pop %v1201
        %v1236 = vrcp.pop %v1204
        %v1237 = vrcp.pop %v1207
        %v1238 = vrcp.pop %v1210
        %v1239 = vrcp.pop %v1213
        %v1240 = vrcp.pop %v1216
        %v1241 = vrcp.pop %v1219
        %v1242 = vrcp.pop %v1222
        %v1243 = vrcp.pop %v1225
        %v1244 = vrcp.pop %v1228
        %v1246 = vsel %vm1084, %v1150, 0
        %v1249 = vsel %vm1084, %v1152, 0
        %v1252 = vsel %vm1084, %v1154, 0
        %v1255 = vsel %vm1084, %v1156, 0
        %v1258 = vsel %vm1084, %v1158, 0
        %v1261 = vsel %vm1084, %v1160, 0
        %v1264 = vsel %vm1084, %v1162, 0
        %v1267 = vsel %vm1084, %v1164, 0
        %1269 = vmatprep.subr.mxu0 0.0
        %1270 = vmatpush1.msra.mxu0 %v699
        %1271 = vmatprep.subr.mxu0 0.0
        %1272 = vmatpush1.msra.mxu0 %v704
        %1273 = vmatprep.subr.mxu0 0.0
        %1274 = vmatpush1.msra.mxu0 %v709
        %1275 = vmatprep.subr.mxu0 0.0
        %1276 = vmatpush1.msra.mxu0 %v714
        %1277 = vmatprep.subr.mxu0 0.0
        %1278 = vmatpush1.msra.mxu0 %v719
        %1279 = vmatprep.subr.mxu0 0.0
        %1280 = vmatpush1.msra.mxu0 %v724
        %1281 = vmatprep.subr.mxu0 0.0
        %1282 = vmatpush1.msra.mxu0 %v729
        %1283 = vmatprep.subr.mxu0 0.0
        %1284 = vmatpush1.msra.mxu0 %v734
        %1285 = vmatprep.subr.mxu0 0.0
        %1286 = vmatpush1.msra.mxu0 0.0
        %1287 = vmatprep.subr.mxu0 0.0
        %1288 = vmatpush1.msra.mxu0 0.0
        %1289 = vmatprep.subr.mxu0 0.0
        %1290 = vmatpush1.msra.mxu0 0.0
        %1291 = vmatprep.subr.mxu0 0.0
        %1292 = vmatpush1.msra.mxu0 0.0
        %1293 = vmatprep.subr.mxu0 0.0
        %1294 = vmatpush1.msra.mxu0 0.0
        %1295 = vmatprep.subr.mxu0 0.0
        %1296 = vmatpush1.msra.mxu0 0.0
        %1297 = vmatprep.subr.mxu0 0.0
        %1298 = vmatpush1.msra.mxu0 0.0
        %1299 = vmatprep.subr.mxu0 0.0
        %1300 = vmatpush1.msra.mxu0 0.0
        %1301 = vmatprep.subr.mxu0 0.0
        %1302 = vmatpush1.msra.mxu0 0.0
        %1303 = vmatprep.subr.mxu0 0.0
        %1304 = vmatpush1.msra.mxu0 0.0
        %1305 = vmatprep.subr.mxu0 0.0
        %1306 = vmatpush1.msra.mxu0 0.0
        %1307 = vmatprep.subr.mxu0 0.0
        %1308 = vmatpush1.msra.mxu0 0.0
        %1309 = vmatprep.subr.mxu0 0.0
        %1310 = vmatpush1.msra.mxu0 0.0
        %1311 = vmatprep.subr.mxu0 0.0
        %1312 = vmatpush1.msra.mxu0 0.0
        %1313 = vmatprep.subr.mxu0 0.0
        %1314 = vmatpush1.msra.mxu0 0.0
        %1315 = vmatprep.subr.mxu0 0.0
        %1316 = vmatpush1.msra.mxu0 0.0
        %1317 = vmatprep.subr.mxu0 0.0
        %1318 = vmatpush1.msra.mxu0 0.0
        %1319 = vmatprep.subr.mxu0 0.0
        %1320 = vmatpush1.msra.mxu0 0.0
        %1321 = vmatprep.subr.mxu0 0.0
        %1322 = vmatpush1.msra.mxu0 0.0
        %1323 = vmatprep.subr.mxu0 0.0
        %1324 = vmatpush1.msra.mxu0 0.0
        %1325 = vmatprep.subr.mxu0 0.0
        %1326 = vmatpush1.msra.mxu0 0.0
        %1327 = vmatprep.subr.mxu0 0.0
        %1328 = vmatpush1.msra.mxu0 0.0
        %1329 = vmatprep.subr.mxu0 0.0
        %1330 = vmatpush1.msra.mxu0 0.0
        %1331 = vmatprep.subr.mxu0 0.0
        %1332 = vmatpush1.msra.mxu0 0.0
        %1333 = vmatprep.mubr.f32.mxu0 0.0
        %1334 = vmatmul.mubr.f32.gmra.mrb[0].mxu0 %v1246
        %v1335 = vpop.f32.mrb[0].mxu0
        %v1336 = vadd.f32 0.0, %v1335
        %v1337 = vpop.f32.mrb[0].mxu0
        %1338 = vmatprep.mubr.f32.mxu0 0.0
        %1339 = vmatmul.mubr.f32.gmra.mrb[0].mxu0 %v1249
        %v1340 = vpop.f32.mrb[0].mxu0
        %v1341 = vadd.f32 0.0, %v1340
        %v1342 = vpop.f32.mrb[0].mxu0
        %1343 = vmatprep.mubr.f32.mxu0 0.0
        %1344 = vmatmul.mubr.f32.gmra.mrb[0].mxu0 %v1252
        %v1345 = vpop.f32.mrb[0].mxu0
        %v1346 = vadd.f32 0.0, %v1345
        %v1347 = vpop.f32.mrb[0].mxu0
        %1348 = vmatprep.mubr.f32.mxu0 0.0
        %1349 = vmatmul.mubr.f32.gmra.mrb[0].mxu0 %v1255
        %v1350 = vpop.f32.mrb[0].mxu0
        %v1351 = vadd.f32 0.0, %v1350
        %v1352 = vpop.f32.mrb[0].mxu0
        %1353 = vmatprep.mubr.f32.mxu0 0.0
        %1354 = vmatmul.mubr.f32.gmra.mrb[0].mxu0 %v1258
        %v1355 = vpop.f32.mrb[0].mxu0
        %v1356 = vadd.f32 0.0, %v1355
        %v1357 = vpop.f32.mrb[0].mxu0
        %1358 = vmatprep.mubr.f32.mxu0 0.0
        %1359 = vmatmul.mubr.f32.gmra.mrb[0].mxu0 %v1261
        %v1360 = vpop.f32.mrb[0].mxu0
        %v1361 = vadd.f32 0.0, %v1360
        %v1362 = vpop.f32.mrb[0].mxu0
        %1363 = vmatprep.mubr.f32.mxu0 0.0
        %1364 = vmatmul.mubr.f32.gmra.mrb[0].mxu0 %v1264
        %v1365 = vpop.f32.mrb[0].mxu0
        %v1366 = vadd.f32 0.0, %v1365
        %v1367 = vpop.f32.mrb[0].mxu0
        %1368 = vmatprep.mubr.f32.mxu0 0.0
        %1369 = vmatmul.mubr.f32.gmra.mrb[0].mxu0 %v1267
        %v1370 = vpop.f32.mrb[0].mxu0
        %v1371 = vadd.f32 0.0, %v1370
        %v1372 = vpop.f32.mrb[0].mxu0
        %1373 = vdwg.mxu0
        %v1375 = vsel %vm1084, %v1166, 0
        %v1378 = vsel %vm1084, %v1168, 0
        %v1381 = vsel %vm1084, %v1170, 0
        %v1384 = vsel %vm1084, %v1172, 0
        %v1387 = vsel %vm1084, %v1174, 0
        %v1390 = vsel %vm1084, %v1176, 0
        %v1393 = vsel %vm1084, %v1178, 0
        %v1396 = vsel %vm1084, %v1180, 0
        %1398 = vmatprep.subr.mxu0 0.0
        %1399 = vmatpush1.msra.mxu0 %v739
        %1400 = vmatprep.subr.mxu0 0.0
        %1401 = vmatpush1.msra.mxu0 %v744
        %1402 = vmatprep.subr.mxu0 0.0
        %1403 = vmatpush1.msra.mxu0 %v749
        %1404 = vmatprep.subr.mxu0 0.0
        %1405 = vmatpush1.msra.mxu0 %v754
        %1406 = vmatprep.subr.mxu0 0.0
        %1407 = vmatpush1.msra.mxu0 %v759
        %1408 = vmatprep.subr.mxu0 0.0
        %1409 = vmatpush1.msra.mxu0 %v764
        %1410 = vmatprep.subr.mxu0 0.0
        %1411 = vmatpush1.msra.mxu0 %v769
        %1412 = vmatprep.subr.mxu0 0.0
        %1413 = vmatpush1.msra.mxu0 %v774
        %1414 = vmatprep.subr.mxu0 0.0
        %1415 = vmatpush1.msra.mxu0 0.0
        %1416 = vmatprep.subr.mxu0 0.0
        %1417 = vmatpush1.msra.mxu0 0.0
        %1418 = vmatprep.subr.mxu0 0.0
        %1419 = vmatpush1.msra.mxu0 0.0
        %1420 = vmatprep.subr.mxu0 0.0
        %1421 = vmatpush1.msra.mxu0 0.0
        %1422 = vmatprep.subr.mxu0 0.0
        %1423 = vmatpush1.msra.mxu0 0.0
        %1424 = vmatprep.subr.mxu0 0.0
        %1425 = vmatpush1.msra.mxu0 0.0
        %1426 = vmatprep.subr.mxu0 0.0
        %1427 = vmatpush1.msra.mxu0 0.0
        %1428 = vmatprep.subr.mxu0 0.0
        %1429 = vmatpush1.msra.mxu0 0.0
        %1430 = vmatprep.subr.mxu0 0.0
        %1431 = vmatpush1.msra.mxu0 0.0
        %1432 = vmatprep.subr.mxu0 0.0
        %1433 = vmatpush1.msra.mxu0 0.0
        %1434 = vmatprep.subr.mxu0 0.0
        %1435 = vmatpush1.msra.mxu0 0.0
        %1436 = vmatprep.subr.mxu0 0.0
        %1437 = vmatpush1.msra.mxu0 0.0
        %1438 = vmatprep.subr.mxu0 0.0
        %1439 = vmatpush1.msra.mxu0 0.0
        %1440 = vmatprep.subr.mxu0 0.0
        %1441 = vmatpush1.msra.mxu0 0.0
        %1442 = vmatprep.subr.mxu0 0.0
        %1443 = vmatpush1.msra.mxu0 0.0
        %1444 = vmatprep.subr.mxu0 0.0
        %1445 = vmatpush1.msra.mxu0 0.0
        %1446 = vmatprep.subr.mxu0 0.0
        %1447 = vmatpush1.msra.mxu0 0.0
        %1448 = vmatprep.subr.mxu0 0.0
        %1449 = vmatpush1.msra.mxu0 0.0
        %1450 = vmatprep.subr.mxu0 0.0
        %1451 = vmatpush1.msra.mxu0 0.0
        %1452 = vmatprep.subr.mxu0 0.0
        %1453 = vmatpush1.msra.mxu0 0.0
        %1454 = vmatprep.subr.mxu0 0.0
        %1455 = vmatpush1.msra.mxu0 0.0
        %1456 = vmatprep.subr.mxu0 0.0
        %1457 = vmatpush1.msra.mxu0 0.0
        %1458 = vmatprep.subr.mxu0 0.0
        %1459 = vmatpush1.msra.mxu0 0.0
        %1460 = vmatprep.subr.mxu0 0.0
        %1461 = vmatpush1.msra.mxu0 0.0
        %1462 = vmatprep.mubr.f32.mxu0 0.0
        %1463 = vmatmul.mubr.f32.gmra.mrb[0].mxu0 %v1375
        %v1464 = vpop.f32.mrb[0].mxu0
        %v1465 = vadd.f32 0.0, %v1464
        %v1466 = vpop.f32.mrb[0].mxu0
        %1467 = vmatprep.mubr.f32.mxu0 0.0
        %1468 = vmatmul.mubr.f32.gmra.mrb[0].mxu0 %v1378
        %v1469 = vpop.f32.mrb[0].mxu0
        %v1470 = vadd.f32 0.0, %v1469
        %v1471 = vpop.f32.mrb[0].mxu0
        %1472 = vmatprep.mubr.f32.mxu0 0.0
        %1473 = vmatmul.mubr.f32.gmra.mrb[0].mxu0 %v1381
        %v1474 = vpop.f32.mrb[0].mxu0
        %v1475 = vadd.f32 0.0, %v1474
        %v1476 = vpop.f32.mrb[0].mxu0
        %1477 = vmatprep.mubr.f32.mxu0 0.0
        %1478 = vmatmul.mubr.f32.gmra.mrb[0].mxu0 %v1384
        %v1479 = vpop.f32.mrb[0].mxu0
        %v1480 = vadd.f32 0.0, %v1479
        %v1481 = vpop.f32.mrb[0].mxu0
        %1482 = vmatprep.mubr.f32.mxu0 0.0
        %1483 = vmatmul.mubr.f32.gmra.mrb[0].mxu0 %v1387
        %v1484 = vpop.f32.mrb[0].mxu0
        %v1485 = vadd.f32 0.0, %v1484
        %v1486 = vpop.f32.mrb[0].mxu0
        %1487 = vmatprep.mubr.f32.mxu0 0.0
        %1488 = vmatmul.mubr.f32.gmra.mrb[0].mxu0 %v1390
        %v1489 = vpop.f32.mrb[0].mxu0
        %v1490 = vadd.f32 0.0, %v1489
        %v1491 = vpop.f32.mrb[0].mxu0
        %1492 = vmatprep.mubr.f32.mxu0 0.0
        %1493 = vmatmul.mubr.f32.gmra.mrb[0].mxu0 %v1393
        %v1494 = vpop.f32.mrb[0].mxu0
        %v1495 = vadd.f32 0.0, %v1494
        %v1496 = vpop.f32.mrb[0].mxu0
        %1497 = vmatprep.mubr.f32.mxu0 0.0
        %1498 = vmatmul.mubr.f32.gmra.mrb[0].mxu0 %v1396
        %v1499 = vpop.f32.mrb[0].mxu0
        %v1500 = vadd.f32 0.0, %v1499
        %v1501 = vpop.f32.mrb[0].mxu0
        %1502 = vdwg.mxu0
        %v1503 = vmul.f32 %v1336, %v1229
        %v1504 = vmul.f32 %v1341, %v1230
        %v1505 = vmul.f32 %v1346, %v1231
        %v1506 = vmul.f32 %v1351, %v1232
        %v1507 = vmul.f32 %v1356, %v1233
        %v1508 = vmul.f32 %v1361, %v1234
        %v1509 = vmul.f32 %v1366, %v1235
        %v1510 = vmul.f32 %v1371, %v1236
        %v1511 = vmul.f32 %v1465, %v1237
        %v1512 = vmul.f32 %v1470, %v1238
        %v1513 = vmul.f32 %v1475, %v1239
        %v1514 = vmul.f32 %v1480, %v1240
        %v1515 = vmul.f32 %v1485, %v1241
        %v1516 = vmul.f32 %v1490, %v1242
        %v1517 = vmul.f32 %v1495, %v1243
        %v1518 = vmul.f32 %v1500, %v1244
        %1519 = vrot.lane.b32.xlu0 %v377, 96
        %v1520 = vpop.permute.xlu0 %1519
        %1521 = vrot.lane.b32.xlu0 %v382, 96
        %v1522 = vpop.permute.xlu0 %1521
        %1523 = vrot.lane.b32.xlu0 %v387, 96
        %v1524 = vpop.permute.xlu0 %1523
        %1525 = vrot.lane.b32.xlu0 %v392, 96
        %v1526 = vpop.permute.xlu0 %1525
        %1527 = vrot.lane.b32.xlu0 %v397, 96
        %v1528 = vpop.permute.xlu0 %1527
        %1529 = vrot.lane.b32.xlu0 %v402, 96
        %v1530 = vpop.permute.xlu0 %1529
        %1531 = vrot.lane.b32.xlu0 %v407, 96
        %v1532 = vpop.permute.xlu0 %1531
        %1533 = vrot.lane.b32.xlu0 %v412, 96
        %v1534 = vpop.permute.xlu0 %1533
        %1535 = vrot.lane.b32.xlu0 %v538, 96
        %v1536 = vpop.permute.xlu0 %1535
        %1537 = vrot.lane.b32.xlu0 %v543, 96
        %v1538 = vpop.permute.xlu0 %1537
        %1539 = vrot.lane.b32.xlu0 %v548, 96
        %v1540 = vpop.permute.xlu0 %1539
        %1541 = vrot.lane.b32.xlu0 %v553, 96
        %v1542 = vpop.permute.xlu0 %1541
        %1543 = vrot.lane.b32.xlu0 %v558, 96
        %v1544 = vpop.permute.xlu0 %1543
        %1545 = vrot.lane.b32.xlu0 %v563, 96
        %v1546 = vpop.permute.xlu0 %1545
        %1547 = vrot.lane.b32.xlu0 %v568, 96
        %v1548 = vpop.permute.xlu0 %1547
        %1549 = vrot.lane.b32.xlu0 %v573, 96
        %v1550 = vpop.permute.xlu0 %1549
        %v1551 = vsel %vm777, %v1520, 0
        %v1553 = vsel %vm777, %v1522, 0
        %v1555 = vsel %vm777, %v1524, 0
        %v1557 = vsel %vm777, %v1526, 0
        %v1559 = vsel %vm777, %v1528, 0
        %v1561 = vsel %vm777, %v1530, 0
        %v1563 = vsel %vm777, %v1532, 0
        %v1565 = vsel %vm777, %v1534, 0
        %v1567 = vsel %vm777, %v1536, 0
        %v1569 = vsel %vm777, %v1538, 0
        %v1571 = vsel %vm777, %v1540, 0
        %v1573 = vsel %vm777, %v1542, 0
        %v1575 = vsel %vm777, %v1544, 0
        %v1577 = vsel %vm777, %v1546, 0
        %v1579 = vsel %vm777, %v1548, 0
        %v1581 = vsel %vm777, %v1550, 0
        %1583 = vmatprep.subr.mxu0 0.0
        %1584 = vmatpush1.xpose.msra.mxu0 %v1567
        %1585 = vmatprep.subr.mxu0 0.0
        %1586 = vmatpush1.xpose.msra.mxu0 %v1569
        %1587 = vmatprep.subr.mxu0 0.0
        %1588 = vmatpush1.xpose.msra.mxu0 %v1571
        %1589 = vmatprep.subr.mxu0 0.0
        %1590 = vmatpush1.xpose.msra.mxu0 %v1573
        %1591 = vmatprep.subr.mxu0 0.0
        %1592 = vmatpush1.xpose.msra.mxu0 %v1575
        %1593 = vmatprep.subr.mxu0 0.0
        %1594 = vmatpush1.xpose.msra.mxu0 %v1577
        %1595 = vmatprep.subr.mxu0 0.0
        %1596 = vmatpush1.xpose.msra.mxu0 %v1579
        %1597 = vmatprep.subr.mxu0 0.0
        %1598 = vmatpush1.xpose.msra.mxu0 %v1581
        %1599 = vmatprep.subr.mxu0 0.0
        %1600 = vmatpush1.xpose.msra.mxu0 0.0
        %1601 = vmatprep.subr.mxu0 0.0
        %1602 = vmatpush1.xpose.msra.mxu0 0.0
        %1603 = vmatprep.subr.mxu0 0.0
        %1604 = vmatpush1.xpose.msra.mxu0 0.0
        %1605 = vmatprep.subr.mxu0 0.0
        %1606 = vmatpush1.xpose.msra.mxu0 0.0
        %1607 = vmatprep.subr.mxu0 0.0
        %1608 = vmatpush1.xpose.msra.mxu0 0.0
        %1609 = vmatprep.subr.mxu0 0.0
        %1610 = vmatpush1.xpose.msra.mxu0 0.0
        %1611 = vmatprep.subr.mxu0 0.0
        %1612 = vmatpush1.xpose.msra.mxu0 0.0
        %1613 = vmatprep.subr.mxu0 0.0
        %1614 = vmatpush1.xpose.msra.mxu0 0.0
        %1615 = vmatprep.subr.mxu0 0.0
        %1616 = vmatpush1.xpose.msra.mxu0 0.0
        %1617 = vmatprep.subr.mxu0 0.0
        %1618 = vmatpush1.xpose.msra.mxu0 0.0
        %1619 = vmatprep.subr.mxu0 0.0
        %1620 = vmatpush1.xpose.msra.mxu0 0.0
        %1621 = vmatprep.subr.mxu0 0.0
        %1622 = vmatpush1.xpose.msra.mxu0 0.0
        %1623 = vmatprep.subr.mxu0 0.0
        %1624 = vmatpush1.xpose.msra.mxu0 0.0
        %1625 = vmatprep.subr.mxu0 0.0
        %1626 = vmatpush1.xpose.msra.mxu0 0.0
        %1627 = vmatprep.subr.mxu0 0.0
        %1628 = vmatpush1.xpose.msra.mxu0 0.0
        %1629 = vmatprep.subr.mxu0 0.0
        %1630 = vmatpush1.xpose.msra.mxu0 0.0
        %1631 = vmatprep.subr.mxu0 0.0
        %1632 = vmatpush1.xpose.msra.mxu0 0.0
        %1633 = vmatprep.subr.mxu0 0.0
        %1634 = vmatpush1.xpose.msra.mxu0 0.0
        %1635 = vmatprep.subr.mxu0 0.0
        %1636 = vmatpush1.xpose.msra.mxu0 0.0
        %1637 = vmatprep.subr.mxu0 0.0
        %1638 = vmatpush1.xpose.msra.mxu0 0.0
        %1639 = vmatprep.subr.mxu0 0.0
        %1640 = vmatpush1.xpose.msra.mxu0 0.0
        %1641 = vmatprep.subr.mxu0 0.0
        %1642 = vmatpush1.xpose.msra.mxu0 0.0
        %1643 = vmatprep.subr.mxu0 0.0
        %1644 = vmatpush1.xpose.msra.mxu0 0.0
        %1645 = vmatprep.subr.mxu0 0.0
        %1646 = vmatpush1.xpose.msra.mxu0 0.0
        %1647 = vmatprep.mubr.f32.mxu0 0.0
        %1648 = vmatmul.mubr.f32.gmra.mrb[0].mxu0 %v1551
        %v1649 = vpop.f32.mrb[0].mxu0
        %v1650 = vadd.f32 0.0, %v1649
        %v1651 = vpop.f32.mrb[0].mxu0
        %1652 = vmatprep.mubr.f32.mxu0 0.0
        %1653 = vmatmul.mubr.f32.gmra.mrb[0].mxu0 %v1553
        %v1654 = vpop.f32.mrb[0].mxu0
        %v1655 = vadd.f32 0.0, %v1654
        %v1656 = vpop.f32.mrb[0].mxu0
        %1657 = vmatprep.mubr.f32.mxu0 0.0
        %1658 = vmatmul.mubr.f32.gmra.mrb[0].mxu0 %v1555
        %v1659 = vpop.f32.mrb[0].mxu0
        %v1660 = vadd.f32 0.0, %v1659
        %v1661 = vpop.f32.mrb[0].mxu0
        %1662 = vmatprep.mubr.f32.mxu0 0.0
        %1663 = vmatmul.mubr.f32.gmra.mrb[0].mxu0 %v1557
        %v1664 = vpop.f32.mrb[0].mxu0
        %v1665 = vadd.f32 0.0, %v1664
        %v1666 = vpop.f32.mrb[0].mxu0
        %1667 = vmatprep.mubr.f32.mxu0 0.0
        %1668 = vmatmul.mubr.f32.gmra.mrb[0].mxu0 %v1559
        %v1669 = vpop.f32.mrb[0].mxu0
        %v1670 = vadd.f32 0.0, %v1669
        %v1671 = vpop.f32.mrb[0].mxu0
        %1672 = vmatprep.mubr.f32.mxu0 0.0
        %1673 = vmatmul.mubr.f32.gmra.mrb[0].mxu0 %v1561
        %v1674 = vpop.f32.mrb[0].mxu0
        %v1675 = vadd.f32 0.0, %v1674
        %v1676 = vpop.f32.mrb[0].mxu0
        %1677 = vmatprep.mubr.f32.mxu0 0.0
        %1678 = vmatmul.mubr.f32.gmra.mrb[0].mxu0 %v1563
        %v1679 = vpop.f32.mrb[0].mxu0
        %v1680 = vadd.f32 0.0, %v1679
        %v1681 = vpop.f32.mrb[0].mxu0
        %1682 = vmatprep.mubr.f32.mxu0 0.0
        %1683 = vmatmul.mubr.f32.gmra.mrb[0].mxu0 %v1565
        %v1684 = vpop.f32.mrb[0].mxu0
        %v1685 = vadd.f32 0.0, %v1684
        %v1686 = vpop.f32.mrb[0].mxu0
        %1687 = vdwg.mxu0
        %1688 = vrot.lane.b32.xlu0 %v417, 96
        %v1689 = vpop.permute.xlu0 %1688
        %1690 = vrot.lane.b32.xlu0 %v422, 96
        %v1691 = vpop.permute.xlu0 %1690
        %1692 = vrot.lane.b32.xlu0 %v427, 96
        %v1693 = vpop.permute.xlu0 %1692
        %1694 = vrot.lane.b32.xlu0 %v432, 96
        %v1695 = vpop.permute.xlu0 %1694
        %1696 = vrot.lane.b32.xlu0 %v437, 96
        %v1697 = vpop.permute.xlu0 %1696
        %1698 = vrot.lane.b32.xlu0 %v442, 96
        %v1699 = vpop.permute.xlu0 %1698
        %1700 = vrot.lane.b32.xlu0 %v447, 96
        %v1701 = vpop.permute.xlu0 %1700
        %1702 = vrot.lane.b32.xlu0 %v452, 96
        %v1703 = vpop.permute.xlu0 %1702
        %1704 = vrot.lane.b32.xlu0 %v578, 96
        %v1705 = vpop.permute.xlu0 %1704
        %1706 = vrot.lane.b32.xlu0 %v583, 96
        %v1707 = vpop.permute.xlu0 %1706
        %1708 = vrot.lane.b32.xlu0 %v588, 96
        %v1709 = vpop.permute.xlu0 %1708
        %1710 = vrot.lane.b32.xlu0 %v593, 96
        %v1711 = vpop.permute.xlu0 %1710
        %1712 = vrot.lane.b32.xlu0 %v598, 96
        %v1713 = vpop.permute.xlu0 %1712
        %1714 = vrot.lane.b32.xlu0 %v603, 96
        %v1715 = vpop.permute.xlu0 %1714
        %1716 = vrot.lane.b32.xlu0 %v608, 96
        %v1717 = vpop.permute.xlu0 %1716
        %1718 = vrot.lane.b32.xlu0 %v613, 96
        %v1719 = vpop.permute.xlu0 %1718
        %v1720 = vsel %vm777, %v1689, 0
        %v1722 = vsel %vm777, %v1691, 0
        %v1724 = vsel %vm777, %v1693, 0
        %v1726 = vsel %vm777, %v1695, 0
        %v1728 = vsel %vm777, %v1697, 0
        %v1730 = vsel %vm777, %v1699, 0
        %v1732 = vsel %vm777, %v1701, 0
        %v1734 = vsel %vm777, %v1703, 0
        %v1736 = vsel %vm777, %v1705, 0
        %v1738 = vsel %vm777, %v1707, 0
        %v1740 = vsel %vm777, %v1709, 0
        %v1742 = vsel %vm777, %v1711, 0
        %v1744 = vsel %vm777, %v1713, 0
        %v1746 = vsel %vm777, %v1715, 0
        %v1748 = vsel %vm777, %v1717, 0
        %v1750 = vsel %vm777, %v1719, 0
        %1752 = vmatprep.subr.mxu0 0.0
        %1753 = vmatpush1.xpose.msra.mxu0 %v1736
        %1754 = vmatprep.subr.mxu0 0.0
        %1755 = vmatpush1.xpose.msra.mxu0 %v1738
        %1756 = vmatprep.subr.mxu0 0.0
        %1757 = vmatpush1.xpose.msra.mxu0 %v1740
        %1758 = vmatprep.subr.mxu0 0.0
        %1759 = vmatpush1.xpose.msra.mxu0 %v1742
        %1760 = vmatprep.subr.mxu0 0.0
        %1761 = vmatpush1.xpose.msra.mxu0 %v1744
        %1762 = vmatprep.subr.mxu0 0.0
        %1763 = vmatpush1.xpose.msra.mxu0 %v1746
        %1764 = vmatprep.subr.mxu0 0.0
        %1765 = vmatpush1.xpose.msra.mxu0 %v1748
        %1766 = vmatprep.subr.mxu0 0.0
        %1767 = vmatpush1.xpose.msra.mxu0 %v1750
        %1768 = vmatprep.subr.mxu0 0.0
        %1769 = vmatpush1.xpose.msra.mxu0 0.0
        %1770 = vmatprep.subr.mxu0 0.0
        %1771 = vmatpush1.xpose.msra.mxu0 0.0
        %1772 = vmatprep.subr.mxu0 0.0
        %1773 = vmatpush1.xpose.msra.mxu0 0.0
        %1774 = vmatprep.subr.mxu0 0.0
        %1775 = vmatpush1.xpose.msra.mxu0 0.0
        %1776 = vmatprep.subr.mxu0 0.0
        %1777 = vmatpush1.xpose.msra.mxu0 0.0
        %1778 = vmatprep.subr.mxu0 0.0
        %1779 = vmatpush1.xpose.msra.mxu0 0.0
        %1780 = vmatprep.subr.mxu0 0.0
        %1781 = vmatpush1.xpose.msra.mxu0 0.0
        %1782 = vmatprep.subr.mxu0 0.0
        %1783 = vmatpush1.xpose.msra.mxu0 0.0
        %1784 = vmatprep.subr.mxu0 0.0
        %1785 = vmatpush1.xpose.msra.mxu0 0.0
        %1786 = vmatprep.subr.mxu0 0.0
        %1787 = vmatpush1.xpose.msra.mxu0 0.0
        %1788 = vmatprep.subr.mxu0 0.0
        %1789 = vmatpush1.xpose.msra.mxu0 0.0
        %1790 = vmatprep.subr.mxu0 0.0
        %1791 = vmatpush1.xpose.msra.mxu0 0.0
        %1792 = vmatprep.subr.mxu0 0.0
        %1793 = vmatpush1.xpose.msra.mxu0 0.0
        %1794 = vmatprep.subr.mxu0 0.0
        %1795 = vmatpush1.xpose.msra.mxu0 0.0
        %1796 = vmatprep.subr.mxu0 0.0
        %1797 = vmatpush1.xpose.msra.mxu0 0.0
        %1798 = vmatprep.subr.mxu0 0.0
        %1799 = vmatpush1.xpose.msra.mxu0 0.0
        %1800 = vmatprep.subr.mxu0 0.0
        %1801 = vmatpush1.xpose.msra.mxu0 0.0
        %1802 = vmatprep.subr.mxu0 0.0
        %1803 = vmatpush1.xpose.msra.mxu0 0.0
        %1804 = vmatprep.subr.mxu0 0.0
        %1805 = vmatpush1.xpose.msra.mxu0 0.0
        %1806 = vmatprep.subr.mxu0 0.0
        %1807 = vmatpush1.xpose.msra.mxu0 0.0
        %1808 = vmatprep.subr.mxu0 0.0
        %1809 = vmatpush1.xpose.msra.mxu0 0.0
        %1810 = vmatprep.subr.mxu0 0.0
        %1811 = vmatpush1.xpose.msra.mxu0 0.0
        %1812 = vmatprep.subr.mxu0 0.0
        %1813 = vmatpush1.xpose.msra.mxu0 0.0
        %1814 = vmatprep.subr.mxu0 0.0
        %1815 = vmatpush1.xpose.msra.mxu0 0.0
        %1816 = vmatprep.mubr.f32.mxu0 0.0
        %1817 = vmatmul.mubr.f32.gmra.mrb[0].mxu0 %v1720
        %v1818 = vpop.f32.mrb[0].mxu0
        %v1819 = vadd.f32 0.0, %v1818
        %v1820 = vpop.f32.mrb[0].mxu0
        %1821 = vmatprep.mubr.f32.mxu0 0.0
        %1822 = vmatmul.mubr.f32.gmra.mrb[0].mxu0 %v1722
        %v1823 = vpop.f32.mrb[0].mxu0
        %v1824 = vadd.f32 0.0, %v1823
        %v1825 = vpop.f32.mrb[0].mxu0
        %1826 = vmatprep.mubr.f32.mxu0 0.0
        %1827 = vmatmul.mubr.f32.gmra.mrb[0].mxu0 %v1724
        %v1828 = vpop.f32.mrb[0].mxu0
        %v1829 = vadd.f32 0.0, %v1828
        %v1830 = vpop.f32.mrb[0].mxu0
        %1831 = vmatprep.mubr.f32.mxu0 0.0
        %1832 = vmatmul.mubr.f32.gmra.mrb[0].mxu0 %v1726
        %v1833 = vpop.f32.mrb[0].mxu0
        %v1834 = vadd.f32 0.0, %v1833
        %v1835 = vpop.f32.mrb[0].mxu0
        %1836 = vmatprep.mubr.f32.mxu0 0.0
        %1837 = vmatmul.mubr.f32.gmra.mrb[0].mxu0 %v1728
        %v1838 = vpop.f32.mrb[0].mxu0
        %v1839 = vadd.f32 0.0, %v1838
        %v1840 = vpop.f32.mrb[0].mxu0
        %1841 = vmatprep.mubr.f32.mxu0 0.0
        %1842 = vmatmul.mubr.f32.gmra.mrb[0].mxu0 %v1730
        %v1843 = vpop.f32.mrb[0].mxu0
        %v1844 = vadd.f32 0.0, %v1843
        %v1845 = vpop.f32.mrb[0].mxu0
        %1846 = vmatprep.mubr.f32.mxu0 0.0
        %1847 = vmatmul.mubr.f32.gmra.mrb[0].mxu0 %v1732
        %v1848 = vpop.f32.mrb[0].mxu0
        %v1849 = vadd.f32 0.0, %v1848
        %v1850 = vpop.f32.mrb[0].mxu0
        %1851 = vmatprep.mubr.f32.mxu0 0.0
        %1852 = vmatmul.mubr.f32.gmra.mrb[0].mxu0 %v1734
        %v1853 = vpop.f32.mrb[0].mxu0
        %v1854 = vadd.f32 0.0, %v1853
        %v1855 = vpop.f32.mrb[0].mxu0
        %1856 = vdwg.mxu0
        %v1857 = vsel %vm1084, %v1650, -inf
        %1858 = vmax.xlane.f32.xlu0 %v1857
        %v1859 = vpop.xlane.xlu0 %1858
        %v1860 = vsel %vm1084, %v1655, -inf
        %1861 = vmax.xlane.f32.xlu0 %v1860
        %v1862 = vpop.xlane.xlu0 %1861
        %v1863 = vsel %vm1084, %v1660, -inf
        %1864 = vmax.xlane.f32.xlu0 %v1863
        %v1865 = vpop.xlane.xlu0 %1864
        %v1866 = vsel %vm1084, %v1665, -inf
        %1867 = vmax.xlane.f32.xlu0 %v1866
        %v1868 = vpop.xlane.xlu0 %1867
        %v1869 = vsel %vm1084, %v1670, -inf
        %1870 = vmax.xlane.f32.xlu0 %v1869
        %v1871 = vpop.xlane.xlu0 %1870
        %v1872 = vsel %vm1084, %v1675, -inf
        %1873 = vmax.xlane.f32.xlu0 %v1872
        %v1874 = vpop.xlane.xlu0 %1873
        %v1875 = vsel %vm1084, %v1680, -inf
        %1876 = vmax.xlane.f32.xlu0 %v1875
        %v1877 = vpop.xlane.xlu0 %1876
        %v1878 = vsel %vm1084, %v1685, -inf
        %1879 = vmax.xlane.f32.xlu0 %v1878
        %v1880 = vpop.xlane.xlu0 %1879
        %v1881 = vsel %vm1084, %v1819, -inf
        %1882 = vmax.xlane.f32.xlu0 %v1881
        %v1883 = vpop.xlane.xlu0 %1882
        %v1884 = vsel %vm1084, %v1824, -inf
        %1885 = vmax.xlane.f32.xlu0 %v1884
        %v1886 = vpop.xlane.xlu0 %1885
        %v1887 = vsel %vm1084, %v1829, -inf
        %1888 = vmax.xlane.f32.xlu0 %v1887
        %v1889 = vpop.xlane.xlu0 %1888
        %v1890 = vsel %vm1084, %v1834, -inf
        %1891 = vmax.xlane.f32.xlu0 %v1890
        %v1892 = vpop.xlane.xlu0 %1891
        %v1893 = vsel %vm1084, %v1839, -inf
        %1894 = vmax.xlane.f32.xlu0 %v1893
        %v1895 = vpop.xlane.xlu0 %1894
        %v1896 = vsel %vm1084, %v1844, -inf
        %1897 = vmax.xlane.f32.xlu0 %v1896
        %v1898 = vpop.xlane.xlu0 %1897
        %v1899 = vsel %vm1084, %v1849, -inf
        %1900 = vmax.xlane.f32.xlu0 %v1899
        %v1901 = vpop.xlane.xlu0 %1900
        %v1902 = vsel %vm1084, %v1854, -inf
        %1903 = vmax.xlane.f32.xlu0 %v1902
        %v1904 = vpop.xlane.xlu0 %1903
        %v1905 = vsub.f32 %v1650, %v1859
        %v1906 = vsub.f32 %v1655, %v1862
        %v1907 = vsub.f32 %v1660, %v1865
        %v1908 = vsub.f32 %v1665, %v1868
        %v1909 = vsub.f32 %v1670, %v1871
        %v1910 = vsub.f32 %v1675, %v1874
        %v1911 = vsub.f32 %v1680, %v1877
        %v1912 = vsub.f32 %v1685, %v1880
        %v1913 = vsub.f32 %v1819, %v1883
        %v1914 = vsub.f32 %v1824, %v1886
        %v1915 = vsub.f32 %v1829, %v1889
        %v1916 = vsub.f32 %v1834, %v1892
        %v1917 = vsub.f32 %v1839, %v1895
        %v1918 = vsub.f32 %v1844, %v1898
        %v1919 = vsub.f32 %v1849, %v1901
        %v1920 = vsub.f32 %v1854, %v1904
        %v1921 = vmul.f32 %v1905, 1.442695
        %v1922 = vpow.pop %v1921
        %v1923 = vmul.f32 %v1906, 1.442695
        %v1924 = vpow.pop %v1923
        %v1925 = vmul.f32 %v1907, 1.442695
        %v1926 = vpow.pop %v1925
        %v1927 = vmul.f32 %v1908, 1.442695
        %v1928 = vpow.pop %v1927
        %v1929 = vmul.f32 %v1909, 1.442695
        %v1930 = vpow.pop %v1929
        %v1931 = vmul.f32 %v1910, 1.442695
        %v1932 = vpow.pop %v1931
        %v1933 = vmul.f32 %v1911, 1.442695
        %v1934 = vpow.pop %v1933
        %v1935 = vmul.f32 %v1912, 1.442695
        %v1936 = vpow.pop %v1935
        %v1937 = vmul.f32 %v1913, 1.442695
        %v1938 = vpow.pop %v1937
        %v1939 = vmul.f32 %v1914, 1.442695
        %v1940 = vpow.pop %v1939
        %v1941 = vmul.f32 %v1915, 1.442695
        %v1942 = vpow.pop %v1941
        %v1943 = vmul.f32 %v1916, 1.442695
        %v1944 = vpow.pop %v1943
        %v1945 = vmul.f32 %v1917, 1.442695
        %v1946 = vpow.pop %v1945
        %v1947 = vmul.f32 %v1918, 1.442695
        %v1948 = vpow.pop %v1947
        %v1949 = vmul.f32 %v1919, 1.442695
        %v1950 = vpow.pop %v1949
        %v1951 = vmul.f32 %v1920, 1.442695
        %v1952 = vpow.pop %v1951
        %v1953 = vsel %vm1084, %v1922, 0.0
        %1954 = vadd.xlane.f32.xlu0 %v1953
        %v1955 = vpop.xlane.xlu0 %1954
        %v1956 = vsel %vm1084, %v1924, 0.0
        %1957 = vadd.xlane.f32.xlu0 %v1956
        %v1958 = vpop.xlane.xlu0 %1957
        %v1959 = vsel %vm1084, %v1926, 0.0
        %1960 = vadd.xlane.f32.xlu0 %v1959
        %v1961 = vpop.xlane.xlu0 %1960
        %v1962 = vsel %vm1084, %v1928, 0.0
        %1963 = vadd.xlane.f32.xlu0 %v1962
        %v1964 = vpop.xlane.xlu0 %1963
        %v1965 = vsel %vm1084, %v1930, 0.0
        %1966 = vadd.xlane.f32.xlu0 %v1965
        %v1967 = vpop.xlane.xlu0 %1966
        %v1968 = vsel %vm1084, %v1932, 0.0
        %1969 = vadd.xlane.f32.xlu0 %v1968
        %v1970 = vpop.xlane.xlu0 %1969
        %v1971 = vsel %vm1084, %v1934, 0.0
        %1972 = vadd.xlane.f32.xlu0 %v1971
        %v1973 = vpop.xlane.xlu0 %1972
        %v1974 = vsel %vm1084, %v1936, 0.0
        %1975 = vadd.xlane.f32.xlu0 %v1974
        %v1976 = vpop.xlane.xlu0 %1975
        %v1977 = vsel %vm1084, %v1938, 0.0
        %1978 = vadd.xlane.f32.xlu0 %v1977
        %v1979 = vpop.xlane.xlu0 %1978
        %v1980 = vsel %vm1084, %v1940, 0.0
        %1981 = vadd.xlane.f32.xlu0 %v1980
        %v1982 = vpop.xlane.xlu0 %1981
        %v1983 = vsel %vm1084, %v1942, 0.0
        %1984 = vadd.xlane.f32.xlu0 %v1983
        %v1985 = vpop.xlane.xlu0 %1984
        %v1986 = vsel %vm1084, %v1944, 0.0
        %1987 = vadd.xlane.f32.xlu0 %v1986
        %v1988 = vpop.xlane.xlu0 %1987
        %v1989 = vsel %vm1084, %v1946, 0.0
        %1990 = vadd.xlane.f32.xlu0 %v1989
        %v1991 = vpop.xlane.xlu0 %1990
        %v1992 = vsel %vm1084, %v1948, 0.0
        %1993 = vadd.xlane.f32.xlu0 %v1992
        %v1994 = vpop.xlane.xlu0 %1993
        %v1995 = vsel %vm1084, %v1950, 0.0
        %1996 = vadd.xlane.f32.xlu0 %v1995
        %v1997 = vpop.xlane.xlu0 %1996
        %v1998 = vsel %vm1084, %v1952, 0.0
        %1999 = vadd.xlane.f32.xlu0 %v1998
        %v2000 = vpop.xlane.xlu0 %1999
        %v2001 = vrcp.pop %v1955
        %v2002 = vrcp.pop %v1958
        %v2003 = vrcp.pop %v1961
        %v2004 = vrcp.pop %v1964
        %v2005 = vrcp.pop %v1967
        %v2006 = vrcp.pop %v1970
        %v2007 = vrcp.pop %v1973
        %v2008 = vrcp.pop %v1976
        %v2009 = vrcp.pop %v1979
        %v2010 = vrcp.pop %v1982
        %v2011 = vrcp.pop %v1985
        %v2012 = vrcp.pop %v1988
        %v2013 = vrcp.pop %v1991
        %v2014 = vrcp.pop %v1994
        %v2015 = vrcp.pop %v1997
        %v2016 = vrcp.pop %v2000
        %2025 = vrot.lane.b32.xlu0 %v699, 96
        %v2026 = vpop.permute.xlu0 %2025
        %2027 = vrot.lane.b32.xlu0 %v704, 96
        %v2028 = vpop.permute.xlu0 %2027
        %2029 = vrot.lane.b32.xlu0 %v709, 96
        %v2030 = vpop.permute.xlu0 %2029
        %2031 = vrot.lane.b32.xlu0 %v714, 96
        %v2032 = vpop.permute.xlu0 %2031
        %2033 = vrot.lane.b32.xlu0 %v719, 96
        %v2034 = vpop.permute.xlu0 %2033
        %2035 = vrot.lane.b32.xlu0 %v724, 96
        %v2036 = vpop.permute.xlu0 %2035
        %2037 = vrot.lane.b32.xlu0 %v729, 96
        %v2038 = vpop.permute.xlu0 %2037
        %2039 = vrot.lane.b32.xlu0 %v734, 96
        %v2040 = vpop.permute.xlu0 %2039
        %v2050 = vsel %vm1084, %v1922, 0
        %v2053 = vsel %vm1084, %v1924, 0
        %v2056 = vsel %vm1084, %v1926, 0
        %v2059 = vsel %vm1084, %v1928, 0
        %v2062 = vsel %vm1084, %v1930, 0
        %v2065 = vsel %vm1084, %v1932, 0
        %v2068 = vsel %vm1084, %v1934, 0
        %v2071 = vsel %vm1084, %v1936, 0
        %2073 = vmatprep.subr.mxu0 0.0
        %2074 = vmatpush1.msra.mxu0 %v2026
        %2075 = vmatprep.subr.mxu0 0.0
        %2076 = vmatpush1.msra.mxu0 %v2028
        %2077 = vmatprep.subr.mxu0 0.0
        %2078 = vmatpush1.msra.mxu0 %v2030
        %2079 = vmatprep.subr.mxu0 0.0
        %2080 = vmatpush1.msra.mxu0 %v2032
        %2081 = vmatprep.subr.mxu0 0.0
        %2082 = vmatpush1.msra.mxu0 %v2034
        %2083 = vmatprep.subr.mxu0 0.0
        %2084 = vmatpush1.msra.mxu0 %v2036
        %2085 = vmatprep.subr.mxu0 0.0
        %2086 = vmatpush1.msra.mxu0 %v2038
        %2087 = vmatprep.subr.mxu0 0.0
        %2088 = vmatpush1.msra.mxu0 %v2040
        %2089 = vmatprep.subr.mxu0 0.0
        %2090 = vmatpush1.msra.mxu0 0.0
        %2091 = vmatprep.subr.mxu0 0.0
        %2092 = vmatpush1.msra.mxu0 0.0
        %2093 = vmatprep.subr.mxu0 0.0
        %2094 = vmatpush1.msra.mxu0 0.0
        %2095 = vmatprep.subr.mxu0 0.0
        %2096 = vmatpush1.msra.mxu0 0.0
        %2097 = vmatprep.subr.mxu0 0.0
        %2098 = vmatpush1.msra.mxu0 0.0
        %2099 = vmatprep.subr.mxu0 0.0
        %2100 = vmatpush1.msra.mxu0 0.0
        %2101 = vmatprep.subr.mxu0 0.0
        %2102 = vmatpush1.msra.mxu0 0.0
        %2103 = vmatprep.subr.mxu0 0.0
        %2104 = vmatpush1.msra.mxu0 0.0
        %2105 = vmatprep.subr.mxu0 0.0
        %2106 = vmatpush1.msra.mxu0 0.0
        %2107 = vmatprep.subr.mxu0 0.0
        %2108 = vmatpush1.msra.mxu0 0.0
        %2109 = vmatprep.subr.mxu0 0.0
        %2110 = vmatpush1.msra.mxu0 0.0
        %2111 = vmatprep.subr.mxu0 0.0
        %2112 = vmatpush1.msra.mxu0 0.0
        %2113 = vmatprep.subr.mxu0 0.0
        %2114 = vmatpush1.msra.mxu0 0.0
        %2115 = vmatprep.subr.mxu0 0.0
        %2116 = vmatpush1.msra.mxu0 0.0
        %2117 = vmatprep.subr.mxu0 0.0
        %2118 = vmatpush1.msra.mxu0 0.0
        %2119 = vmatprep.subr.mxu0 0.0
        %2120 = vmatpush1.msra.mxu0 0.0
        %2121 = vmatprep.subr.mxu0 0.0
        %2122 = vmatpush1.msra.mxu0 0.0
        %2123 = vmatprep.subr.mxu0 0.0
        %2124 = vmatpush1.msra.mxu0 0.0
        %2125 = vmatprep.subr.mxu0 0.0
        %2126 = vmatpush1.msra.mxu0 0.0
        %2127 = vmatprep.subr.mxu0 0.0
        %2128 = vmatpush1.msra.mxu0 0.0
        %2129 = vmatprep.subr.mxu0 0.0
        %2130 = vmatpush1.msra.mxu0 0.0
        %2131 = vmatprep.subr.mxu0 0.0
        %2132 = vmatpush1.msra.mxu0 0.0
        %2133 = vmatprep.subr.mxu0 0.0
        %2134 = vmatpush1.msra.mxu0 0.0
        %2135 = vmatprep.subr.mxu0 0.0
        %2136 = vmatpush1.msra.mxu0 0.0
        %2137 = vmatprep.mubr.f32.mxu0 0.0
        %2138 = vmatmul.mubr.f32.gmra.mrb[0].mxu0 %v2050
        %v2139 = vpop.f32.mrb[0].mxu0
        %v2140 = vadd.f32 0.0, %v2139
        %v2141 = vpop.f32.mrb[0].mxu0
        %2142 = vmatprep.mubr.f32.mxu0 0.0
        %2143 = vmatmul.mubr.f32.gmra.mrb[0].mxu0 %v2053
        %v2144 = vpop.f32.mrb[0].mxu0
        %v2145 = vadd.f32 0.0, %v2144
        %v2146 = vpop.f32.mrb[0].mxu0
        %2147 = vmatprep.mubr.f32.mxu0 0.0
        %2148 = vmatmul.mubr.f32.gmra.mrb[0].mxu0 %v2056
        %v2149 = vpop.f32.mrb[0].mxu0
        %v2150 = vadd.f32 0.0, %v2149
        %v2151 = vpop.f32.mrb[0].mxu0
        %2152 = vmatprep.mubr.f32.mxu0 0.0
        %2153 = vmatmul.mubr.f32.gmra.mrb[0].mxu0 %v2059
        %v2154 = vpop.f32.mrb[0].mxu0
        %v2155 = vadd.f32 0.0, %v2154
        %v2156 = vpop.f32.mrb[0].mxu0
        %2157 = vmatprep.mubr.f32.mxu0 0.0
        %2158 = vmatmul.mubr.f32.gmra.mrb[0].mxu0 %v2062
        %v2159 = vpop.f32.mrb[0].mxu0
        %v2160 = vadd.f32 0.0, %v2159
        %v2161 = vpop.f32.mrb[0].mxu0
        %2162 = vmatprep.mubr.f32.mxu0 0.0
        %2163 = vmatmul.mubr.f32.gmra.mrb[0].mxu0 %v2065
        %v2164 = vpop.f32.mrb[0].mxu0
        %v2165 = vadd.f32 0.0, %v2164
        %v2166 = vpop.f32.mrb[0].mxu0
        %2167 = vmatprep.mubr.f32.mxu0 0.0
        %2168 = vmatmul.mubr.f32.gmra.mrb[0].mxu0 %v2068
        %v2169 = vpop.f32.mrb[0].mxu0
        %v2170 = vadd.f32 0.0, %v2169
        %v2171 = vpop.f32.mrb[0].mxu0
        %2172 = vmatprep.mubr.f32.mxu0 0.0
        %2173 = vmatmul.mubr.f32.gmra.mrb[0].mxu0 %v2071
        %v2174 = vpop.f32.mrb[0].mxu0
        %v2175 = vadd.f32 0.0, %v2174
        %v2176 = vpop.f32.mrb[0].mxu0
        %2177 = vdwg.mxu0
        %2186 = vrot.lane.b32.xlu0 %v739, 96
        %v2187 = vpop.permute.xlu0 %2186
        %2188 = vrot.lane.b32.xlu0 %v744, 96
        %v2189 = vpop.permute.xlu0 %2188
        %2190 = vrot.lane.b32.xlu0 %v749, 96
        %v2191 = vpop.permute.xlu0 %2190
        %2192 = vrot.lane.b32.xlu0 %v754, 96
        %v2193 = vpop.permute.xlu0 %2192
        %2194 = vrot.lane.b32.xlu0 %v759, 96
        %v2195 = vpop.permute.xlu0 %2194
        %2196 = vrot.lane.b32.xlu0 %v764, 96
        %v2197 = vpop.permute.xlu0 %2196
        %2198 = vrot.lane.b32.xlu0 %v769, 96
        %v2199 = vpop.permute.xlu0 %2198
        %2200 = vrot.lane.b32.xlu0 %v774, 96
        %v2201 = vpop.permute.xlu0 %2200
        %v2211 = vsel %vm1084, %v1938, 0
        %v2214 = vsel %vm1084, %v1940, 0
        %v2217 = vsel %vm1084, %v1942, 0
        %v2220 = vsel %vm1084, %v1944, 0
        %v2223 = vsel %vm1084, %v1946, 0
        %v2226 = vsel %vm1084, %v1948, 0
        %v2229 = vsel %vm1084, %v1950, 0
        %v2232 = vsel %vm1084, %v1952, 0
        %2234 = vmatprep.subr.mxu0 0.0
        %2235 = vmatpush1.msra.mxu0 %v2187
        %2236 = vmatprep.subr.mxu0 0.0
        %2237 = vmatpush1.msra.mxu0 %v2189
        %2238 = vmatprep.subr.mxu0 0.0
        %2239 = vmatpush1.msra.mxu0 %v2191
        %2240 = vmatprep.subr.mxu0 0.0
        %2241 = vmatpush1.msra.mxu0 %v2193
        %2242 = vmatprep.subr.mxu0 0.0
        %2243 = vmatpush1.msra.mxu0 %v2195
        %2244 = vmatprep.subr.mxu0 0.0
        %2245 = vmatpush1.msra.mxu0 %v2197
        %2246 = vmatprep.subr.mxu0 0.0
        %2247 = vmatpush1.msra.mxu0 %v2199
        %2248 = vmatprep.subr.mxu0 0.0
        %2249 = vmatpush1.msra.mxu0 %v2201
        %2250 = vmatprep.subr.mxu0 0.0
        %2251 = vmatpush1.msra.mxu0 0.0
        %2252 = vmatprep.subr.mxu0 0.0
        %2253 = vmatpush1.msra.mxu0 0.0
        %2254 = vmatprep.subr.mxu0 0.0
        %2255 = vmatpush1.msra.mxu0 0.0
        %2256 = vmatprep.subr.mxu0 0.0
        %2257 = vmatpush1.msra.mxu0 0.0
        %2258 = vmatprep.subr.mxu0 0.0
        %2259 = vmatpush1.msra.mxu0 0.0
        %2260 = vmatprep.subr.mxu0 0.0
        %2261 = vmatpush1.msra.mxu0 0.0
        %2262 = vmatprep.subr.mxu0 0.0
        %2263 = vmatpush1.msra.mxu0 0.0
        %2264 = vmatprep.subr.mxu0 0.0
        %2265 = vmatpush1.msra.mxu0 0.0
        %2266 = vmatprep.subr.mxu0 0.0
        %2267 = vmatpush1.msra.mxu0 0.0
        %2268 = vmatprep.subr.mxu0 0.0
        %2269 = vmatpush1.msra.mxu0 0.0
        %2270 = vmatprep.subr.mxu0 0.0
        %2271 = vmatpush1.msra.mxu0 0.0
        %2272 = vmatprep.subr.mxu0 0.0
        %2273 = vmatpush1.msra.mxu0 0.0
        %2274 = vmatprep.subr.mxu0 0.0
        %2275 = vmatpush1.msra.mxu0 0.0
        %2276 = vmatprep.subr.mxu0 0.0
        %2277 = vmatpush1.msra.mxu0 0.0
        %2278 = vmatprep.subr.mxu0 0.0
        %2279 = vmatpush1.msra.mxu0 0.0
        %2280 = vmatprep.subr.mxu0 0.0
        %2281 = vmatpush1.msra.mxu0 0.0
        %2282 = vmatprep.subr.mxu0 0.0
        %2283 = vmatpush1.msra.mxu0 0.0
        %2284 = vmatprep.subr.mxu0 0.0
        %2285 = vmatpush1.msra.mxu0 0.0
        %2286 = vmatprep.subr.mxu0 0.0
        %2287 = vmatpush1.msra.mxu0 0.0
        %2288 = vmatprep.subr.mxu0 0.0
        %2289 = vmatpush1.msra.mxu0 0.0
        %2290 = vmatprep.subr.mxu0 0.0
        %2291 = vmatpush1.msra.mxu0 0.0
        %2292 = vmatprep.subr.mxu0 0.0
        %2293 = vmatpush1.msra.mxu0 0.0
        %2294 = vmatprep.subr.mxu0 0.0
        %2295 = vmatpush1.msra.mxu0 0.0
        %2296 = vmatprep.subr.mxu0 0.0
        %2297 = vmatpush1.msra.mxu0 0.0
        %2298 = vmatprep.mubr.f32.mxu0 0.0
        %2299 = vmatmul.mubr.f32.gmra.mrb[0].mxu0 %v2211
        %v2300 = vpop.f32.mrb[0].mxu0
        %v2301 = vadd.f32 0.0, %v2300
        %v2302 = vpop.f32.mrb[0].mxu0
        %2303 = vmatprep.mubr.f32.mxu0 0.0
        %2304 = vmatmul.mubr.f32.gmra.mrb[0].mxu0 %v2214
        %v2305 = vpop.f32.mrb[0].mxu0
        %v2306 = vadd.f32 0.0, %v2305
        %v2307 = vpop.f32.mrb[0].mxu0
        %2308 = vmatprep.mubr.f32.mxu0 0.0
        %2309 = vmatmul.mubr.f32.gmra.mrb[0].mxu0 %v2217
        %v2310 = vpop.f32.mrb[0].mxu0
        %v2311 = vadd.f32 0.0, %v2310
        %v2312 = vpop.f32.mrb[0].mxu0
        %2313 = vmatprep.mubr.f32.mxu0 0.0
        %2314 = vmatmul.mubr.f32.gmra.mrb[0].mxu0 %v2220
        %v2315 = vpop.f32.mrb[0].mxu0
        %v2316 = vadd.f32 0.0, %v2315
        %v2317 = vpop.f32.mrb[0].mxu0
        %2318 = vmatprep.mubr.f32.mxu0 0.0
        %2319 = vmatmul.mubr.f32.gmra.mrb[0].mxu0 %v2223
        %v2320 = vpop.f32.mrb[0].mxu0
        %v2321 = vadd.f32 0.0, %v2320
        %v2322 = vpop.f32.mrb[0].mxu0
        %2323 = vmatprep.mubr.f32.mxu0 0.0
        %2324 = vmatmul.mubr.f32.gmra.mrb[0].mxu0 %v2226
        %v2325 = vpop.f32.mrb[0].mxu0
        %v2326 = vadd.f32 0.0, %v2325
        %v2327 = vpop.f32.mrb[0].mxu0
        %2328 = vmatprep.mubr.f32.mxu0 0.0
        %2329 = vmatmul.mubr.f32.gmra.mrb[0].mxu0 %v2229
        %v2330 = vpop.f32.mrb[0].mxu0
        %v2331 = vadd.f32 0.0, %v2330
        %v2332 = vpop.f32.mrb[0].mxu0
        %2333 = vmatprep.mubr.f32.mxu0 0.0
        %2334 = vmatmul.mubr.f32.gmra.mrb[0].mxu0 %v2232
        %v2335 = vpop.f32.mrb[0].mxu0
        %v2336 = vadd.f32 0.0, %v2335
        %v2337 = vpop.f32.mrb[0].mxu0
        %2338 = vdwg.mxu0
        %v2339 = vmul.f32 %v2140, %v2001
        %v2340 = vmul.f32 %v2145, %v2002
        %v2341 = vmul.f32 %v2150, %v2003
        %v2342 = vmul.f32 %v2155, %v2004
        %v2343 = vmul.f32 %v2160, %v2005
        %v2344 = vmul.f32 %v2165, %v2006
        %v2345 = vmul.f32 %v2170, %v2007
        %v2346 = vmul.f32 %v2175, %v2008
        %v2347 = vmul.f32 %v2301, %v2009
        %v2348 = vmul.f32 %v2306, %v2010
        %v2349 = vmul.f32 %v2311, %v2011
        %v2350 = vmul.f32 %v2316, %v2012
        %v2351 = vmul.f32 %v2321, %v2013
        %v2352 = vmul.f32 %v2326, %v2014
        %v2353 = vmul.f32 %v2331, %v2015
        %v2354 = vmul.f32 %v2336, %v2016
        %2355 = vrot.lane.b32.xlu0 %v377, 64
        %v2356 = vpop.permute.xlu0 %2355
        %2357 = vrot.lane.b32.xlu0 %v382, 64
        %v2358 = vpop.permute.xlu0 %2357
        %2359 = vrot.lane.b32.xlu0 %v387, 64
        %v2360 = vpop.permute.xlu0 %2359
        %2361 = vrot.lane.b32.xlu0 %v392, 64
        %v2362 = vpop.permute.xlu0 %2361
        %2363 = vrot.lane.b32.xlu0 %v397, 64
        %v2364 = vpop.permute.xlu0 %2363
        %2365 = vrot.lane.b32.xlu0 %v402, 64
        %v2366 = vpop.permute.xlu0 %2365
        %2367 = vrot.lane.b32.xlu0 %v407, 64
        %v2368 = vpop.permute.xlu0 %2367
        %2369 = vrot.lane.b32.xlu0 %v412, 64
        %v2370 = vpop.permute.xlu0 %2369
        %2371 = vrot.lane.b32.xlu0 %v538, 64
        %v2372 = vpop.permute.xlu0 %2371
        %2373 = vrot.lane.b32.xlu0 %v543, 64
        %v2374 = vpop.permute.xlu0 %2373
        %2375 = vrot.lane.b32.xlu0 %v548, 64
        %v2376 = vpop.permute.xlu0 %2375
        %2377 = vrot.lane.b32.xlu0 %v553, 64
        %v2378 = vpop.permute.xlu0 %2377
        %2379 = vrot.lane.b32.xlu0 %v558, 64
        %v2380 = vpop.permute.xlu0 %2379
        %2381 = vrot.lane.b32.xlu0 %v563, 64
        %v2382 = vpop.permute.xlu0 %2381
        %2383 = vrot.lane.b32.xlu0 %v568, 64
        %v2384 = vpop.permute.xlu0 %2383
        %2385 = vrot.lane.b32.xlu0 %v573, 64
        %v2386 = vpop.permute.xlu0 %2385
        %v2387 = vsel %vm777, %v2356, 0
        %v2389 = vsel %vm777, %v2358, 0
        %v2391 = vsel %vm777, %v2360, 0
        %v2393 = vsel %vm777, %v2362, 0
        %v2395 = vsel %vm777, %v2364, 0
        %v2397 = vsel %vm777, %v2366, 0
        %v2399 = vsel %vm777, %v2368, 0
        %v2401 = vsel %vm777, %v2370, 0
        %v2403 = vsel %vm777, %v2372, 0
        %v2405 = vsel %vm777, %v2374, 0
        %v2407 = vsel %vm777, %v2376, 0
        %v2409 = vsel %vm777, %v2378, 0
        %v2411 = vsel %vm777, %v2380, 0
        %v2413 = vsel %vm777, %v2382, 0
        %v2415 = vsel %vm777, %v2384, 0
        %v2417 = vsel %vm777, %v2386, 0
        %2419 = vmatprep.subr.mxu0 0.0
        %2420 = vmatpush1.xpose.msra.mxu0 %v2403
        %2421 = vmatprep.subr.mxu0 0.0
        %2422 = vmatpush1.xpose.msra.mxu0 %v2405
        %2423 = vmatprep.subr.mxu0 0.0
        %2424 = vmatpush1.xpose.msra.mxu0 %v2407
        %2425 = vmatprep.subr.mxu0 0.0
        %2426 = vmatpush1.xpose.msra.mxu0 %v2409
        %2427 = vmatprep.subr.mxu0 0.0
        %2428 = vmatpush1.xpose.msra.mxu0 %v2411
        %2429 = vmatprep.subr.mxu0 0.0
        %2430 = vmatpush1.xpose.msra.mxu0 %v2413
        %2431 = vmatprep.subr.mxu0 0.0
        %2432 = vmatpush1.xpose.msra.mxu0 %v2415
        %2433 = vmatprep.subr.mxu0 0.0
        %2434 = vmatpush1.xpose.msra.mxu0 %v2417
        %2435 = vmatprep.subr.mxu0 0.0
        %2436 = vmatpush1.xpose.msra.mxu0 0.0
        %2437 = vmatprep.subr.mxu0 0.0
        %2438 = vmatpush1.xpose.msra.mxu0 0.0
        %2439 = vmatprep.subr.mxu0 0.0
        %2440 = vmatpush1.xpose.msra.mxu0 0.0
        %2441 = vmatprep.subr.mxu0 0.0
        %2442 = vmatpush1.xpose.msra.mxu0 0.0
        %2443 = vmatprep.subr.mxu0 0.0
        %2444 = vmatpush1.xpose.msra.mxu0 0.0
        %2445 = vmatprep.subr.mxu0 0.0
        %2446 = vmatpush1.xpose.msra.mxu0 0.0
        %2447 = vmatprep.subr.mxu0 0.0
        %2448 = vmatpush1.xpose.msra.mxu0 0.0
        %2449 = vmatprep.subr.mxu0 0.0
        %2450 = vmatpush1.xpose.msra.mxu0 0.0
        %2451 = vmatprep.subr.mxu0 0.0
        %2452 = vmatpush1.xpose.msra.mxu0 0.0
        %2453 = vmatprep.subr.mxu0 0.0
        %2454 = vmatpush1.xpose.msra.mxu0 0.0
        %2455 = vmatprep.subr.mxu0 0.0
        %2456 = vmatpush1.xpose.msra.mxu0 0.0
        %2457 = vmatprep.subr.mxu0 0.0
        %2458 = vmatpush1.xpose.msra.mxu0 0.0
        %2459 = vmatprep.subr.mxu0 0.0
        %2460 = vmatpush1.xpose.msra.mxu0 0.0
        %2461 = vmatprep.subr.mxu0 0.0
        %2462 = vmatpush1.xpose.msra.mxu0 0.0
        %2463 = vmatprep.subr.mxu0 0.0
        %2464 = vmatpush1.xpose.msra.mxu0 0.0
        %2465 = vmatprep.subr.mxu0 0.0
        %2466 = vmatpush1.xpose.msra.mxu0 0.0
        %2467 = vmatprep.subr.mxu0 0.0
        %2468 = vmatpush1.xpose.msra.mxu0 0.0
        %2469 = vmatprep.subr.mxu0 0.0
        %2470 = vmatpush1.xpose.msra.mxu0 0.0
        %2471 = vmatprep.subr.mxu0 0.0
        %2472 = vmatpush1.xpose.msra.mxu0 0.0
        %2473 = vmatprep.subr.mxu0 0.0
        %2474 = vmatpush1.xpose.msra.mxu0 0.0
        %2475 = vmatprep.subr.mxu0 0.0
        %2476 = vmatpush1.xpose.msra.mxu0 0.0
        %2477 = vmatprep.subr.mxu0 0.0
        %2478 = vmatpush1.xpose.msra.mxu0 0.0
        %2479 = vmatprep.subr.mxu0 0.0
        %2480 = vmatpush1.xpose.msra.mxu0 0.0
        %2481 = vmatprep.subr.mxu0 0.0
        %2482 = vmatpush1.xpose.msra.mxu0 0.0
        %2483 = vmatprep.mubr.f32.mxu0 0.0
        %2484 = vmatmul.mubr.f32.gmra.mrb[0].mxu0 %v2387
        %v2485 = vpop.f32.mrb[0].mxu0
        %v2486 = vadd.f32 0.0, %v2485
        %v2487 = vpop.f32.mrb[0].mxu0
        %2488 = vmatprep.mubr.f32.mxu0 0.0
        %2489 = vmatmul.mubr.f32.gmra.mrb[0].mxu0 %v2389
        %v2490 = vpop.f32.mrb[0].mxu0
        %v2491 = vadd.f32 0.0, %v2490
        %v2492 = vpop.f32.mrb[0].mxu0
        %2493 = vmatprep.mubr.f32.mxu0 0.0
        %2494 = vmatmul.mubr.f32.gmra.mrb[0].mxu0 %v2391
        %v2495 = vpop.f32.mrb[0].mxu0
        %v2496 = vadd.f32 0.0, %v2495
        %v2497 = vpop.f32.mrb[0].mxu0
        %2498 = vmatprep.mubr.f32.mxu0 0.0
        %2499 = vmatmul.mubr.f32.gmra.mrb[0].mxu0 %v2393
        %v2500 = vpop.f32.mrb[0].mxu0
        %v2501 = vadd.f32 0.0, %v2500
        %v2502 = vpop.f32.mrb[0].mxu0
        %2503 = vmatprep.mubr.f32.mxu0 0.0
        %2504 = vmatmul.mubr.f32.gmra.mrb[0].mxu0 %v2395
        %v2505 = vpop.f32.mrb[0].mxu0
        %v2506 = vadd.f32 0.0, %v2505
        %v2507 = vpop.f32.mrb[0].mxu0
        %2508 = vmatprep.mubr.f32.mxu0 0.0
        %2509 = vmatmul.mubr.f32.gmra.mrb[0].mxu0 %v2397
        %v2510 = vpop.f32.mrb[0].mxu0
        %v2511 = vadd.f32 0.0, %v2510
        %v2512 = vpop.f32.mrb[0].mxu0
        %2513 = vmatprep.mubr.f32.mxu0 0.0
        %2514 = vmatmul.mubr.f32.gmra.mrb[0].mxu0 %v2399
        %v2515 = vpop.f32.mrb[0].mxu0
        %v2516 = vadd.f32 0.0, %v2515
        %v2517 = vpop.f32.mrb[0].mxu0
        %2518 = vmatprep.mubr.f32.mxu0 0.0
        %2519 = vmatmul.mubr.f32.gmra.mrb[0].mxu0 %v2401
        %v2520 = vpop.f32.mrb[0].mxu0
        %v2521 = vadd.f32 0.0, %v2520
        %v2522 = vpop.f32.mrb[0].mxu0
        %2523 = vdwg.mxu0
        %2524 = vrot.lane.b32.xlu0 %v417, 64
        %v2525 = vpop.permute.xlu0 %2524
        %2526 = vrot.lane.b32.xlu0 %v422, 64
        %v2527 = vpop.permute.xlu0 %2526
        %2528 = vrot.lane.b32.xlu0 %v427, 64
        %v2529 = vpop.permute.xlu0 %2528
        %2530 = vrot.lane.b32.xlu0 %v432, 64
        %v2531 = vpop.permute.xlu0 %2530
        %2532 = vrot.lane.b32.xlu0 %v437, 64
        %v2533 = vpop.permute.xlu0 %2532
        %2534 = vrot.lane.b32.xlu0 %v442, 64
        %v2535 = vpop.permute.xlu0 %2534
        %2536 = vrot.lane.b32.xlu0 %v447, 64
        %v2537 = vpop.permute.xlu0 %2536
        %2538 = vrot.lane.b32.xlu0 %v452, 64
        %v2539 = vpop.permute.xlu0 %2538
        %2540 = vrot.lane.b32.xlu0 %v578, 64
        %v2541 = vpop.permute.xlu0 %2540
        %2542 = vrot.lane.b32.xlu0 %v583, 64
        %v2543 = vpop.permute.xlu0 %2542
        %2544 = vrot.lane.b32.xlu0 %v588, 64
        %v2545 = vpop.permute.xlu0 %2544
        %2546 = vrot.lane.b32.xlu0 %v593, 64
        %v2547 = vpop.permute.xlu0 %2546
        %2548 = vrot.lane.b32.xlu0 %v598, 64
        %v2549 = vpop.permute.xlu0 %2548
        %2550 = vrot.lane.b32.xlu0 %v603, 64
        %v2551 = vpop.permute.xlu0 %2550
        %2552 = vrot.lane.b32.xlu0 %v608, 64
        %v2553 = vpop.permute.xlu0 %2552
        %2554 = vrot.lane.b32.xlu0 %v613, 64
        %v2555 = vpop.permute.xlu0 %2554
        %v2556 = vsel %vm777, %v2525, 0
        %v2558 = vsel %vm777, %v2527, 0
        %v2560 = vsel %vm777, %v2529, 0
        %v2562 = vsel %vm777, %v2531, 0
        %v2564 = vsel %vm777, %v2533, 0
        %v2566 = vsel %vm777, %v2535, 0
        %v2568 = vsel %vm777, %v2537, 0
        %v2570 = vsel %vm777, %v2539, 0
        %v2572 = vsel %vm777, %v2541, 0
        %v2574 = vsel %vm777, %v2543, 0
        %v2576 = vsel %vm777, %v2545, 0
        %v2578 = vsel %vm777, %v2547, 0
        %v2580 = vsel %vm777, %v2549, 0
        %v2582 = vsel %vm777, %v2551, 0
        %v2584 = vsel %vm777, %v2553, 0
        %v2586 = vsel %vm777, %v2555, 0
        %2588 = vmatprep.subr.mxu0 0.0
        %2589 = vmatpush1.xpose.msra.mxu0 %v2572
        %2590 = vmatprep.subr.mxu0 0.0
        %2591 = vmatpush1.xpose.msra.mxu0 %v2574
        %2592 = vmatprep.subr.mxu0 0.0
        %2593 = vmatpush1.xpose.msra.mxu0 %v2576
        %2594 = vmatprep.subr.mxu0 0.0
        %2595 = vmatpush1.xpose.msra.mxu0 %v2578
        %2596 = vmatprep.subr.mxu0 0.0
        %2597 = vmatpush1.xpose.msra.mxu0 %v2580
        %2598 = vmatprep.subr.mxu0 0.0
        %2599 = vmatpush1.xpose.msra.mxu0 %v2582
        %2600 = vmatprep.subr.mxu0 0.0
        %2601 = vmatpush1.xpose.msra.mxu0 %v2584
        %2602 = vmatprep.subr.mxu0 0.0
        %2603 = vmatpush1.xpose.msra.mxu0 %v2586
        %2604 = vmatprep.subr.mxu0 0.0
        %2605 = vmatpush1.xpose.msra.mxu0 0.0
        %2606 = vmatprep.subr.mxu0 0.0
        %2607 = vmatpush1.xpose.msra.mxu0 0.0
        %2608 = vmatprep.subr.mxu0 0.0
        %2609 = vmatpush1.xpose.msra.mxu0 0.0
        %2610 = vmatprep.subr.mxu0 0.0
        %2611 = vmatpush1.xpose.msra.mxu0 0.0
        %2612 = vmatprep.subr.mxu0 0.0
        %2613 = vmatpush1.xpose.msra.mxu0 0.0
        %2614 = vmatprep.subr.mxu0 0.0
        %2615 = vmatpush1.xpose.msra.mxu0 0.0
        %2616 = vmatprep.subr.mxu0 0.0
        %2617 = vmatpush1.xpose.msra.mxu0 0.0
        %2618 = vmatprep.subr.mxu0 0.0
        %2619 = vmatpush1.xpose.msra.mxu0 0.0
        %2620 = vmatprep.subr.mxu0 0.0
        %2621 = vmatpush1.xpose.msra.mxu0 0.0
        %2622 = vmatprep.subr.mxu0 0.0
        %2623 = vmatpush1.xpose.msra.mxu0 0.0
        %2624 = vmatprep.subr.mxu0 0.0
        %2625 = vmatpush1.xpose.msra.mxu0 0.0
        %2626 = vmatprep.subr.mxu0 0.0
        %2627 = vmatpush1.xpose.msra.mxu0 0.0
        %2628 = vmatprep.subr.mxu0 0.0
        %2629 = vmatpush1.xpose.msra.mxu0 0.0
        %2630 = vmatprep.subr.mxu0 0.0
        %2631 = vmatpush1.xpose.msra.mxu0 0.0
        %2632 = vmatprep.subr.mxu0 0.0
        %2633 = vmatpush1.xpose.msra.mxu0 0.0
        %2634 = vmatprep.subr.mxu0 0.0
        %2635 = vmatpush1.xpose.msra.mxu0 0.0
        %2636 = vmatprep.subr.mxu0 0.0
        %2637 = vmatpush1.xpose.msra.mxu0 0.0
        %2638 = vmatprep.subr.mxu0 0.0
        %2639 = vmatpush1.xpose.msra.mxu0 0.0
        %2640 = vmatprep.subr.mxu0 0.0
        %2641 = vmatpush1.xpose.msra.mxu0 0.0
        %2642 = vmatprep.subr.mxu0 0.0
        %2643 = vmatpush1.xpose.msra.mxu0 0.0
        %2644 = vmatprep.subr.mxu0 0.0
        %2645 = vmatpush1.xpose.msra.mxu0 0.0
        %2646 = vmatprep.subr.mxu0 0.0
        %2647 = vmatpush1.xpose.msra.mxu0 0.0
        %2648 = vmatprep.subr.mxu0 0.0
        %2649 = vmatpush1.xpose.msra.mxu0 0.0
        %2650 = vmatprep.subr.mxu0 0.0
        %2651 = vmatpush1.xpose.msra.mxu0 0.0
        %2652 = vmatprep.mubr.f32.mxu0 0.0
        %2653 = vmatmul.mubr.f32.gmra.mrb[0].mxu0 %v2556
        %v2654 = vpop.f32.mrb[0].mxu0
        %v2655 = vadd.f32 0.0, %v2654
        %v2656 = vpop.f32.mrb[0].mxu0
        %2657 = vmatprep.mubr.f32.mxu0 0.0
        %2658 = vmatmul.mubr.f32.gmra.mrb[0].mxu0 %v2558
        %v2659 = vpop.f32.mrb[0].mxu0
        %v2660 = vadd.f32 0.0, %v2659
        %v2661 = vpop.f32.mrb[0].mxu0
        %2662 = vmatprep.mubr.f32.mxu0 0.0
        %2663 = vmatmul.mubr.f32.gmra.mrb[0].mxu0 %v2560
        %v2664 = vpop.f32.mrb[0].mxu0
        %v2665 = vadd.f32 0.0, %v2664
        %v2666 = vpop.f32.mrb[0].mxu0
        %2667 = vmatprep.mubr.f32.mxu0 0.0
        %2668 = vmatmul.mubr.f32.gmra.mrb[0].mxu0 %v2562
        %v2669 = vpop.f32.mrb[0].mxu0
        %v2670 = vadd.f32 0.0, %v2669
        %v2671 = vpop.f32.mrb[0].mxu0
        %2672 = vmatprep.mubr.f32.mxu0 0.0
        %2673 = vmatmul.mubr.f32.gmra.mrb[0].mxu0 %v2564
        %v2674 = vpop.f32.mrb[0].mxu0
        %v2675 = vadd.f32 0.0, %v2674
        %v2676 = vpop.f32.mrb[0].mxu0
        %2677 = vmatprep.mubr.f32.mxu0 0.0
        %2678 = vmatmul.mubr.f32.gmra.mrb[0].mxu0 %v2566
        %v2679 = vpop.f32.mrb[0].mxu0
        %v2680 = vadd.f32 0.0, %v2679
        %v2681 = vpop.f32.mrb[0].mxu0
        %2682 = vmatprep.mubr.f32.mxu0 0.0
        %2683 = vmatmul.mubr.f32.gmra.mrb[0].mxu0 %v2568
        %v2684 = vpop.f32.mrb[0].mxu0
        %v2685 = vadd.f32 0.0, %v2684
        %v2686 = vpop.f32.mrb[0].mxu0
        %2687 = vmatprep.mubr.f32.mxu0 0.0
        %2688 = vmatmul.mubr.f32.gmra.mrb[0].mxu0 %v2570
        %v2689 = vpop.f32.mrb[0].mxu0
        %v2690 = vadd.f32 0.0, %v2689
        %v2691 = vpop.f32.mrb[0].mxu0
        %2692 = vdwg.mxu0
        %v2693 = vsel %vm1084, %v2486, -inf
        %2694 = vmax.xlane.f32.xlu0 %v2693
        %v2695 = vpop.xlane.xlu0 %2694
        %v2696 = vsel %vm1084, %v2491, -inf
        %2697 = vmax.xlane.f32.xlu0 %v2696
        %v2698 = vpop.xlane.xlu0 %2697
        %v2699 = vsel %vm1084, %v2496, -inf
        %2700 = vmax.xlane.f32.xlu0 %v2699
        %v2701 = vpop.xlane.xlu0 %2700
        %v2702 = vsel %vm1084, %v2501, -inf
        %2703 = vmax.xlane.f32.xlu0 %v2702
        %v2704 = vpop.xlane.xlu0 %2703
        %v2705 = vsel %vm1084, %v2506, -inf
        %2706 = vmax.xlane.f32.xlu0 %v2705
        %v2707 = vpop.xlane.xlu0 %2706
        %v2708 = vsel %vm1084, %v2511, -inf
        %2709 = vmax.xlane.f32.xlu0 %v2708
        %v2710 = vpop.xlane.xlu0 %2709
        %v2711 = vsel %vm1084, %v2516, -inf
        %2712 = vmax.xlane.f32.xlu0 %v2711
        %v2713 = vpop.xlane.xlu0 %2712
        %v2714 = vsel %vm1084, %v2521, -inf
        %2715 = vmax.xlane.f32.xlu0 %v2714
        %v2716 = vpop.xlane.xlu0 %2715
        %v2717 = vsel %vm1084, %v2655, -inf
        %2718 = vmax.xlane.f32.xlu0 %v2717
        %v2719 = vpop.xlane.xlu0 %2718
        %v2720 = vsel %vm1084, %v2660, -inf
        %2721 = vmax.xlane.f32.xlu0 %v2720
        %v2722 = vpop.xlane.xlu0 %2721
        %v2723 = vsel %vm1084, %v2665, -inf
        %2724 = vmax.xlane.f32.xlu0 %v2723
        %v2725 = vpop.xlane.xlu0 %2724
        %v2726 = vsel %vm1084, %v2670, -inf
        %2727 = vmax.xlane.f32.xlu0 %v2726
        %v2728 = vpop.xlane.xlu0 %2727
        %v2729 = vsel %vm1084, %v2675, -inf
        %2730 = vmax.xlane.f32.xlu0 %v2729
        %v2731 = vpop.xlane.xlu0 %2730
        %v2732 = vsel %vm1084, %v2680, -inf
        %2733 = vmax.xlane.f32.xlu0 %v2732
        %v2734 = vpop.xlane.xlu0 %2733
        %v2735 = vsel %vm1084, %v2685, -inf
        %2736 = vmax.xlane.f32.xlu0 %v2735
        %v2737 = vpop.xlane.xlu0 %2736
        %v2738 = vsel %vm1084, %v2690, -inf
        %2739 = vmax.xlane.f32.xlu0 %v2738
        %v2740 = vpop.xlane.xlu0 %2739
        %v2741 = vsub.f32 %v2486, %v2695
        %v2742 = vsub.f32 %v2491, %v2698
        %v2743 = vsub.f32 %v2496, %v2701
        %v2744 = vsub.f32 %v2501, %v2704
        %v2745 = vsub.f32 %v2506, %v2707
        %v2746 = vsub.f32 %v2511, %v2710
        %v2747 = vsub.f32 %v2516, %v2713
        %v2748 = vsub.f32 %v2521, %v2716
        %v2749 = vsub.f32 %v2655, %v2719
        %v2750 = vsub.f32 %v2660, %v2722
        %v2751 = vsub.f32 %v2665, %v2725
        %v2752 = vsub.f32 %v2670, %v2728
        %v2753 = vsub.f32 %v2675, %v2731
        %v2754 = vsub.f32 %v2680, %v2734
        %v2755 = vsub.f32 %v2685, %v2737
        %v2756 = vsub.f32 %v2690, %v2740
        %v2757 = vmul.f32 %v2741, 1.442695
        %v2758 = vpow.pop %v2757
        %v2759 = vmul.f32 %v2742, 1.442695
        %v2760 = vpow.pop %v2759
        %v2761 = vmul.f32 %v2743, 1.442695
        %v2762 = vpow.pop %v2761
        %v2763 = vmul.f32 %v2744, 1.442695
        %v2764 = vpow.pop %v2763
        %v2765 = vmul.f32 %v2745, 1.442695
        %v2766 = vpow.pop %v2765
        %v2767 = vmul.f32 %v2746, 1.442695
        %v2768 = vpow.pop %v2767
        %v2769 = vmul.f32 %v2747, 1.442695
        %v2770 = vpow.pop %v2769
        %v2771 = vmul.f32 %v2748, 1.442695
        %v2772 = vpow.pop %v2771
        %v2773 = vmul.f32 %v2749, 1.442695
        %v2774 = vpow.pop %v2773
        %v2775 = vmul.f32 %v2750, 1.442695
        %v2776 = vpow.pop %v2775
        %v2777 = vmul.f32 %v2751, 1.442695
        %v2778 = vpow.pop %v2777
        %v2779 = vmul.f32 %v2752, 1.442695
        %v2780 = vpow.pop %v2779
        %v2781 = vmul.f32 %v2753, 1.442695
        %v2782 = vpow.pop %v2781
        %v2783 = vmul.f32 %v2754, 1.442695
        %v2784 = vpow.pop %v2783
        %v2785 = vmul.f32 %v2755, 1.442695
        %v2786 = vpow.pop %v2785
        %v2787 = vmul.f32 %v2756, 1.442695
        %v2788 = vpow.pop %v2787
        %v2789 = vsel %vm1084, %v2758, 0.0
        %2790 = vadd.xlane.f32.xlu0 %v2789
        %v2791 = vpop.xlane.xlu0 %2790
        %v2792 = vsel %vm1084, %v2760, 0.0
        %2793 = vadd.xlane.f32.xlu0 %v2792
        %v2794 = vpop.xlane.xlu0 %2793
        %v2795 = vsel %vm1084, %v2762, 0.0
        %2796 = vadd.xlane.f32.xlu0 %v2795
        %v2797 = vpop.xlane.xlu0 %2796
        %v2798 = vsel %vm1084, %v2764, 0.0
        %2799 = vadd.xlane.f32.xlu0 %v2798
        %v2800 = vpop.xlane.xlu0 %2799
        %v2801 = vsel %vm1084, %v2766, 0.0
        %2802 = vadd.xlane.f32.xlu0 %v2801
        %v2803 = vpop.xlane.xlu0 %2802
        %v2804 = vsel %vm1084, %v2768, 0.0
        %2805 = vadd.xlane.f32.xlu0 %v2804
        %v2806 = vpop.xlane.xlu0 %2805
        %v2807 = vsel %vm1084, %v2770, 0.0
        %2808 = vadd.xlane.f32.xlu0 %v2807
        %v2809 = vpop.xlane.xlu0 %2808
        %v2810 = vsel %vm1084, %v2772, 0.0
        %2811 = vadd.xlane.f32.xlu0 %v2810
        %v2812 = vpop.xlane.xlu0 %2811
        %v2813 = vsel %vm1084, %v2774, 0.0
        %2814 = vadd.xlane.f32.xlu0 %v2813
        %v2815 = vpop.xlane.xlu0 %2814
        %v2816 = vsel %vm1084, %v2776, 0.0
        %2817 = vadd.xlane.f32.xlu0 %v2816
        %v2818 = vpop.xlane.xlu0 %2817
        %v2819 = vsel %vm1084, %v2778, 0.0
        %2820 = vadd.xlane.f32.xlu0 %v2819
        %v2821 = vpop.xlane.xlu0 %2820
        %v2822 = vsel %vm1084, %v2780, 0.0
        %2823 = vadd.xlane.f32.xlu0 %v2822
        %v2824 = vpop.xlane.xlu0 %2823
        %v2825 = vsel %vm1084, %v2782, 0.0
        %2826 = vadd.xlane.f32.xlu0 %v2825
        %v2827 = vpop.xlane.xlu0 %2826
        %v2828 = vsel %vm1084, %v2784, 0.0
        %2829 = vadd.xlane.f32.xlu0 %v2828
        %v2830 = vpop.xlane.xlu0 %2829
        %v2831 = vsel %vm1084, %v2786, 0.0
        %2832 = vadd.xlane.f32.xlu0 %v2831
        %v2833 = vpop.xlane.xlu0 %2832
        %v2834 = vsel %vm1084, %v2788, 0.0
        %2835 = vadd.xlane.f32.xlu0 %v2834
        %v2836 = vpop.xlane.xlu0 %2835
        %v2837 = vrcp.pop %v2791
        %v2838 = vrcp.pop %v2794
        %v2839 = vrcp.pop %v2797
        %v2840 = vrcp.pop %v2800
        %v2841 = vrcp.pop %v2803
        %v2842 = vrcp.pop %v2806
        %v2843 = vrcp.pop %v2809
        %v2844 = vrcp.pop %v2812
        %v2845 = vrcp.pop %v2815
        %v2846 = vrcp.pop %v2818
        %v2847 = vrcp.pop %v2821
        %v2848 = vrcp.pop %v2824
        %v2849 = vrcp.pop %v2827
        %v2850 = vrcp.pop %v2830
        %v2851 = vrcp.pop %v2833
        %v2852 = vrcp.pop %v2836
        %2853 = vrot.lane.b32.xlu0 %v699, 64
        %v2854 = vpop.permute.xlu0 %2853
        %2855 = vrot.lane.b32.xlu0 %v704, 64
        %v2856 = vpop.permute.xlu0 %2855
        %2857 = vrot.lane.b32.xlu0 %v709, 64
        %v2858 = vpop.permute.xlu0 %2857
        %2859 = vrot.lane.b32.xlu0 %v714, 64
        %v2860 = vpop.permute.xlu0 %2859
        %2861 = vrot.lane.b32.xlu0 %v719, 64
        %v2862 = vpop.permute.xlu0 %2861
        %2863 = vrot.lane.b32.xlu0 %v724, 64
        %v2864 = vpop.permute.xlu0 %2863
        %2865 = vrot.lane.b32.xlu0 %v729, 64
        %v2866 = vpop.permute.xlu0 %2865
        %2867 = vrot.lane.b32.xlu0 %v734, 64
        %v2868 = vpop.permute.xlu0 %2867
        %v2878 = vsel %vm1084, %v2758, 0
        %v2881 = vsel %vm1084, %v2760, 0
        %v2884 = vsel %vm1084, %v2762, 0
        %v2887 = vsel %vm1084, %v2764, 0
        %v2890 = vsel %vm1084, %v2766, 0
        %v2893 = vsel %vm1084, %v2768, 0
        %v2896 = vsel %vm1084, %v2770, 0
        %v2899 = vsel %vm1084, %v2772, 0
        %2901 = vmatprep.subr.mxu0 0.0
        %2902 = vmatpush1.msra.mxu0 %v2854
        %2903 = vmatprep.subr.mxu0 0.0
        %2904 = vmatpush1.msra.mxu0 %v2856
        %2905 = vmatprep.subr.mxu0 0.0
        %2906 = vmatpush1.msra.mxu0 %v2858
        %2907 = vmatprep.subr.mxu0 0.0
        %2908 = vmatpush1.msra.mxu0 %v2860
        %2909 = vmatprep.subr.mxu0 0.0
        %2910 = vmatpush1.msra.mxu0 %v2862
        %2911 = vmatprep.subr.mxu0 0.0
        %2912 = vmatpush1.msra.mxu0 %v2864
        %2913 = vmatprep.subr.mxu0 0.0
        %2914 = vmatpush1.msra.mxu0 %v2866
        %2915 = vmatprep.subr.mxu0 0.0
        %2916 = vmatpush1.msra.mxu0 %v2868
        %2917 = vmatprep.subr.mxu0 0.0
        %2918 = vmatpush1.msra.mxu0 0.0
        %2919 = vmatprep.subr.mxu0 0.0
        %2920 = vmatpush1.msra.mxu0 0.0
        %2921 = vmatprep.subr.mxu0 0.0
        %2922 = vmatpush1.msra.mxu0 0.0
        %2923 = vmatprep.subr.mxu0 0.0
        %2924 = vmatpush1.msra.mxu0 0.0
        %2925 = vmatprep.subr.mxu0 0.0
        %2926 = vmatpush1.msra.mxu0 0.0
        %2927 = vmatprep.subr.mxu0 0.0
        %2928 = vmatpush1.msra.mxu0 0.0
        %2929 = vmatprep.subr.mxu0 0.0
        %2930 = vmatpush1.msra.mxu0 0.0
        %2931 = vmatprep.subr.mxu0 0.0
        %2932 = vmatpush1.msra.mxu0 0.0
        %2933 = vmatprep.subr.mxu0 0.0
        %2934 = vmatpush1.msra.mxu0 0.0
        %2935 = vmatprep.subr.mxu0 0.0
        %2936 = vmatpush1.msra.mxu0 0.0
        %2937 = vmatprep.subr.mxu0 0.0
        %2938 = vmatpush1.msra.mxu0 0.0
        %2939 = vmatprep.subr.mxu0 0.0
        %2940 = vmatpush1.msra.mxu0 0.0
        %2941 = vmatprep.subr.mxu0 0.0
        %2942 = vmatpush1.msra.mxu0 0.0
        %2943 = vmatprep.subr.mxu0 0.0
        %2944 = vmatpush1.msra.mxu0 0.0
        %2945 = vmatprep.subr.mxu0 0.0
        %2946 = vmatpush1.msra.mxu0 0.0
        %2947 = vmatprep.subr.mxu0 0.0
        %2948 = vmatpush1.msra.mxu0 0.0
        %2949 = vmatprep.subr.mxu0 0.0
        %2950 = vmatpush1.msra.mxu0 0.0
        %2951 = vmatprep.subr.mxu0 0.0
        %2952 = vmatpush1.msra.mxu0 0.0
        %2953 = vmatprep.subr.mxu0 0.0
        %2954 = vmatpush1.msra.mxu0 0.0
        %2955 = vmatprep.subr.mxu0 0.0
        %2956 = vmatpush1.msra.mxu0 0.0
        %2957 = vmatprep.subr.mxu0 0.0
        %2958 = vmatpush1.msra.mxu0 0.0
        %2959 = vmatprep.subr.mxu0 0.0
        %2960 = vmatpush1.msra.mxu0 0.0
        %2961 = vmatprep.subr.mxu0 0.0
        %2962 = vmatpush1.msra.mxu0 0.0
        %2963 = vmatprep.subr.mxu0 0.0
        %2964 = vmatpush1.msra.mxu0 0.0
        %2965 = vmatprep.mubr.f32.mxu0 0.0
        %2966 = vmatmul.mubr.f32.gmra.mrb[0].mxu0 %v2878
        %v2967 = vpop.f32.mrb[0].mxu0
        %v2968 = vadd.f32 0.0, %v2967
        %v2969 = vpop.f32.mrb[0].mxu0
        %2970 = vmatprep.mubr.f32.mxu0 0.0
        %2971 = vmatmul.mubr.f32.gmra.mrb[0].mxu0 %v2881
        %v2972 = vpop.f32.mrb[0].mxu0
        %v2973 = vadd.f32 0.0, %v2972
        %v2974 = vpop.f32.mrb[0].mxu0
        %2975 = vmatprep.mubr.f32.mxu0 0.0
        %2976 = vmatmul.mubr.f32.gmra.mrb[0].mxu0 %v2884
        %v2977 = vpop.f32.mrb[0].mxu0
        %v2978 = vadd.f32 0.0, %v2977
        %v2979 = vpop.f32.mrb[0].mxu0
        %2980 = vmatprep.mubr.f32.mxu0 0.0
        %2981 = vmatmul.mubr.f32.gmra.mrb[0].mxu0 %v2887
        %v2982 = vpop.f32.mrb[0].mxu0
        %v2983 = vadd.f32 0.0, %v2982
        %v2984 = vpop.f32.mrb[0].mxu0
        %2985 = vmatprep.mubr.f32.mxu0 0.0
        %2986 = vmatmul.mubr.f32.gmra.mrb[0].mxu0 %v2890
        %v2987 = vpop.f32.mrb[0].mxu0
        %v2988 = vadd.f32 0.0, %v2987
        %v2989 = vpop.f32.mrb[0].mxu0
        %2990 = vmatprep.mubr.f32.mxu0 0.0
        %2991 = vmatmul.mubr.f32.gmra.mrb[0].mxu0 %v2893
        %v2992 = vpop.f32.mrb[0].mxu0
        %v2993 = vadd.f32 0.0, %v2992
        %v2994 = vpop.f32.mrb[0].mxu0
        %2995 = vmatprep.mubr.f32.mxu0 0.0
        %2996 = vmatmul.mubr.f32.gmra.mrb[0].mxu0 %v2896
        %v2997 = vpop.f32.mrb[0].mxu0
        %v2998 = vadd.f32 0.0, %v2997
        %v2999 = vpop.f32.mrb[0].mxu0
        %3000 = vmatprep.mubr.f32.mxu0 0.0
        %3001 = vmatmul.mubr.f32.gmra.mrb[0].mxu0 %v2899
        %v3002 = vpop.f32.mrb[0].mxu0
        %v3003 = vadd.f32 0.0, %v3002
        %v3004 = vpop.f32.mrb[0].mxu0
        %3005 = vdwg.mxu0
        %3006 = vrot.lane.b32.xlu0 %v739, 64
        %v3007 = vpop.permute.xlu0 %3006
        %3008 = vrot.lane.b32.xlu0 %v744, 64
        %v3009 = vpop.permute.xlu0 %3008
        %3010 = vrot.lane.b32.xlu0 %v749, 64
        %v3011 = vpop.permute.xlu0 %3010
        %3012 = vrot.lane.b32.xlu0 %v754, 64
        %v3013 = vpop.permute.xlu0 %3012
        %3014 = vrot.lane.b32.xlu0 %v759, 64
        %v3015 = vpop.permute.xlu0 %3014
        %3016 = vrot.lane.b32.xlu0 %v764, 64
        %v3017 = vpop.permute.xlu0 %3016
        %3018 = vrot.lane.b32.xlu0 %v769, 64
        %v3019 = vpop.permute.xlu0 %3018
        %3020 = vrot.lane.b32.xlu0 %v774, 64
        %v3021 = vpop.permute.xlu0 %3020
        %v3031 = vsel %vm1084, %v2774, 0
        %v3034 = vsel %vm1084, %v2776, 0
        %v3037 = vsel %vm1084, %v2778, 0
        %v3040 = vsel %vm1084, %v2780, 0
        %v3043 = vsel %vm1084, %v2782, 0
        %v3046 = vsel %vm1084, %v2784, 0
        %v3049 = vsel %vm1084, %v2786, 0
        %v3052 = vsel %vm1084, %v2788, 0
        %3054 = vmatprep.subr.mxu0 0.0
        %3055 = vmatpush1.msra.mxu0 %v3007
        %3056 = vmatprep.subr.mxu0 0.0
        %3057 = vmatpush1.msra.mxu0 %v3009
        %3058 = vmatprep.subr.mxu0 0.0
        %3059 = vmatpush1.msra.mxu0 %v3011
        %3060 = vmatprep.subr.mxu0 0.0
        %3061 = vmatpush1.msra.mxu0 %v3013
        %3062 = vmatprep.subr.mxu0 0.0
        %3063 = vmatpush1.msra.mxu0 %v3015
        %3064 = vmatprep.subr.mxu0 0.0
        %3065 = vmatpush1.msra.mxu0 %v3017
        %3066 = vmatprep.subr.mxu0 0.0
        %3067 = vmatpush1.msra.mxu0 %v3019
        %3068 = vmatprep.subr.mxu0 0.0
        %3069 = vmatpush1.msra.mxu0 %v3021
        %3070 = vmatprep.subr.mxu0 0.0
        %3071 = vmatpush1.msra.mxu0 0.0
        %3072 = vmatprep.subr.mxu0 0.0
        %3073 = vmatpush1.msra.mxu0 0.0
        %3074 = vmatprep.subr.mxu0 0.0
        %3075 = vmatpush1.msra.mxu0 0.0
        %3076 = vmatprep.subr.mxu0 0.0
        %3077 = vmatpush1.msra.mxu0 0.0
        %3078 = vmatprep.subr.mxu0 0.0
        %3079 = vmatpush1.msra.mxu0 0.0
        %3080 = vmatprep.subr.mxu0 0.0
        %3081 = vmatpush1.msra.mxu0 0.0
        %3082 = vmatprep.subr.mxu0 0.0
        %3083 = vmatpush1.msra.mxu0 0.0
        %3084 = vmatprep.subr.mxu0 0.0
        %3085 = vmatpush1.msra.mxu0 0.0
        %3086 = vmatprep.subr.mxu0 0.0
        %3087 = vmatpush1.msra.mxu0 0.0
        %3088 = vmatprep.subr.mxu0 0.0
        %3089 = vmatpush1.msra.mxu0 0.0
        %3090 = vmatprep.subr.mxu0 0.0
        %3091 = vmatpush1.msra.mxu0 0.0
        %3092 = vmatprep.subr.mxu0 0.0
        %3093 = vmatpush1.msra.mxu0 0.0
        %3094 = vmatprep.subr.mxu0 0.0
        %3095 = vmatpush1.msra.mxu0 0.0
        %3096 = vmatprep.subr.mxu0 0.0
        %3097 = vmatpush1.msra.mxu0 0.0
        %3098 = vmatprep.subr.mxu0 0.0
        %3099 = vmatpush1.msra.mxu0 0.0
        %3100 = vmatprep.subr.mxu0 0.0
        %3101 = vmatpush1.msra.mxu0 0.0
        %3102 = vmatprep.subr.mxu0 0.0
        %3103 = vmatpush1.msra.mxu0 0.0
        %3104 = vmatprep.subr.mxu0 0.0
        %3105 = vmatpush1.msra.mxu0 0.0
        %3106 = vmatprep.subr.mxu0 0.0
        %3107 = vmatpush1.msra.mxu0 0.0
        %3108 = vmatprep.subr.mxu0 0.0
        %3109 = vmatpush1.msra.mxu0 0.0
        %3110 = vmatprep.subr.mxu0 0.0
        %3111 = vmatpush1.msra.mxu0 0.0
        %3112 = vmatprep.subr.mxu0 0.0
        %3113 = vmatpush1.msra.mxu0 0.0
        %3114 = vmatprep.subr.mxu0 0.0
        %3115 = vmatpush1.msra.mxu0 0.0
        %3116 = vmatprep.subr.mxu0 0.0
        %3117 = vmatpush1.msra.mxu0 0.0
        %3118 = vmatprep.mubr.f32.mxu0 0.0
        %3119 = vmatmul.mubr.f32.gmra.mrb[0].mxu0 %v3031
        %v3120 = vpop.f32.mrb[0].mxu0
        %v3121 = vadd.f32 0.0, %v3120
        %v3122 = vpop.f32.mrb[0].mxu0
        %3123 = vmatprep.mubr.f32.mxu0 0.0
        %3124 = vmatmul.mubr.f32.gmra.mrb[0].mxu0 %v3034
        %v3125 = vpop.f32.mrb[0].mxu0
        %v3126 = vadd.f32 0.0, %v3125
        %v3127 = vpop.f32.mrb[0].mxu0
        %3128 = vmatprep.mubr.f32.mxu0 0.0
        %3129 = vmatmul.mubr.f32.gmra.mrb[0].mxu0 %v3037
        %v3130 = vpop.f32.mrb[0].mxu0
        %v3131 = vadd.f32 0.0, %v3130
        %v3132 = vpop.f32.mrb[0].mxu0
        %3133 = vmatprep.mubr.f32.mxu0 0.0
        %3134 = vmatmul.mubr.f32.gmra.mrb[0].mxu0 %v3040
        %v3135 = vpop.f32.mrb[0].mxu0
        %v3136 = vadd.f32 0.0, %v3135
        %v3137 = vpop.f32.mrb[0].mxu0
        %3138 = vmatprep.mubr.f32.mxu0 0.0
        %3139 = vmatmul.mubr.f32.gmra.mrb[0].mxu0 %v3043
        %v3140 = vpop.f32.mrb[0].mxu0
        %v3141 = vadd.f32 0.0, %v3140
        %v3142 = vpop.f32.mrb[0].mxu0
        %3143 = vmatprep.mubr.f32.mxu0 0.0
        %3144 = vmatmul.mubr.f32.gmra.mrb[0].mxu0 %v3046
        %v3145 = vpop.f32.mrb[0].mxu0
        %v3146 = vadd.f32 0.0, %v3145
        %v3147 = vpop.f32.mrb[0].mxu0
        %3148 = vmatprep.mubr.f32.mxu0 0.0
        %3149 = vmatmul.mubr.f32.gmra.mrb[0].mxu0 %v3049
        %v3150 = vpop.f32.mrb[0].mxu0
        %v3151 = vadd.f32 0.0, %v3150
        %v3152 = vpop.f32.mrb[0].mxu0
        %3153 = vmatprep.mubr.f32.mxu0 0.0
        %3154 = vmatmul.mubr.f32.gmra.mrb[0].mxu0 %v3052
        %v3155 = vpop.f32.mrb[0].mxu0
        %v3156 = vadd.f32 0.0, %v3155
        %v3157 = vpop.f32.mrb[0].mxu0
        %3158 = vdwg.mxu0
        %v3159 = vmul.f32 %v2968, %v2837
        %v3160 = vmul.f32 %v2973, %v2838
        %v3161 = vmul.f32 %v2978, %v2839
        %v3162 = vmul.f32 %v2983, %v2840
        %v3163 = vmul.f32 %v2988, %v2841
        %v3164 = vmul.f32 %v2993, %v2842
        %v3165 = vmul.f32 %v2998, %v2843
        %v3166 = vmul.f32 %v3003, %v2844
        %v3167 = vmul.f32 %v3121, %v2845
        %v3168 = vmul.f32 %v3126, %v2846
        %v3169 = vmul.f32 %v3131, %v2847
        %v3170 = vmul.f32 %v3136, %v2848
        %v3171 = vmul.f32 %v3141, %v2849
        %v3172 = vmul.f32 %v3146, %v2850
        %v3173 = vmul.f32 %v3151, %v2851
        %v3174 = vmul.f32 %v3156, %v2852
        %3175 = vrot.lane.b32.xlu0 %v377, 32
        %v3176 = vpop.permute.xlu0 %3175
        %3177 = vrot.lane.b32.xlu0 %v382, 32
        %v3178 = vpop.permute.xlu0 %3177
        %3179 = vrot.lane.b32.xlu0 %v387, 32
        %v3180 = vpop.permute.xlu0 %3179
        %3181 = vrot.lane.b32.xlu0 %v392, 32
        %v3182 = vpop.permute.xlu0 %3181
        %3183 = vrot.lane.b32.xlu0 %v397, 32
        %v3184 = vpop.permute.xlu0 %3183
        %3185 = vrot.lane.b32.xlu0 %v402, 32
        %v3186 = vpop.permute.xlu0 %3185
        %3187 = vrot.lane.b32.xlu0 %v407, 32
        %v3188 = vpop.permute.xlu0 %3187
        %3189 = vrot.lane.b32.xlu0 %v412, 32
        %v3190 = vpop.permute.xlu0 %3189
        %3191 = vrot.lane.b32.xlu0 %v538, 32
        %v3192 = vpop.permute.xlu0 %3191
        %3193 = vrot.lane.b32.xlu0 %v543, 32
        %v3194 = vpop.permute.xlu0 %3193
        %3195 = vrot.lane.b32.xlu0 %v548, 32
        %v3196 = vpop.permute.xlu0 %3195
        %3197 = vrot.lane.b32.xlu0 %v553, 32
        %v3198 = vpop.permute.xlu0 %3197
        %3199 = vrot.lane.b32.xlu0 %v558, 32
        %v3200 = vpop.permute.xlu0 %3199
        %3201 = vrot.lane.b32.xlu0 %v563, 32
        %v3202 = vpop.permute.xlu0 %3201
        %3203 = vrot.lane.b32.xlu0 %v568, 32
        %v3204 = vpop.permute.xlu0 %3203
        %3205 = vrot.lane.b32.xlu0 %v573, 32
        %v3206 = vpop.permute.xlu0 %3205
        %v3207 = vsel %vm777, %v3176, 0
        %v3209 = vsel %vm777, %v3178, 0
        %v3211 = vsel %vm777, %v3180, 0
        %v3213 = vsel %vm777, %v3182, 0
        %v3215 = vsel %vm777, %v3184, 0
        %v3217 = vsel %vm777, %v3186, 0
        %v3219 = vsel %vm777, %v3188, 0
        %v3221 = vsel %vm777, %v3190, 0
        %v3223 = vsel %vm777, %v3192, 0
        %v3225 = vsel %vm777, %v3194, 0
        %v3227 = vsel %vm777, %v3196, 0
        %v3229 = vsel %vm777, %v3198, 0
        %v3231 = vsel %vm777, %v3200, 0
        %v3233 = vsel %vm777, %v3202, 0
        %v3235 = vsel %vm777, %v3204, 0
        %v3237 = vsel %vm777, %v3206, 0
        %3239 = vmatprep.subr.mxu0 0.0
        %3240 = vmatpush1.xpose.msra.mxu0 %v3223
        %3241 = vmatprep.subr.mxu0 0.0
        %3242 = vmatpush1.xpose.msra.mxu0 %v3225
        %3243 = vmatprep.subr.mxu0 0.0
        %3244 = vmatpush1.xpose.msra.mxu0 %v3227
        %3245 = vmatprep.subr.mxu0 0.0
        %3246 = vmatpush1.xpose.msra.mxu0 %v3229
        %3247 = vmatprep.subr.mxu0 0.0
        %3248 = vmatpush1.xpose.msra.mxu0 %v3231
        %3249 = vmatprep.subr.mxu0 0.0
        %3250 = vmatpush1.xpose.msra.mxu0 %v3233
        %3251 = vmatprep.subr.mxu0 0.0
        %3252 = vmatpush1.xpose.msra.mxu0 %v3235
        %3253 = vmatprep.subr.mxu0 0.0
        %3254 = vmatpush1.xpose.msra.mxu0 %v3237
        %3255 = vmatprep.subr.mxu0 0.0
        %3256 = vmatpush1.xpose.msra.mxu0 0.0
        %3257 = vmatprep.subr.mxu0 0.0
        %3258 = vmatpush1.xpose.msra.mxu0 0.0
        %3259 = vmatprep.subr.mxu0 0.0
        %3260 = vmatpush1.xpose.msra.mxu0 0.0
        %3261 = vmatprep.subr.mxu0 0.0
        %3262 = vmatpush1.xpose.msra.mxu0 0.0
        %3263 = vmatprep.subr.mxu0 0.0
        %3264 = vmatpush1.xpose.msra.mxu0 0.0
        %3265 = vmatprep.subr.mxu0 0.0
        %3266 = vmatpush1.xpose.msra.mxu0 0.0
        %3267 = vmatprep.subr.mxu0 0.0
        %3268 = vmatpush1.xpose.msra.mxu0 0.0
        %3269 = vmatprep.subr.mxu0 0.0
        %3270 = vmatpush1.xpose.msra.mxu0 0.0
        %3271 = vmatprep.subr.mxu0 0.0
        %3272 = vmatpush1.xpose.msra.mxu0 0.0
        %3273 = vmatprep.subr.mxu0 0.0
        %3274 = vmatpush1.xpose.msra.mxu0 0.0
        %3275 = vmatprep.subr.mxu0 0.0
        %3276 = vmatpush1.xpose.msra.mxu0 0.0
        %3277 = vmatprep.subr.mxu0 0.0
        %3278 = vmatpush1.xpose.msra.mxu0 0.0
        %3279 = vmatprep.subr.mxu0 0.0
        %3280 = vmatpush1.xpose.msra.mxu0 0.0
        %3281 = vmatprep.subr.mxu0 0.0
        %3282 = vmatpush1.xpose.msra.mxu0 0.0
        %3283 = vmatprep.subr.mxu0 0.0
        %3284 = vmatpush1.xpose.msra.mxu0 0.0
        %3285 = vmatprep.subr.mxu0 0.0
        %3286 = vmatpush1.xpose.msra.mxu0 0.0
        %3287 = vmatprep.subr.mxu0 0.0
        %3288 = vmatpush1.xpose.msra.mxu0 0.0
        %3289 = vmatprep.subr.mxu0 0.0
        %3290 = vmatpush1.xpose.msra.mxu0 0.0
        %3291 = vmatprep.subr.mxu0 0.0
        %3292 = vmatpush1.xpose.msra.mxu0 0.0
        %3293 = vmatprep.subr.mxu0 0.0
        %3294 = vmatpush1.xpose.msra.mxu0 0.0
        %3295 = vmatprep.subr.mxu0 0.0
        %3296 = vmatpush1.xpose.msra.mxu0 0.0
        %3297 = vmatprep.subr.mxu0 0.0
        %3298 = vmatpush1.xpose.msra.mxu0 0.0
        %3299 = vmatprep.subr.mxu0 0.0
        %3300 = vmatpush1.xpose.msra.mxu0 0.0
        %3301 = vmatprep.subr.mxu0 0.0
        %3302 = vmatpush1.xpose.msra.mxu0 0.0
        %3303 = vmatprep.mubr.f32.mxu0 0.0
        %3304 = vmatmul.mubr.f32.gmra.mrb[0].mxu0 %v3207
        %v3305 = vpop.f32.mrb[0].mxu0
        %v3306 = vadd.f32 0.0, %v3305
        %v3307 = vpop.f32.mrb[0].mxu0
        %3308 = vmatprep.mubr.f32.mxu0 0.0
        %3309 = vmatmul.mubr.f32.gmra.mrb[0].mxu0 %v3209
        %v3310 = vpop.f32.mrb[0].mxu0
        %v3311 = vadd.f32 0.0, %v3310
        %v3312 = vpop.f32.mrb[0].mxu0
        %3313 = vmatprep.mubr.f32.mxu0 0.0
        %3314 = vmatmul.mubr.f32.gmra.mrb[0].mxu0 %v3211
        %v3315 = vpop.f32.mrb[0].mxu0
        %v3316 = vadd.f32 0.0, %v3315
        %v3317 = vpop.f32.mrb[0].mxu0
        %3318 = vmatprep.mubr.f32.mxu0 0.0
        %3319 = vmatmul.mubr.f32.gmra.mrb[0].mxu0 %v3213
        %v3320 = vpop.f32.mrb[0].mxu0
        %v3321 = vadd.f32 0.0, %v3320
        %v3322 = vpop.f32.mrb[0].mxu0
        %3323 = vmatprep.mubr.f32.mxu0 0.0
        %3324 = vmatmul.mubr.f32.gmra.mrb[0].mxu0 %v3215
        %v3325 = vpop.f32.mrb[0].mxu0
        %v3326 = vadd.f32 0.0, %v3325
        %v3327 = vpop.f32.mrb[0].mxu0
        %3328 = vmatprep.mubr.f32.mxu0 0.0
        %3329 = vmatmul.mubr.f32.gmra.mrb[0].mxu0 %v3217
        %v3330 = vpop.f32.mrb[0].mxu0
        %v3331 = vadd.f32 0.0, %v3330
        %v3332 = vpop.f32.mrb[0].mxu0
        %3333 = vmatprep.mubr.f32.mxu0 0.0
        %3334 = vmatmul.mubr.f32.gmra.mrb[0].mxu0 %v3219
        %v3335 = vpop.f32.mrb[0].mxu0
        %v3336 = vadd.f32 0.0, %v3335
        %v3337 = vpop.f32.mrb[0].mxu0
        %3338 = vmatprep.mubr.f32.mxu0 0.0
        %3339 = vmatmul.mubr.f32.gmra.mrb[0].mxu0 %v3221
        %v3340 = vpop.f32.mrb[0].mxu0
        %v3341 = vadd.f32 0.0, %v3340
        %v3342 = vpop.f32.mrb[0].mxu0
        %3343 = vdwg.mxu0
        %3344 = vrot.lane.b32.xlu0 %v417, 32
        %v3345 = vpop.permute.xlu0 %3344
        %3346 = vrot.lane.b32.xlu0 %v422, 32
        %v3347 = vpop.permute.xlu0 %3346
        %3348 = vrot.lane.b32.xlu0 %v427, 32
        %v3349 = vpop.permute.xlu0 %3348
        %3350 = vrot.lane.b32.xlu0 %v432, 32
        %v3351 = vpop.permute.xlu0 %3350
        %3352 = vrot.lane.b32.xlu0 %v437, 32
        %v3353 = vpop.permute.xlu0 %3352
        %3354 = vrot.lane.b32.xlu0 %v442, 32
        %v3355 = vpop.permute.xlu0 %3354
        %3356 = vrot.lane.b32.xlu0 %v447, 32
        %v3357 = vpop.permute.xlu0 %3356
        %3358 = vrot.lane.b32.xlu0 %v452, 32
        %v3359 = vpop.permute.xlu0 %3358
        %3360 = vrot.lane.b32.xlu0 %v578, 32
        %v3361 = vpop.permute.xlu0 %3360
        %3362 = vrot.lane.b32.xlu0 %v583, 32
        %v3363 = vpop.permute.xlu0 %3362
        %3364 = vrot.lane.b32.xlu0 %v588, 32
        %v3365 = vpop.permute.xlu0 %3364
        %3366 = vrot.lane.b32.xlu0 %v593, 32
        %v3367 = vpop.permute.xlu0 %3366
        %3368 = vrot.lane.b32.xlu0 %v598, 32
        %v3369 = vpop.permute.xlu0 %3368
        %3370 = vrot.lane.b32.xlu0 %v603, 32
        %v3371 = vpop.permute.xlu0 %3370
        %3372 = vrot.lane.b32.xlu0 %v608, 32
        %v3373 = vpop.permute.xlu0 %3372
        %3374 = vrot.lane.b32.xlu0 %v613, 32
        %v3375 = vpop.permute.xlu0 %3374
        %v3376 = vsel %vm777, %v3345, 0
        %v3378 = vsel %vm777, %v3347, 0
        %v3380 = vsel %vm777, %v3349, 0
        %v3382 = vsel %vm777, %v3351, 0
        %v3384 = vsel %vm777, %v3353, 0
        %v3386 = vsel %vm777, %v3355, 0
        %v3388 = vsel %vm777, %v3357, 0
        %v3390 = vsel %vm777, %v3359, 0
        %v3392 = vsel %vm777, %v3361, 0
        %v3394 = vsel %vm777, %v3363, 0
        %v3396 = vsel %vm777, %v3365, 0
        %v3398 = vsel %vm777, %v3367, 0
        %v3400 = vsel %vm777, %v3369, 0
        %v3402 = vsel %vm777, %v3371, 0
        %v3404 = vsel %vm777, %v3373, 0
        %v3406 = vsel %vm777, %v3375, 0
        %3408 = vmatprep.subr.mxu0 0.0
        %3409 = vmatpush1.xpose.msra.mxu0 %v3392
        %3410 = vmatprep.subr.mxu0 0.0
        %3411 = vmatpush1.xpose.msra.mxu0 %v3394
        %3412 = vmatprep.subr.mxu0 0.0
        %3413 = vmatpush1.xpose.msra.mxu0 %v3396
        %3414 = vmatprep.subr.mxu0 0.0
        %3415 = vmatpush1.xpose.msra.mxu0 %v3398
        %3416 = vmatprep.subr.mxu0 0.0
        %3417 = vmatpush1.xpose.msra.mxu0 %v3400
        %3418 = vmatprep.subr.mxu0 0.0
        %3419 = vmatpush1.xpose.msra.mxu0 %v3402
        %3420 = vmatprep.subr.mxu0 0.0
        %3421 = vmatpush1.xpose.msra.mxu0 %v3404
        %3422 = vmatprep.subr.mxu0 0.0
        %3423 = vmatpush1.xpose.msra.mxu0 %v3406
        %3424 = vmatprep.subr.mxu0 0.0
        %3425 = vmatpush1.xpose.msra.mxu0 0.0
        %3426 = vmatprep.subr.mxu0 0.0
        %3427 = vmatpush1.xpose.msra.mxu0 0.0
        %3428 = vmatprep.subr.mxu0 0.0
        %3429 = vmatpush1.xpose.msra.mxu0 0.0
        %3430 = vmatprep.subr.mxu0 0.0
        %3431 = vmatpush1.xpose.msra.mxu0 0.0
        %3432 = vmatprep.subr.mxu0 0.0
        %3433 = vmatpush1.xpose.msra.mxu0 0.0
        %3434 = vmatprep.subr.mxu0 0.0
        %3435 = vmatpush1.xpose.msra.mxu0 0.0
        %3436 = vmatprep.subr.mxu0 0.0
        %3437 = vmatpush1.xpose.msra.mxu0 0.0
        %3438 = vmatprep.subr.mxu0 0.0
        %3439 = vmatpush1.xpose.msra.mxu0 0.0
        %3440 = vmatprep.subr.mxu0 0.0
        %3441 = vmatpush1.xpose.msra.mxu0 0.0
        %3442 = vmatprep.subr.mxu0 0.0
        %3443 = vmatpush1.xpose.msra.mxu0 0.0
        %3444 = vmatprep.subr.mxu0 0.0
        %3445 = vmatpush1.xpose.msra.mxu0 0.0
        %3446 = vmatprep.subr.mxu0 0.0
        %3447 = vmatpush1.xpose.msra.mxu0 0.0
        %3448 = vmatprep.subr.mxu0 0.0
        %3449 = vmatpush1.xpose.msra.mxu0 0.0
        %3450 = vmatprep.subr.mxu0 0.0
        %3451 = vmatpush1.xpose.msra.mxu0 0.0
        %3452 = vmatprep.subr.mxu0 0.0
        %3453 = vmatpush1.xpose.msra.mxu0 0.0
        %3454 = vmatprep.subr.mxu0 0.0
        %3455 = vmatpush1.xpose.msra.mxu0 0.0
        %3456 = vmatprep.subr.mxu0 0.0
        %3457 = vmatpush1.xpose.msra.mxu0 0.0
        %3458 = vmatprep.subr.mxu0 0.0
        %3459 = vmatpush1.xpose.msra.mxu0 0.0
        %3460 = vmatprep.subr.mxu0 0.0
        %3461 = vmatpush1.xpose.msra.mxu0 0.0
        %3462 = vmatprep.subr.mxu0 0.0
        %3463 = vmatpush1.xpose.msra.mxu0 0.0
        %3464 = vmatprep.subr.mxu0 0.0
        %3465 = vmatpush1.xpose.msra.mxu0 0.0
        %3466 = vmatprep.subr.mxu0 0.0
        %3467 = vmatpush1.xpose.msra.mxu0 0.0
        %3468 = vmatprep.subr.mxu0 0.0
        %3469 = vmatpush1.xpose.msra.mxu0 0.0
        %3470 = vmatprep.subr.mxu0 0.0
        %3471 = vmatpush1.xpose.msra.mxu0 0.0
        %3472 = vmatprep.mubr.f32.mxu0 0.0
        %3473 = vmatmul.mubr.f32.gmra.mrb[0].mxu0 %v3376
        %v3474 = vpop.f32.mrb[0].mxu0
        %v3475 = vadd.f32 0.0, %v3474
        %v3476 = vpop.f32.mrb[0].mxu0
        %3477 = vmatprep.mubr.f32.mxu0 0.0
        %3478 = vmatmul.mubr.f32.gmra.mrb[0].mxu0 %v3378
        %v3479 = vpop.f32.mrb[0].mxu0
        %v3480 = vadd.f32 0.0, %v3479
        %v3481 = vpop.f32.mrb[0].mxu0
        %3482 = vmatprep.mubr.f32.mxu0 0.0
        %3483 = vmatmul.mubr.f32.gmra.mrb[0].mxu0 %v3380
        %v3484 = vpop.f32.mrb[0].mxu0
        %v3485 = vadd.f32 0.0, %v3484
        %v3486 = vpop.f32.mrb[0].mxu0
        %3487 = vmatprep.mubr.f32.mxu0 0.0
        %3488 = vmatmul.mubr.f32.gmra.mrb[0].mxu0 %v3382
        %v3489 = vpop.f32.mrb[0].mxu0
        %v3490 = vadd.f32 0.0, %v3489
        %v3491 = vpop.f32.mrb[0].mxu0
        %3492 = vmatprep.mubr.f32.mxu0 0.0
        %3493 = vmatmul.mubr.f32.gmra.mrb[0].mxu0 %v3384
        %v3494 = vpop.f32.mrb[0].mxu0
        %v3495 = vadd.f32 0.0, %v3494
        %v3496 = vpop.f32.mrb[0].mxu0
        %3497 = vmatprep.mubr.f32.mxu0 0.0
        %3498 = vmatmul.mubr.f32.gmra.mrb[0].mxu0 %v3386
        %v3499 = vpop.f32.mrb[0].mxu0
        %v3500 = vadd.f32 0.0, %v3499
        %v3501 = vpop.f32.mrb[0].mxu0
        %3502 = vmatprep.mubr.f32.mxu0 0.0
        %3503 = vmatmul.mubr.f32.gmra.mrb[0].mxu0 %v3388
        %v3504 = vpop.f32.mrb[0].mxu0
        %v3505 = vadd.f32 0.0, %v3504
        %v3506 = vpop.f32.mrb[0].mxu0
        %3507 = vmatprep.mubr.f32.mxu0 0.0
        %3508 = vmatmul.mubr.f32.gmra.mrb[0].mxu0 %v3390
        %v3509 = vpop.f32.mrb[0].mxu0
        %v3510 = vadd.f32 0.0, %v3509
        %v3511 = vpop.f32.mrb[0].mxu0
        %3512 = vdwg.mxu0
        %v3513 = vsel %vm1084, %v3306, -inf
        %3514 = vmax.xlane.f32.xlu0 %v3513
        %v3515 = vpop.xlane.xlu0 %3514
        %v3516 = vsel %vm1084, %v3311, -inf
        %3517 = vmax.xlane.f32.xlu0 %v3516
        %v3518 = vpop.xlane.xlu0 %3517
        %v3519 = vsel %vm1084, %v3316, -inf
        %3520 = vmax.xlane.f32.xlu0 %v3519
        %v3521 = vpop.xlane.xlu0 %3520
        %v3522 = vsel %vm1084, %v3321, -inf
        %3523 = vmax.xlane.f32.xlu0 %v3522
        %v3524 = vpop.xlane.xlu0 %3523
        %v3525 = vsel %vm1084, %v3326, -inf
        %3526 = vmax.xlane.f32.xlu0 %v3525
        %v3527 = vpop.xlane.xlu0 %3526
        %v3528 = vsel %vm1084, %v3331, -inf
        %3529 = vmax.xlane.f32.xlu0 %v3528
        %v3530 = vpop.xlane.xlu0 %3529
        %v3531 = vsel %vm1084, %v3336, -inf
        %3532 = vmax.xlane.f32.xlu0 %v3531
        %v3533 = vpop.xlane.xlu0 %3532
        %v3534 = vsel %vm1084, %v3341, -inf
        %3535 = vmax.xlane.f32.xlu0 %v3534
        %v3536 = vpop.xlane.xlu0 %3535
        %v3537 = vsel %vm1084, %v3475, -inf
        %3538 = vmax.xlane.f32.xlu0 %v3537
        %v3539 = vpop.xlane.xlu0 %3538
        %v3540 = vsel %vm1084, %v3480, -inf
        %3541 = vmax.xlane.f32.xlu0 %v3540
        %v3542 = vpop.xlane.xlu0 %3541
        %v3543 = vsel %vm1084, %v3485, -inf
        %3544 = vmax.xlane.f32.xlu0 %v3543
        %v3545 = vpop.xlane.xlu0 %3544
        %v3546 = vsel %vm1084, %v3490, -inf
        %3547 = vmax.xlane.f32.xlu0 %v3546
        %v3548 = vpop.xlane.xlu0 %3547
        %v3549 = vsel %vm1084, %v3495, -inf
        %3550 = vmax.xlane.f32.xlu0 %v3549
        %v3551 = vpop.xlane.xlu0 %3550
        %v3552 = vsel %vm1084, %v3500, -inf
        %3553 = vmax.xlane.f32.xlu0 %v3552
        %v3554 = vpop.xlane.xlu0 %3553
        %v3555 = vsel %vm1084, %v3505, -inf
        %3556 = vmax.xlane.f32.xlu0 %v3555
        %v3557 = vpop.xlane.xlu0 %3556
        %v3558 = vsel %vm1084, %v3510, -inf
        %3559 = vmax.xlane.f32.xlu0 %v3558
        %v3560 = vpop.xlane.xlu0 %3559
        %v3561 = vsub.f32 %v3306, %v3515
        %v3562 = vsub.f32 %v3311, %v3518
        %v3563 = vsub.f32 %v3316, %v3521
        %v3564 = vsub.f32 %v3321, %v3524
        %v3565 = vsub.f32 %v3326, %v3527
        %v3566 = vsub.f32 %v3331, %v3530
        %v3567 = vsub.f32 %v3336, %v3533
        %v3568 = vsub.f32 %v3341, %v3536
        %v3569 = vsub.f32 %v3475, %v3539
        %v3570 = vsub.f32 %v3480, %v3542
        %v3571 = vsub.f32 %v3485, %v3545
        %v3572 = vsub.f32 %v3490, %v3548
        %v3573 = vsub.f32 %v3495, %v3551
        %v3574 = vsub.f32 %v3500, %v3554
        %v3575 = vsub.f32 %v3505, %v3557
        %v3576 = vsub.f32 %v3510, %v3560
        %v3577 = vmul.f32 %v3561, 1.442695
        %v3578 = vpow.pop %v3577
        %v3579 = vmul.f32 %v3562, 1.442695
        %v3580 = vpow.pop %v3579
        %v3581 = vmul.f32 %v3563, 1.442695
        %v3582 = vpow.pop %v3581
        %v3583 = vmul.f32 %v3564, 1.442695
        %v3584 = vpow.pop %v3583
        %v3585 = vmul.f32 %v3565, 1.442695
        %v3586 = vpow.pop %v3585
        %v3587 = vmul.f32 %v3566, 1.442695
        %v3588 = vpow.pop %v3587
        %v3589 = vmul.f32 %v3567, 1.442695
        %v3590 = vpow.pop %v3589
        %v3591 = vmul.f32 %v3568, 1.442695
        %v3592 = vpow.pop %v3591
        %v3593 = vmul.f32 %v3569, 1.442695
        %v3594 = vpow.pop %v3593
        %v3595 = vmul.f32 %v3570, 1.442695
        %v3596 = vpow.pop %v3595
        %v3597 = vmul.f32 %v3571, 1.442695
        %v3598 = vpow.pop %v3597
        %v3599 = vmul.f32 %v3572, 1.442695
        %v3600 = vpow.pop %v3599
        %v3601 = vmul.f32 %v3573, 1.442695
        %v3602 = vpow.pop %v3601
        %v3603 = vmul.f32 %v3574, 1.442695
        %v3604 = vpow.pop %v3603
        %v3605 = vmul.f32 %v3575, 1.442695
        %v3606 = vpow.pop %v3605
        %v3607 = vmul.f32 %v3576, 1.442695
        %v3608 = vpow.pop %v3607
        %v3609 = vsel %vm1084, %v3578, 0.0
        %3610 = vadd.xlane.f32.xlu0 %v3609
        %v3611 = vpop.xlane.xlu0 %3610
        %v3612 = vsel %vm1084, %v3580, 0.0
        %3613 = vadd.xlane.f32.xlu0 %v3612
        %v3614 = vpop.xlane.xlu0 %3613
        %v3615 = vsel %vm1084, %v3582, 0.0
        %3616 = vadd.xlane.f32.xlu0 %v3615
        %v3617 = vpop.xlane.xlu0 %3616
        %v3618 = vsel %vm1084, %v3584, 0.0
        %3619 = vadd.xlane.f32.xlu0 %v3618
        %v3620 = vpop.xlane.xlu0 %3619
        %v3621 = vsel %vm1084, %v3586, 0.0
        %3622 = vadd.xlane.f32.xlu0 %v3621
        %v3623 = vpop.xlane.xlu0 %3622
        %v3624 = vsel %vm1084, %v3588, 0.0
        %3625 = vadd.xlane.f32.xlu0 %v3624
        %v3626 = vpop.xlane.xlu0 %3625
        %v3627 = vsel %vm1084, %v3590, 0.0
        %3628 = vadd.xlane.f32.xlu0 %v3627
        %v3629 = vpop.xlane.xlu0 %3628
        %v3630 = vsel %vm1084, %v3592, 0.0
        %3631 = vadd.xlane.f32.xlu0 %v3630
        %v3632 = vpop.xlane.xlu0 %3631
        %v3633 = vsel %vm1084, %v3594, 0.0
        %3634 = vadd.xlane.f32.xlu0 %v3633
        %v3635 = vpop.xlane.xlu0 %3634
        %v3636 = vsel %vm1084, %v3596, 0.0
        %3637 = vadd.xlane.f32.xlu0 %v3636
        %v3638 = vpop.xlane.xlu0 %3637
        %v3639 = vsel %vm1084, %v3598, 0.0
        %3640 = vadd.xlane.f32.xlu0 %v3639
        %v3641 = vpop.xlane.xlu0 %3640
        %v3642 = vsel %vm1084, %v3600, 0.0
        %3643 = vadd.xlane.f32.xlu0 %v3642
        %v3644 = vpop.xlane.xlu0 %3643
        %v3645 = vsel %vm1084, %v3602, 0.0
        %3646 = vadd.xlane.f32.xlu0 %v3645
        %v3647 = vpop.xlane.xlu0 %3646
        %v3648 = vsel %vm1084, %v3604, 0.0
        %3649 = vadd.xlane.f32.xlu0 %v3648
        %v3650 = vpop.xlane.xlu0 %3649
        %v3651 = vsel %vm1084, %v3606, 0.0
        %3652 = vadd.xlane.f32.xlu0 %v3651
        %v3653 = vpop.xlane.xlu0 %3652
        %v3654 = vsel %vm1084, %v3608, 0.0
        %3655 = vadd.xlane.f32.xlu0 %v3654
        %v3656 = vpop.xlane.xlu0 %3655
        %v3657 = vrcp.pop %v3611
        %v3658 = vrcp.pop %v3614
        %v3659 = vrcp.pop %v3617
        %v3660 = vrcp.pop %v3620
        %v3661 = vrcp.pop %v3623
        %v3662 = vrcp.pop %v3626
        %v3663 = vrcp.pop %v3629
        %v3664 = vrcp.pop %v3632
        %v3665 = vrcp.pop %v3635
        %v3666 = vrcp.pop %v3638
        %v3667 = vrcp.pop %v3641
        %v3668 = vrcp.pop %v3644
        %v3669 = vrcp.pop %v3647
        %v3670 = vrcp.pop %v3650
        %v3671 = vrcp.pop %v3653
        %v3672 = vrcp.pop %v3656
        %3673 = vrot.lane.b32.xlu0 %v699, 32
        %v3674 = vpop.permute.xlu0 %3673
        %3675 = vrot.lane.b32.xlu0 %v704, 32
        %v3676 = vpop.permute.xlu0 %3675
        %3677 = vrot.lane.b32.xlu0 %v709, 32
        %v3678 = vpop.permute.xlu0 %3677
        %3679 = vrot.lane.b32.xlu0 %v714, 32
        %v3680 = vpop.permute.xlu0 %3679
        %3681 = vrot.lane.b32.xlu0 %v719, 32
        %v3682 = vpop.permute.xlu0 %3681
        %3683 = vrot.lane.b32.xlu0 %v724, 32
        %v3684 = vpop.permute.xlu0 %3683
        %3685 = vrot.lane.b32.xlu0 %v729, 32
        %v3686 = vpop.permute.xlu0 %3685
        %3687 = vrot.lane.b32.xlu0 %v734, 32
        %v3688 = vpop.permute.xlu0 %3687
        %v3698 = vsel %vm1084, %v3578, 0
        %v3701 = vsel %vm1084, %v3580, 0
        %v3704 = vsel %vm1084, %v3582, 0
        %v3707 = vsel %vm1084, %v3584, 0
        %v3710 = vsel %vm1084, %v3586, 0
        %v3713 = vsel %vm1084, %v3588, 0
        %v3716 = vsel %vm1084, %v3590, 0
        %v3719 = vsel %vm1084, %v3592, 0
        %3721 = vmatprep.subr.mxu0 0.0
        %3722 = vmatpush1.msra.mxu0 %v3674
        %3723 = vmatprep.subr.mxu0 0.0
        %3724 = vmatpush1.msra.mxu0 %v3676
        %3725 = vmatprep.subr.mxu0 0.0
        %3726 = vmatpush1.msra.mxu0 %v3678
        %3727 = vmatprep.subr.mxu0 0.0
        %3728 = vmatpush1.msra.mxu0 %v3680
        %3729 = vmatprep.subr.mxu0 0.0
        %3730 = vmatpush1.msra.mxu0 %v3682
        %3731 = vmatprep.subr.mxu0 0.0
        %3732 = vmatpush1.msra.mxu0 %v3684
        %3733 = vmatprep.subr.mxu0 0.0
        %3734 = vmatpush1.msra.mxu0 %v3686
        %3735 = vmatprep.subr.mxu0 0.0
        %3736 = vmatpush1.msra.mxu0 %v3688
        %3737 = vmatprep.subr.mxu0 0.0
        %3738 = vmatpush1.msra.mxu0 0.0
        %3739 = vmatprep.subr.mxu0 0.0
        %3740 = vmatpush1.msra.mxu0 0.0
        %3741 = vmatprep.subr.mxu0 0.0
        %3742 = vmatpush1.msra.mxu0 0.0
        %3743 = vmatprep.subr.mxu0 0.0
        %3744 = vmatpush1.msra.mxu0 0.0
        %3745 = vmatprep.subr.mxu0 0.0
        %3746 = vmatpush1.msra.mxu0 0.0
        %3747 = vmatprep.subr.mxu0 0.0
        %3748 = vmatpush1.msra.mxu0 0.0
        %3749 = vmatprep.subr.mxu0 0.0
        %3750 = vmatpush1.msra.mxu0 0.0
        %3751 = vmatprep.subr.mxu0 0.0
        %3752 = vmatpush1.msra.mxu0 0.0
        %3753 = vmatprep.subr.mxu0 0.0
        %3754 = vmatpush1.msra.mxu0 0.0
        %3755 = vmatprep.subr.mxu0 0.0
        %3756 = vmatpush1.msra.mxu0 0.0
        %3757 = vmatprep.subr.mxu0 0.0
        %3758 = vmatpush1.msra.mxu0 0.0
        %3759 = vmatprep.subr.mxu0 0.0
        %3760 = vmatpush1.msra.mxu0 0.0
        %3761 = vmatprep.subr.mxu0 0.0
        %3762 = vmatpush1.msra.mxu0 0.0
        %3763 = vmatprep.subr.mxu0 0.0
        %3764 = vmatpush1.msra.mxu0 0.0
        %3765 = vmatprep.subr.mxu0 0.0
        %3766 = vmatpush1.msra.mxu0 0.0
        %3767 = vmatprep.subr.mxu0 0.0
        %3768 = vmatpush1.msra.mxu0 0.0
        %3769 = vmatprep.subr.mxu0 0.0
        %3770 = vmatpush1.msra.mxu0 0.0
        %3771 = vmatprep.subr.mxu0 0.0
        %3772 = vmatpush1.msra.mxu0 0.0
        %3773 = vmatprep.subr.mxu0 0.0
        %3774 = vmatpush1.msra.mxu0 0.0
        %3775 = vmatprep.subr.mxu0 0.0
        %3776 = vmatpush1.msra.mxu0 0.0
        %3777 = vmatprep.subr.mxu0 0.0
        %3778 = vmatpush1.msra.mxu0 0.0
        %3779 = vmatprep.subr.mxu0 0.0
        %3780 = vmatpush1.msra.mxu0 0.0
        %3781 = vmatprep.subr.mxu0 0.0
        %3782 = vmatpush1.msra.mxu0 0.0
        %3783 = vmatprep.subr.mxu0 0.0
        %3784 = vmatpush1.msra.mxu0 0.0
        %3785 = vmatprep.mubr.f32.mxu0 0.0
        %3786 = vmatmul.mubr.f32.gmra.mrb[0].mxu0 %v3698
        %v3787 = vpop.f32.mrb[0].mxu0
        %v3788 = vadd.f32 0.0, %v3787
        %v3789 = vpop.f32.mrb[0].mxu0
        %3790 = vmatprep.mubr.f32.mxu0 0.0
        %3791 = vmatmul.mubr.f32.gmra.mrb[0].mxu0 %v3701
        %v3792 = vpop.f32.mrb[0].mxu0
        %v3793 = vadd.f32 0.0, %v3792
        %v3794 = vpop.f32.mrb[0].mxu0
        %3795 = vmatprep.mubr.f32.mxu0 0.0
        %3796 = vmatmul.mubr.f32.gmra.mrb[0].mxu0 %v3704
        %v3797 = vpop.f32.mrb[0].mxu0
        %v3798 = vadd.f32 0.0, %v3797
        %v3799 = vpop.f32.mrb[0].mxu0
        %3800 = vmatprep.mubr.f32.mxu0 0.0
        %3801 = vmatmul.mubr.f32.gmra.mrb[0].mxu0 %v3707
        %v3802 = vpop.f32.mrb[0].mxu0
        %v3803 = vadd.f32 0.0, %v3802
        %v3804 = vpop.f32.mrb[0].mxu0
        %3805 = vmatprep.mubr.f32.mxu0 0.0
        %3806 = vmatmul.mubr.f32.gmra.mrb[0].mxu0 %v3710
        %v3807 = vpop.f32.mrb[0].mxu0
        %v3808 = vadd.f32 0.0, %v3807
        %v3809 = vpop.f32.mrb[0].mxu0
        %3810 = vmatprep.mubr.f32.mxu0 0.0
        %3811 = vmatmul.mubr.f32.gmra.mrb[0].mxu0 %v3713
        %v3812 = vpop.f32.mrb[0].mxu0
        %v3813 = vadd.f32 0.0, %v3812
        %v3814 = vpop.f32.mrb[0].mxu0
        %3815 = vmatprep.mubr.f32.mxu0 0.0
        %3816 = vmatmul.mubr.f32.gmra.mrb[0].mxu0 %v3716
        %v3817 = vpop.f32.mrb[0].mxu0
        %v3818 = vadd.f32 0.0, %v3817
        %v3819 = vpop.f32.mrb[0].mxu0
        %3820 = vmatprep.mubr.f32.mxu0 0.0
        %3821 = vmatmul.mubr.f32.gmra.mrb[0].mxu0 %v3719
        %v3822 = vpop.f32.mrb[0].mxu0
        %v3823 = vadd.f32 0.0, %v3822
        %v3824 = vpop.f32.mrb[0].mxu0
        %3825 = vdwg.mxu0
        %3826 = vrot.lane.b32.xlu0 %v739, 32
        %v3827 = vpop.permute.xlu0 %3826
        %3828 = vrot.lane.b32.xlu0 %v744, 32
        %v3829 = vpop.permute.xlu0 %3828
        %3830 = vrot.lane.b32.xlu0 %v749, 32
        %v3831 = vpop.permute.xlu0 %3830
        %3832 = vrot.lane.b32.xlu0 %v754, 32
        %v3833 = vpop.permute.xlu0 %3832
        %3834 = vrot.lane.b32.xlu0 %v759, 32
        %v3835 = vpop.permute.xlu0 %3834
        %3836 = vrot.lane.b32.xlu0 %v764, 32
        %v3837 = vpop.permute.xlu0 %3836
        %3838 = vrot.lane.b32.xlu0 %v769, 32
        %v3839 = vpop.permute.xlu0 %3838
        %3840 = vrot.lane.b32.xlu0 %v774, 32
        %v3841 = vpop.permute.xlu0 %3840
        %v3851 = vsel %vm1084, %v3594, 0
        %v3854 = vsel %vm1084, %v3596, 0
        %v3857 = vsel %vm1084, %v3598, 0
        %v3860 = vsel %vm1084, %v3600, 0
        %v3863 = vsel %vm1084, %v3602, 0
        %v3866 = vsel %vm1084, %v3604, 0
        %v3869 = vsel %vm1084, %v3606, 0
        %v3872 = vsel %vm1084, %v3608, 0
        %3874 = vmatprep.subr.mxu0 0.0
        %3875 = vmatpush1.msra.mxu0 %v3827
        %3876 = vmatprep.subr.mxu0 0.0
        %3877 = vmatpush1.msra.mxu0 %v3829
        %3878 = vmatprep.subr.mxu0 0.0
        %3879 = vmatpush1.msra.mxu0 %v3831
        %3880 = vmatprep.subr.mxu0 0.0
        %3881 = vmatpush1.msra.mxu0 %v3833
        %3882 = vmatprep.subr.mxu0 0.0
        %3883 = vmatpush1.msra.mxu0 %v3835
        %3884 = vmatprep.subr.mxu0 0.0
        %3885 = vmatpush1.msra.mxu0 %v3837
        %3886 = vmatprep.subr.mxu0 0.0
        %3887 = vmatpush1.msra.mxu0 %v3839
        %3888 = vmatprep.subr.mxu0 0.0
        %3889 = vmatpush1.msra.mxu0 %v3841
        %3890 = vmatprep.subr.mxu0 0.0
        %3891 = vmatpush1.msra.mxu0 0.0
        %3892 = vmatprep.subr.mxu0 0.0
        %3893 = vmatpush1.msra.mxu0 0.0
        %3894 = vmatprep.subr.mxu0 0.0
        %3895 = vmatpush1.msra.mxu0 0.0
        %3896 = vmatprep.subr.mxu0 0.0
        %3897 = vmatpush1.msra.mxu0 0.0
        %3898 = vmatprep.subr.mxu0 0.0
        %3899 = vmatpush1.msra.mxu0 0.0
        %3900 = vmatprep.subr.mxu0 0.0
        %3901 = vmatpush1.msra.mxu0 0.0
        %3902 = vmatprep.subr.mxu0 0.0
        %3903 = vmatpush1.msra.mxu0 0.0
        %3904 = vmatprep.subr.mxu0 0.0
        %3905 = vmatpush1.msra.mxu0 0.0
        %3906 = vmatprep.subr.mxu0 0.0
        %3907 = vmatpush1.msra.mxu0 0.0
        %3908 = vmatprep.subr.mxu0 0.0
        %3909 = vmatpush1.msra.mxu0 0.0
        %3910 = vmatprep.subr.mxu0 0.0
        %3911 = vmatpush1.msra.mxu0 0.0
        %3912 = vmatprep.subr.mxu0 0.0
        %3913 = vmatpush1.msra.mxu0 0.0
        %3914 = vmatprep.subr.mxu0 0.0
        %3915 = vmatpush1.msra.mxu0 0.0
        %3916 = vmatprep.subr.mxu0 0.0
        %3917 = vmatpush1.msra.mxu0 0.0
        %3918 = vmatprep.subr.mxu0 0.0
        %3919 = vmatpush1.msra.mxu0 0.0
        %3920 = vmatprep.subr.mxu0 0.0
        %3921 = vmatpush1.msra.mxu0 0.0
        %3922 = vmatprep.subr.mxu0 0.0
        %3923 = vmatpush1.msra.mxu0 0.0
        %3924 = vmatprep.subr.mxu0 0.0
        %3925 = vmatpush1.msra.mxu0 0.0
        %3926 = vmatprep.subr.mxu0 0.0
        %3927 = vmatpush1.msra.mxu0 0.0
        %3928 = vmatprep.subr.mxu0 0.0
        %3929 = vmatpush1.msra.mxu0 0.0
        %3930 = vmatprep.subr.mxu0 0.0
        %3931 = vmatpush1.msra.mxu0 0.0
        %3932 = vmatprep.subr.mxu0 0.0
        %3933 = vmatpush1.msra.mxu0 0.0
        %3934 = vmatprep.subr.mxu0 0.0
        %3935 = vmatpush1.msra.mxu0 0.0
        %3936 = vmatprep.subr.mxu0 0.0
        %3937 = vmatpush1.msra.mxu0 0.0
        %3938 = vmatprep.mubr.f32.mxu0 0.0
        %3939 = vmatmul.mubr.f32.gmra.mrb[0].mxu0 %v3851
        %v3940 = vpop.f32.mrb[0].mxu0
        %v3941 = vadd.f32 0.0, %v3940
        %v3942 = vpop.f32.mrb[0].mxu0
        %3943 = vmatprep.mubr.f32.mxu0 0.0
        %3944 = vmatmul.mubr.f32.gmra.mrb[0].mxu0 %v3854
        %v3945 = vpop.f32.mrb[0].mxu0
        %v3946 = vadd.f32 0.0, %v3945
        %v3947 = vpop.f32.mrb[0].mxu0
        %3948 = vmatprep.mubr.f32.mxu0 0.0
        %3949 = vmatmul.mubr.f32.gmra.mrb[0].mxu0 %v3857
        %v3950 = vpop.f32.mrb[0].mxu0
        %v3951 = vadd.f32 0.0, %v3950
        %v3952 = vpop.f32.mrb[0].mxu0
        %3953 = vmatprep.mubr.f32.mxu0 0.0
        %3954 = vmatmul.mubr.f32.gmra.mrb[0].mxu0 %v3860
        %v3955 = vpop.f32.mrb[0].mxu0
        %v3956 = vadd.f32 0.0, %v3955
        %v3957 = vpop.f32.mrb[0].mxu0
        %3958 = vmatprep.mubr.f32.mxu0 0.0
        %3959 = vmatmul.mubr.f32.gmra.mrb[0].mxu0 %v3863
        %v3960 = vpop.f32.mrb[0].mxu0
        %v3961 = vadd.f32 0.0, %v3960
        %v3962 = vpop.f32.mrb[0].mxu0
        %3963 = vmatprep.mubr.f32.mxu0 0.0
        %3964 = vmatmul.mubr.f32.gmra.mrb[0].mxu0 %v3866
        %v3965 = vpop.f32.mrb[0].mxu0
        %v3966 = vadd.f32 0.0, %v3965
        %v3967 = vpop.f32.mrb[0].mxu0
        %3968 = vmatprep.mubr.f32.mxu0 0.0
        %3969 = vmatmul.mubr.f32.gmra.mrb[0].mxu0 %v3869
        %v3970 = vpop.f32.mrb[0].mxu0
        %v3971 = vadd.f32 0.0, %v3970
        %v3972 = vpop.f32.mrb[0].mxu0
        %3973 = vmatprep.mubr.f32.mxu0 0.0
        %3974 = vmatmul.mubr.f32.gmra.mrb[0].mxu0 %v3872
        %v3975 = vpop.f32.mrb[0].mxu0
        %v3976 = vadd.f32 0.0, %v3975
        %v3977 = vpop.f32.mrb[0].mxu0
        %3978 = vdwg.mxu0
        %v3979 = vmul.f32 %v3788, %v3657
        %v3980 = vmul.f32 %v3793, %v3658
        %v3981 = vmul.f32 %v3798, %v3659
        %v3982 = vmul.f32 %v3803, %v3660
        %v3983 = vmul.f32 %v3808, %v3661
        %v3984 = vmul.f32 %v3813, %v3662
        %v3985 = vmul.f32 %v3818, %v3663
        %v3986 = vmul.f32 %v3823, %v3664
        %v3987 = vmul.f32 %v3941, %v3665
        %v3988 = vmul.f32 %v3946, %v3666
        %v3989 = vmul.f32 %v3951, %v3667
        %v3990 = vmul.f32 %v3956, %v3668
        %v3991 = vmul.f32 %v3961, %v3669
        %v3992 = vmul.f32 %v3966, %v3670
        %v3993 = vmul.f32 %v3971, %v3671
        %v3994 = vmul.f32 %v3976, %v3672
        %4011 = vrot.lane.b32.xlu0 %v2339, 32
        %v4012 = vpop.permute.xlu0 %4011
        %4013 = vrot.lane.b32.xlu0 %v2340, 32
        %v4014 = vpop.permute.xlu0 %4013
        %4015 = vrot.lane.b32.xlu0 %v2341, 32
        %v4016 = vpop.permute.xlu0 %4015
        %4017 = vrot.lane.b32.xlu0 %v2342, 32
        %v4018 = vpop.permute.xlu0 %4017
        %4019 = vrot.lane.b32.xlu0 %v2343, 32
        %v4020 = vpop.permute.xlu0 %4019
        %4021 = vrot.lane.b32.xlu0 %v2344, 32
        %v4022 = vpop.permute.xlu0 %4021
        %4023 = vrot.lane.b32.xlu0 %v2345, 32
        %v4024 = vpop.permute.xlu0 %4023
        %4025 = vrot.lane.b32.xlu0 %v2346, 32
        %v4026 = vpop.permute.xlu0 %4025
        %4027 = vrot.lane.b32.xlu0 %v2347, 32
        %v4028 = vpop.permute.xlu0 %4027
        %4029 = vrot.lane.b32.xlu0 %v2348, 32
        %v4030 = vpop.permute.xlu0 %4029
        %4031 = vrot.lane.b32.xlu0 %v2349, 32
        %v4032 = vpop.permute.xlu0 %4031
        %4033 = vrot.lane.b32.xlu0 %v2350, 32
        %v4034 = vpop.permute.xlu0 %4033
        %4035 = vrot.lane.b32.xlu0 %v2351, 32
        %v4036 = vpop.permute.xlu0 %4035
        %4037 = vrot.lane.b32.xlu0 %v2352, 32
        %v4038 = vpop.permute.xlu0 %4037
        %4039 = vrot.lane.b32.xlu0 %v2353, 32
        %v4040 = vpop.permute.xlu0 %4039
        %4041 = vrot.lane.b32.xlu0 %v2354, 32
        %v4042 = vpop.permute.xlu0 %4041
        %4075 = vrot.lane.b32.xlu0 %v3159, 64
        %v4076 = vpop.permute.xlu0 %4075
        %4077 = vrot.lane.b32.xlu0 %v3160, 64
        %v4078 = vpop.permute.xlu0 %4077
        %4079 = vrot.lane.b32.xlu0 %v3161, 64
        %v4080 = vpop.permute.xlu0 %4079
        %4081 = vrot.lane.b32.xlu0 %v3162, 64
        %v4082 = vpop.permute.xlu0 %4081
        %4083 = vrot.lane.b32.xlu0 %v3163, 64
        %v4084 = vpop.permute.xlu0 %4083
        %4085 = vrot.lane.b32.xlu0 %v3164, 64
        %v4086 = vpop.permute.xlu0 %4085
        %4087 = vrot.lane.b32.xlu0 %v3165, 64
        %v4088 = vpop.permute.xlu0 %4087
        %4089 = vrot.lane.b32.xlu0 %v3166, 64
        %v4090 = vpop.permute.xlu0 %4089
        %4091 = vrot.lane.b32.xlu0 %v3167, 64
        %v4092 = vpop.permute.xlu0 %4091
        %4093 = vrot.lane.b32.xlu0 %v3168, 64
        %v4094 = vpop.permute.xlu0 %4093
        %4095 = vrot.lane.b32.xlu0 %v3169, 64
        %v4096 = vpop.permute.xlu0 %4095
        %4097 = vrot.lane.b32.xlu0 %v3170, 64
        %v4098 = vpop.permute.xlu0 %4097
        %4099 = vrot.lane.b32.xlu0 %v3171, 64
        %v4100 = vpop.permute.xlu0 %4099
        %4101 = vrot.lane.b32.xlu0 %v3172, 64
        %v4102 = vpop.permute.xlu0 %4101
        %4103 = vrot.lane.b32.xlu0 %v3173, 64
        %v4104 = vpop.permute.xlu0 %4103
        %4105 = vrot.lane.b32.xlu0 %v3174, 64
        %v4106 = vpop.permute.xlu0 %4105
        %4139 = vrot.lane.b32.xlu0 %v3979, 96
        %v4140 = vpop.permute.xlu0 %4139
        %4141 = vrot.lane.b32.xlu0 %v3980, 96
        %v4142 = vpop.permute.xlu0 %4141
        %4143 = vrot.lane.b32.xlu0 %v3981, 96
        %v4144 = vpop.permute.xlu0 %4143
        %4145 = vrot.lane.b32.xlu0 %v3982, 96
        %v4146 = vpop.permute.xlu0 %4145
        %4147 = vrot.lane.b32.xlu0 %v3983, 96
        %v4148 = vpop.permute.xlu0 %4147
        %4149 = vrot.lane.b32.xlu0 %v3984, 96
        %v4150 = vpop.permute.xlu0 %4149
        %4151 = vrot.lane.b32.xlu0 %v3985, 96
        %v4152 = vpop.permute.xlu0 %4151
        %4153 = vrot.lane.b32.xlu0 %v3986, 96
        %v4154 = vpop.permute.xlu0 %4153
        %4155 = vrot.lane.b32.xlu0 %v3987, 96
        %v4156 = vpop.permute.xlu0 %4155
        %4157 = vrot.lane.b32.xlu0 %v3988, 96
        %v4158 = vpop.permute.xlu0 %4157
        %4159 = vrot.lane.b32.xlu0 %v3989, 96
        %v4160 = vpop.permute.xlu0 %4159
        %4161 = vrot.lane.b32.xlu0 %v3990, 96
        %v4162 = vpop.permute.xlu0 %4161
        %4163 = vrot.lane.b32.xlu0 %v3991, 96
        %v4164 = vpop.permute.xlu0 %4163
        %4165 = vrot.lane.b32.xlu0 %v3992, 96
        %v4166 = vpop.permute.xlu0 %4165
        %4167 = vrot.lane.b32.xlu0 %v3993, 96
        %v4168 = vpop.permute.xlu0 %4167
        %4169 = vrot.lane.b32.xlu0 %v3994, 96
        %v4170 = vpop.permute.xlu0 %4169
        %v4187 = vsel %vm777, %v1503, %v4012
        %v4188 = vsel %vm777, %v1504, %v4014
        %v4189 = vsel %vm777, %v1505, %v4016
        %v4190 = vsel %vm777, %v1506, %v4018
        %v4191 = vsel %vm777, %v1507, %v4020
        %v4192 = vsel %vm777, %v1508, %v4022
        %v4193 = vsel %vm777, %v1509, %v4024
        %v4194 = vsel %vm777, %v1510, %v4026
        %v4195 = vsel %vm777, %v1511, %v4028
        %v4196 = vsel %vm777, %v1512, %v4030
        %v4197 = vsel %vm777, %v1513, %v4032
        %v4198 = vsel %vm777, %v1514, %v4034
        %v4199 = vsel %vm777, %v1515, %v4036
        %v4200 = vsel %vm777, %v1516, %v4038
        %v4201 = vsel %vm777, %v1517, %v4040
        %v4202 = vsel %vm777, %v1518, %v4042
        %v4203 = vsel %vm1084, %v4187, %v4076
        %v4204 = vsel %vm1084, %v4188, %v4078
        %v4205 = vsel %vm1084, %v4189, %v4080
        %v4206 = vsel %vm1084, %v4190, %v4082
        %v4207 = vsel %vm1084, %v4191, %v4084
        %v4208 = vsel %vm1084, %v4192, %v4086
        %v4209 = vsel %vm1084, %v4193, %v4088
        %v4210 = vsel %vm1084, %v4194, %v4090
        %v4211 = vsel %vm1084, %v4195, %v4092
        %v4212 = vsel %vm1084, %v4196, %v4094
        %v4213 = vsel %vm1084, %v4197, %v4096
        %v4214 = vsel %vm1084, %v4198, %v4098
        %v4215 = vsel %vm1084, %v4199, %v4100
        %v4216 = vsel %vm1084, %v4200, %v4102
        %v4217 = vsel %vm1084, %v4201, %v4104
        %v4218 = vsel %vm1084, %v4202, %v4106
        %vm4219 = vcmask 785408
        %v4220 = vsel %vm4219, %v4203, %v4140
        %v4221 = vsel %vm4219, %v4204, %v4142
        %v4222 = vsel %vm4219, %v4205, %v4144
        %v4223 = vsel %vm4219, %v4206, %v4146
        %v4224 = vsel %vm4219, %v4207, %v4148
        %v4225 = vsel %vm4219, %v4208, %v4150
        %v4226 = vsel %vm4219, %v4209, %v4152
        %v4227 = vsel %vm4219, %v4210, %v4154
        %v4228 = vsel %vm4219, %v4211, %v4156
        %v4229 = vsel %vm4219, %v4212, %v4158
        %v4230 = vsel %vm4219, %v4213, %v4160
        %v4231 = vsel %vm4219, %v4214, %v4162
        %v4232 = vsel %vm4219, %v4215, %v4164
        %v4233 = vsel %vm4219, %v4216, %v4166
        %v4234 = vsel %vm4219, %v4217, %v4168
        %v4235 = vsel %vm4219, %v4218, %v4170
        %4236 = vst [vmem:[#allocation2] sm:$0xff] %v4220
        %4237 = vst [vmem:[#allocation2 + $0x8] sm:$0xff] %v4221
        %4238 = vst [vmem:[#allocation2 + $0x10] sm:$0xff] %v4222
        %4239 = vst [vmem:[#allocation2 + $0x18] sm:$0xff] %v4223
        %4240 = vst [vmem:[#allocation2 + $0x20] sm:$0xff] %v4224
        %4241 = vst [vmem:[#allocation2 + $0x28] sm:$0xff] %v4225
        %4242 = vst [vmem:[#allocation2 + $0x30] sm:$0xff] %v4226
        %4243 = vst [vmem:[#allocation2 + $0x38] sm:$0xff] %v4227
        %4244 = vst [vmem:[#allocation2 + $0x40] sm:$0xff] %v4228
        %4245 = vst [vmem:[#allocation2 + $0x48] sm:$0xff] %v4229
        %4246 = vst [vmem:[#allocation2 + $0x50] sm:$0xff] %v4230
        %4247 = vst [vmem:[#allocation2 + $0x58] sm:$0xff] %v4231
        %4248 = vst [vmem:[#allocation2 + $0x60] sm:$0xff] %v4232
        %4249 = vst [vmem:[#allocation2 + $0x68] sm:$0xff] %v4233
        %4250 = vst [vmem:[#allocation2 + $0x70] sm:$0xff] %v4234
        %4251 = vst [vmem:[#allocation2 + $0x78] sm:$0xff] %v4235
        %v4252 = vld [vmem:[#allocation2] sm:$0xff]
        %v4253 = vld [vmem:[#allocation2 + $0x8] sm:$0xff]
        %v4254 = vld [vmem:[#allocation2 + $0x10] sm:$0xff]
        %v4255 = vld [vmem:[#allocation2 + $0x18] sm:$0xff]
        %v4256 = vld [vmem:[#allocation2 + $0x20] sm:$0xff]
        %v4257 = vld [vmem:[#allocation2 + $0x28] sm:$0xff]
        %v4258 = vld [vmem:[#allocation2 + $0x30] sm:$0xff]
        %v4259 = vld [vmem:[#allocation2 + $0x38] sm:$0xff]
        %v4260 = vld [vmem:[#allocation2 + $0x40] sm:$0xff]
        %v4261 = vld [vmem:[#allocation2 + $0x48] sm:$0xff]
        %v4262 = vld [vmem:[#allocation2 + $0x50] sm:$0xff]
        %v4263 = vld [vmem:[#allocation2 + $0x58] sm:$0xff]
        %v4264 = vld [vmem:[#allocation2 + $0x60] sm:$0xff]
        %v4265 = vld [vmem:[#allocation2 + $0x68] sm:$0xff]
        %v4266 = vld [vmem:[#allocation2 + $0x70] sm:$0xff]
        %v4267 = vld [vmem:[#allocation2 + $0x78] sm:$0xff]
        %v4268 = vld [vmem:[#allocation8] sm:$0xff]
        %v4269 = vld [vmem:[#allocation8 + $0x8] sm:$0xff]
        %v4270 = vld [vmem:[#allocation8 + $0x10] sm:$0xff]
        %v4271 = vld [vmem:[#allocation8 + $0x18] sm:$0xff]
        %v4272 = vld [vmem:[#allocation8 + $0x20] sm:$0xff]
        %v4273 = vld [vmem:[#allocation8 + $0x28] sm:$0xff]
        %v4274 = vld [vmem:[#allocation8 + $0x30] sm:$0xff]
        %v4275 = vld [vmem:[#allocation8 + $0x38] sm:$0xff]
        %v4276 = vld [vmem:[#allocation8 + $0x40] sm:$0xff]
        %v4277 = vld [vmem:[#allocation8 + $0x48] sm:$0xff]
        %v4278 = vld [vmem:[#allocation8 + $0x50] sm:$0xff]
        %v4279 = vld [vmem:[#allocation8 + $0x58] sm:$0xff]
        %v4280 = vld [vmem:[#allocation8 + $0x60] sm:$0xff]
        %v4281 = vld [vmem:[#allocation8 + $0x68] sm:$0xff]
        %v4282 = vld [vmem:[#allocation8 + $0x70] sm:$0xff]
        %v4283 = vld [vmem:[#allocation8 + $0x78] sm:$0xff]
        %v4284 = vld [vmem:[%s3] sm:$0x1]
        %v4286 = vlaneseq
        %v4287 = vshrl.u32 %v4286, 7
        %v4288 = vsub.s32 0, %v4287
        %v4289 = vrot.slane %v4284, %v4288
        %4291 = vmatprep.subr.mxu0 0.0
        %4292 = vmatpush1.msra.mxu0 %v4268
        %4293 = vmatprep.subr.mxu0 0.0
        %4294 = vmatpush1.msra.mxu0 %v4269
        %4295 = vmatprep.subr.mxu0 0.0
        %4296 = vmatpush1.msra.mxu0 %v4270
        %4297 = vmatprep.subr.mxu0 0.0
        %4298 = vmatpush1.msra.mxu0 %v4271
        %4299 = vmatprep.subr.mxu0 0.0
        %4300 = vmatpush1.msra.mxu0 %v4272
        %4301 = vmatprep.subr.mxu0 0.0
        %4302 = vmatpush1.msra.mxu0 %v4273
        %4303 = vmatprep.subr.mxu0 0.0
        %4304 = vmatpush1.msra.mxu0 %v4274
        %4305 = vmatprep.subr.mxu0 0.0
        %4306 = vmatpush1.msra.mxu0 %v4275
        %4307 = vmatprep.subr.mxu0 0.0
        %4308 = vmatpush1.msra.mxu0 %v4276
        %4309 = vmatprep.subr.mxu0 0.0
        %4310 = vmatpush1.msra.mxu0 %v4277
        %4311 = vmatprep.subr.mxu0 0.0
        %4312 = vmatpush1.msra.mxu0 %v4278
        %4313 = vmatprep.subr.mxu0 0.0
        %4314 = vmatpush1.msra.mxu0 %v4279
        %4315 = vmatprep.subr.mxu0 0.0
        %4316 = vmatpush1.msra.mxu0 %v4280
        %4317 = vmatprep.subr.mxu0 0.0
        %4318 = vmatpush1.msra.mxu0 %v4281
        %4319 = vmatprep.subr.mxu0 0.0
        %4320 = vmatpush1.msra.mxu0 %v4282
        %4321 = vmatprep.subr.mxu0 0.0
        %4322 = vmatpush1.msra.mxu0 %v4283
        %4323 = vmatprep.subr.mxu0 0.0
        %4324 = vmatpush1.msra.mxu0 0.0
        %4325 = vmatprep.subr.mxu0 0.0
        %4326 = vmatpush1.msra.mxu0 0.0
        %4327 = vmatprep.subr.mxu0 0.0
        %4328 = vmatpush1.msra.mxu0 0.0
        %4329 = vmatprep.subr.mxu0 0.0
        %4330 = vmatpush1.msra.mxu0 0.0
        %4331 = vmatprep.subr.mxu0 0.0
        %4332 = vmatpush1.msra.mxu0 0.0
        %4333 = vmatprep.subr.mxu0 0.0
        %4334 = vmatpush1.msra.mxu0 0.0
        %4335 = vmatprep.subr.mxu0 0.0
        %4336 = vmatpush1.msra.mxu0 0.0
        %4337 = vmatprep.subr.mxu0 0.0
        %4338 = vmatpush1.msra.mxu0 0.0
        %4339 = vmatprep.subr.mxu0 0.0
        %4340 = vmatpush1.msra.mxu0 0.0
        %4341 = vmatprep.subr.mxu0 0.0
        %4342 = vmatpush1.msra.mxu0 0.0
        %4343 = vmatprep.subr.mxu0 0.0
        %4344 = vmatpush1.msra.mxu0 0.0
        %4345 = vmatprep.subr.mxu0 0.0
        %4346 = vmatpush1.msra.mxu0 0.0
        %4347 = vmatprep.subr.mxu0 0.0
        %4348 = vmatpush1.msra.mxu0 0.0
        %4349 = vmatprep.subr.mxu0 0.0
        %4350 = vmatpush1.msra.mxu0 0.0
        %4351 = vmatprep.subr.mxu0 0.0
        %4352 = vmatpush1.msra.mxu0 0.0
        %4353 = vmatprep.subr.mxu0 0.0
        %4354 = vmatpush1.msra.mxu0 0.0
        %4355 = vmatprep.mubr.f32.mxu0 0.0
        %4356 = vmatmul.mubr.f32.gmra.mrb[0].mxu0 %v4252
        %v4357 = vpop.f32.mrb[0].mxu0
        %v4358 = vadd.f32 %v4289, %v4357
        %v4359 = vpop.f32.mrb[0].mxu0
        %4360 = vmatprep.mubr.f32.mxu0 0.0
        %4361 = vmatmul.mubr.f32.gmra.mrb[0].mxu0 %v4253
        %v4362 = vpop.f32.mrb[0].mxu0
        %v4363 = vadd.f32 %v4289, %v4362
        %v4364 = vpop.f32.mrb[0].mxu0
        %4365 = vmatprep.mubr.f32.mxu0 0.0
        %4366 = vmatmul.mubr.f32.gmra.mrb[0].mxu0 %v4254
        %v4367 = vpop.f32.mrb[0].mxu0
        %v4368 = vadd.f32 %v4289, %v4367
        %v4369 = vpop.f32.mrb[0].mxu0
        %4370 = vmatprep.mubr.f32.mxu0 0.0
        %4371 = vmatmul.mubr.f32.gmra.mrb[0].mxu0 %v4255
        %v4372 = vpop.f32.mrb[0].mxu0
        %v4373 = vadd.f32 %v4289, %v4372
        %v4374 = vpop.f32.mrb[0].mxu0
        %4375 = vmatprep.mubr.f32.mxu0 0.0
        %4376 = vmatmul.mubr.f32.gmra.mrb[0].mxu0 %v4256
        %v4377 = vpop.f32.mrb[0].mxu0
        %v4378 = vadd.f32 %v4289, %v4377
        %v4379 = vpop.f32.mrb[0].mxu0
        %4380 = vmatprep.mubr.f32.mxu0 0.0
        %4381 = vmatmul.mubr.f32.gmra.mrb[0].mxu0 %v4257
        %v4382 = vpop.f32.mrb[0].mxu0
        %v4383 = vadd.f32 %v4289, %v4382
        %v4384 = vpop.f32.mrb[0].mxu0
        %4385 = vmatprep.mubr.f32.mxu0 0.0
        %4386 = vmatmul.mubr.f32.gmra.mrb[0].mxu0 %v4258
        %v4387 = vpop.f32.mrb[0].mxu0
        %v4388 = vadd.f32 %v4289, %v4387
        %v4389 = vpop.f32.mrb[0].mxu0
        %4390 = vmatprep.mubr.f32.mxu0 0.0
        %4391 = vmatmul.mubr.f32.gmra.mrb[0].mxu0 %v4259
        %v4392 = vpop.f32.mrb[0].mxu0
        %v4393 = vadd.f32 %v4289, %v4392
        %v4394 = vpop.f32.mrb[0].mxu0
        %4395 = vmatprep.mubr.f32.mxu0 0.0
        %4396 = vmatmul.mubr.f32.gmra.mrb[0].mxu0 %v4260
        %v4397 = vpop.f32.mrb[0].mxu0
        %v4398 = vadd.f32 %v4289, %v4397
        %v4399 = vpop.f32.mrb[0].mxu0
        %4400 = vmatprep.mubr.f32.mxu0 0.0
        %4401 = vmatmul.mubr.f32.gmra.mrb[0].mxu0 %v4261
        %v4402 = vpop.f32.mrb[0].mxu0
        %v4403 = vadd.f32 %v4289, %v4402
        %v4404 = vpop.f32.mrb[0].mxu0
        %4405 = vmatprep.mubr.f32.mxu0 0.0
        %4406 = vmatmul.mubr.f32.gmra.mrb[0].mxu0 %v4262
        %v4407 = vpop.f32.mrb[0].mxu0
        %v4408 = vadd.f32 %v4289, %v4407
        %v4409 = vpop.f32.mrb[0].mxu0
        %4410 = vmatprep.mubr.f32.mxu0 0.0
        %4411 = vmatmul.mubr.f32.gmra.mrb[0].mxu0 %v4263
        %v4412 = vpop.f32.mrb[0].mxu0
        %v4413 = vadd.f32 %v4289, %v4412
        %v4414 = vpop.f32.mrb[0].mxu0
        %4415 = vmatprep.mubr.f32.mxu0 0.0
        %4416 = vmatmul.mubr.f32.gmra.mrb[0].mxu0 %v4264
        %v4417 = vpop.f32.mrb[0].mxu0
        %v4418 = vadd.f32 %v4289, %v4417
        %v4419 = vpop.f32.mrb[0].mxu0
        %4420 = vmatprep.mubr.f32.mxu0 0.0
        %4421 = vmatmul.mubr.f32.gmra.mrb[0].mxu0 %v4265
        %v4422 = vpop.f32.mrb[0].mxu0
        %v4423 = vadd.f32 %v4289, %v4422
        %v4424 = vpop.f32.mrb[0].mxu0
        %4425 = vmatprep.mubr.f32.mxu0 0.0
        %4426 = vmatmul.mubr.f32.gmra.mrb[0].mxu0 %v4266
        %v4427 = vpop.f32.mrb[0].mxu0
        %v4428 = vadd.f32 %v4289, %v4427
        %v4429 = vpop.f32.mrb[0].mxu0
        %4430 = vmatprep.mubr.f32.mxu0 0.0
        %4431 = vmatmul.mubr.f32.gmra.mrb[0].mxu0 %v4267
        %v4432 = vpop.f32.mrb[0].mxu0
        %v4433 = vadd.f32 %v4289, %v4432
        %v4434 = vpop.f32.mrb[0].mxu0
        %4435 = vdwg.mxu0
        %4436 = vst [vmem:[%s275] sm:$0xff] %v4358
        %4437 = vst [vmem:[%s275 + $0x8] sm:$0xff] %v4363
        %4438 = vst [vmem:[%s275 + $0x10] sm:$0xff] %v4368
        %4439 = vst [vmem:[%s275 + $0x18] sm:$0xff] %v4373
        %4440 = vst [vmem:[%s275 + $0x20] sm:$0xff] %v4378
        %4441 = vst [vmem:[%s275 + $0x28] sm:$0xff] %v4383
        %4442 = vst [vmem:[%s275 + $0x30] sm:$0xff] %v4388
        %4443 = vst [vmem:[%s275 + $0x38] sm:$0xff] %v4393
        %4444 = vst [vmem:[%s275 + $0x40] sm:$0xff] %v4398
        %4445 = vst [vmem:[%s275 + $0x48] sm:$0xff] %v4403
        %4446 = vst [vmem:[%s275 + $0x50] sm:$0xff] %v4408
        %4447 = vst [vmem:[%s275 + $0x58] sm:$0xff] %v4413
        %4448 = vst [vmem:[%s275 + $0x60] sm:$0xff] %v4418
        %4449 = vst [vmem:[%s275 + $0x68] sm:$0xff] %v4423
        %4450 = vst [vmem:[%s275 + $0x70] sm:$0xff] %v4428
        %4451 = vst [vmem:[%s275 + $0x78] sm:$0xff] %v4433
        %s4452 = sand.u32 %s146, 1
        %s4453 = scalar_lea.sflag [#allocation5], %s4452
        %s4454 = sand.u32 %s146, 1
        %s4455 = smul.addr %s4454, 128
        %s4456 = scalar_lea.vmem [#allocation9], %s4455
        // Predicated region
        $region49: #{tpu_custom_call.1} parent=35 // pred_check
          %p4457 = pneg %p156
        $region50: #{tpu_custom_call.1} parent=35 // pred_check_branch
          %4459 = sbr.rel (%p4457) target = $region52
        $region51: #{tpu_custom_call.1} parent=35 // pred_region
          %s4460 = smul.u32 16, %s29
          %s4462 = ssub.s32 2048, 2048
          %4463 = vsyncadd %s4453, %s4462
          %s4464 = smul.addr %s4460, 2
          %s4465 = sadd.s32 %s28, %s4464
          %s4466 = smul.addr %s27, 32
          %s4467 = sadd.s32 %s4465, %s4466
          %s4468 = smul.addr %s4467, 128
          %s4469 = scalar_lea.hbm %s4, %s4468
          %s4470 = sshll.u32 %s4456, 4
          %s4471 = int_to_ptr.vmem [resolvable:$true] %s4470
          %4476 = dma.vmem_to_hbm [thread:$0]  %s4471, 2048, %s4469, %s4453, 128, 256, 8
        $region52: #{tpu_custom_call.1} parent=35 // pred_fallthru
          _
      $region36: #{tpu_custom_call.1} parent=5 // pred_fallthru
        _
      %p4477 = scmp.le.s32.totalorder 2, %s17
      // Predicated region
      $region53: #{tpu_custom_call.1} parent=5 // pred_check
        %p4478 = pneg %p4477
      $region54: #{tpu_custom_call.1} parent=5 // pred_check_branch
        %4480 = sbr.rel (%p4478) target = $region56
      $region55: #{tpu_custom_call.1} parent=5 // pred_region
        %s4481 = ssub.s32 %s17, 2
        // Predicated region
        $region57: #{tpu_custom_call.1} parent=55 // pred_check
          %p4482 = pneg %p162
        $region58: #{tpu_custom_call.1} parent=55 // pred_check_branch
          %4484 = sbr.rel (%p4482) target = $region60
        $region59: #{tpu_custom_call.1} parent=55 // pred_region
          %s4485 = sand.u32 %s147, 1
          %s4486 = scalar_lea.sflag [#allocation5], %s4485
          %s4487 = sand.u32 %s147, 1
          %s4488 = smul.addr %s4487, 128
          %s4489 = scalar_lea.vmem [#allocation9], %s4488
          %4490 = dma.done %s4486, 2048
        $region60: #{tpu_custom_call.1} parent=55 // pred_fallthru
          _
      $region56: #{tpu_custom_call.1} parent=5 // pred_fallthru
        _
    $region6: #{tpu_custom_call.1} parent=1 // loop_footer
      %s21 = sadd.s32 1, %s17
    $region7: #{tpu_custom_call.1} parent=1 // loop_footer_branch
      %16 = sbr.rel target = $region3
    $region8: #{tpu_custom_call.1} parent=1 // loop_exit
      _
    %4491 = vsyncpa [#allocation4], 1
    %s4492 = scalar_lea.sflag [#allocation4], 1
    %4493 = vsyncpa %s4492, 1
    %4494 = vsyncpa [#allocation7], 1
    %4495 = vsyncpa [#allocation5], 1
    %s4496 = scalar_lea.sflag [#allocation5], 1
    %4497 = vsyncpa %s4496, 1

</llo_original>
